<compile_context>
chip_gen: v6e
topology: v6e:2x2x1
jax: 0.10.0
libtpu: 0.0.40
codegen_flags: <defaults>
</compile_context>

<pallas_src>
import functools

import jax
import jax.numpy as jnp
import numpy as np
from jax import lax
from jax.experimental import pallas as pl
from jax.experimental.pallas import tpu as pltpu

MASK_DEPTH = 2
PATH_PROB = 0.5
NUM_MASK_CAND = 8

_VMEM_LIMIT = 48 * 1024 * 1024   # safe on v5e/v6e (128 MiB) and v7x (64 MiB)


def _slab_width(d):
    # emb cols [0:d), num col d, order col d+1, zero-padded to a lane multiple.
    return ((d + 2 + 127) // 128) * 128


# ----------------------------------------------------------------------------
# Kernel 1: init — order0 = rowsum(adj), emb0 = adj @ E - E, pack the slab
#   slab = [ emb0 | num0(=order0) | order0 | 0...0 ]
# ----------------------------------------------------------------------------
def _init_kernel(adj_ref, emb_ref, slab_ref):
    tm = adj_ref.shape[0]
    d = emb_ref.shape[-1]
    dw = slab_ref.shape[-1]
    i = pl.program_id(0)
    row0 = pl.multiple_of(i * tm, tm)

    adj = adj_ref[...]                                                 # (tm, N) bf16 0/1
    order0 = jnp.sum(adj.astype(jnp.float32), axis=-1, keepdims=True)  # exact ints
    ax = jnp.dot(adj, emb_ref[...].astype(jnp.bfloat16),
                 preferred_element_type=jnp.float32)                   # (tm, D)
    emb_row = emb_ref[pl.ds(row0, tm), :]                              # (tm, D) f32

    slab_ref[:, 0:d] = ax - emb_row                                    # emb0
    # lane-aligned tail: col d = num0, col d+1 = order0, rest 0
    col = lax.broadcasted_iota(jnp.int32, (tm, dw - d), 1)
    slab_ref[:, d:dw] = jnp.where(col <= 1, order0, 0.0)


def init_slab(adj_bf16, embeds, *, tm):
    N, D = embeds.shape
    Dw = _slab_width(D)
    return pl.pallas_call(
        _init_kernel,
        out_shape=jax.ShapeDtypeStruct((N, Dw), jnp.float32),
        grid=(N // tm,),
        in_specs=[
            pl.BlockSpec((tm, N), lambda i: (i, 0)),   # adj row tile (bf16)
            pl.BlockSpec((N, D), lambda i: (0, 0)),    # full embeds (matmul RHS)
        ],
        out_specs=pl.BlockSpec((tm, Dw), lambda i: (i, 0)),
        compiler_params=pltpu.CompilerParams(
            dimension_semantics=("parallel",), vmem_limit_bytes=_VMEM_LIMIT),
    )(adj_bf16, embeds)


# ----------------------------------------------------------------------------
# Kernel 2: fused depth step
#   a        = adj * mask                    (sparse_dropout, dense emulation)
#   new_ord  = rowsum(a)
#   emb_new  = a @ emb - emb - order*emb     (bf16 MXU, f32 accumulate)
#   num_new  = a @ num - num - order         (EXACT: f32 VPU multiply + XLU reduce)
#   slab_new = [emb_new | num_new | new_ord | 0],  acc += slab_new
# ----------------------------------------------------------------------------
def _depth_kernel(adj_ref, mask_ref, x_ref, numrow_ref, acc_ref,
                  adj_out_ref, x_out_ref, acc_out_ref, *, d):
    tm = adj_ref.shape[0]
    dw = x_ref.shape[-1]
    i = pl.program_id(0)
    row0 = pl.multiple_of(i * tm, tm)

    a = adj_ref[...] * mask_ref[...]                                   # bf16 0/1, exact
    adj_out_ref[...] = a
    a_f32 = a.astype(jnp.float32)
    new_order = jnp.sum(a_f32, axis=-1, keepdims=True)                 # exact ints

    x_row = x_ref[pl.ds(row0, tm), :]                                  # (tm, Dw) f32
    num_old = x_row[:, d:d + 1]                                        # (tm, 1)
    order_old = x_row[:, d + 1:d + 2]                                  # (tm, 1)

    # emb propagation: one 256-lane-wide bf16 MXU matmul over the whole slab.
    ax = jnp.dot(a, x_ref[...].astype(jnp.bfloat16),
                 preferred_element_type=jnp.float32)                   # (tm, Dw)

    # num propagation kept exact (integer values exceed bf16's exact range):
    # broadcast the full num row (1, N) against the 0/1 row tile, row-reduce.
    anum = jnp.sum(a_f32 * numrow_ref[...], axis=-1, keepdims=True)    # (tm, 1)
    num_new = anum - num_old - order_old

    col = lax.broadcasted_iota(jnp.int32, (tm, dw), 1)
    w = jnp.where(col < d, x_row, 0.0)               # subtract order*emb on emb cols only
    res = ax - x_row - order_old * w
    res = jnp.where(col == d, num_new, res)          # exact num column
    res = jnp.where(col == d + 1, new_order, res)    # carry new order

    x_out_ref[...] = res
    acc_out_ref[...] = acc_ref[...] + res


def depth_step(adj_bf16, mask_bf16, slab, num_row, acc, *, d, tm):
    N = adj_bf16.shape[0]
    Dw = slab.shape[-1]
    kernel = functools.partial(_depth_kernel, d=d)
    return pl.pallas_call(
        kernel,
        out_shape=(
            jax.ShapeDtypeStruct((N, N), jnp.bfloat16),   # masked adj (in-place, aliased)
            jax.ShapeDtypeStruct((N, Dw), jnp.float32),   # new slab
            jax.ShapeDtypeStruct((N, Dw), jnp.float32),   # updated accumulator
        ),
        grid=(N // tm,),
        in_specs=[
            pl.BlockSpec((tm, N), lambda i: (i, 0)),      # adj row tile
            pl.BlockSpec((tm, N), lambda i: (i, 0)),      # mask row tile
            pl.BlockSpec((N, Dw), lambda i: (0, 0)),      # full slab (matmul RHS)
            pl.BlockSpec((1, N), lambda i: (0, 0)),       # num vector as a lane row
            pl.BlockSpec((tm, Dw), lambda i: (i, 0)),     # acc row tile
        ],
        out_specs=(
            pl.BlockSpec((tm, N), lambda i: (i, 0)),
            pl.BlockSpec((tm, Dw), lambda i: (i, 0)),
            pl.BlockSpec((tm, Dw), lambda i: (i, 0)),
        ),
        input_output_aliases={0: 0},                      # adj updated in place
        compiler_params=pltpu.CompilerParams(
            dimension_semantics=("parallel",), vmem_limit_bytes=_VMEM_LIMIT),
    )(adj_bf16, mask_bf16, slab, num_row, acc)


# ----------------------------------------------------------------------------
# Kernel 3: score — divide by num_sum, L2-normalize (F.normalize, eps=1e-12)
#            via rsqrt (EUP), row-wise dot product, Gumbel noise.
# ----------------------------------------------------------------------------
def _score_kernel(acc_ref, emb_ref, noise_ref, out_ref):
    d = emb_ref.shape[-1]
    emb_sum = acc_ref[:, 0:d]                                          # (tm, D)
    num_sum = acc_ref[:, d:d + 1]                                      # (tm, 1)
    sub = emb_sum * (1.0 / (num_sum + 1e-8))
    sub_n = sub * lax.rsqrt(
        jnp.maximum(jnp.sum(sub * sub, axis=-1, keepdims=True), 1e-24))
    e = emb_ref[...]
    e_n = e * lax.rsqrt(
        jnp.maximum(jnp.sum(e * e, axis=-1, keepdims=True), 1e-24))
    s = jnp.sum(sub_n * e_n, axis=-1, keepdims=True)                   # (tm, 1)
    gumbel = -jnp.log(-jnp.log(noise_ref[...]))
    out_ref[...] = s + gumbel


def score(acc, embeds, noise_u, *, tm):
    N, D = embeds.shape
    Dw = acc.shape[-1]
    return pl.pallas_call(
        _score_kernel,
        out_shape=jax.ShapeDtypeStruct((N, 1), jnp.float32),
        grid=(N // tm,),
        in_specs=[
            pl.BlockSpec((tm, Dw), lambda i: (i, 0)),
            pl.BlockSpec((tm, D), lambda i: (i, 0)),
            pl.BlockSpec((tm, 1), lambda i: (i, 0)),
        ],
        out_specs=pl.BlockSpec((tm, 1), lambda i: (i, 0)),
        compiler_params=pltpu.CompilerParams(
            dimension_semantics=("parallel",), vmem_limit_bytes=_VMEM_LIMIT),
    )(acc, embeds, noise_u)


# ----------------------------------------------------------------------------
# LocalGraph.forward — glue (loop structure, topk) in plain JAX, all
# matmul / reduction / elementwise hot paths in the fused Pallas kernels.
# ----------------------------------------------------------------------------
def local_graph_forward(adj, embeds, masks, noise_u, *, tm=128):
    N, D = embeds.shape
    assert N % tm == 0 and N % 128 == 0 and D % 128 == 0 and tm % 8 == 0

    adj_bf = adj.astype(jnp.bfloat16)               # 0/1 -> exact in bf16
    slab = init_slab(adj_bf, embeds, tm=tm)         # [emb0 | num0 | order0 | 0]
    acc = slab                                      # running sum(emb)/sum(num)

    for i in range(MASK_DEPTH):
        num_row = slab[:, D][None, :]               # exact f32 num vector, (1, N)
        adj_bf, slab, acc = depth_step(
            adj_bf, masks[i].astype(jnp.bfloat16), slab, num_row, acc, d=D, tm=tm)

    scores = score(acc, embeds, noise_u, tm=tm)[:, 0]                  # (N,)
    # TODO(synk): torch.topk has no in-kernel Pallas equivalent; done in glue.
    _, candidates = jax.lax.top_k(scores, NUM_MASK_CAND)
    return scores, candidates


# Pure-JAX reference (same masks / noise, HIGHEST-precision matmuls) for check.
def reference_forward(adj, embeds, masks, noise_u):
    hp = lax.Precision.HIGHEST
    order = jnp.sum(adj, axis=-1, keepdims=True)
    emb = [jnp.dot(adj, embeds, precision=hp) - embeds]
    num = [order]
    a = adj
    for i in range(MASK_DEPTH):
        a = a * masks[i]
        emb.append(jnp.dot(a, emb[-1], precision=hp) - emb[-1] - order * emb[-1])
        num.append(jnp.dot(a, num[-1], precision=hp) - num[-1] - order)
        order = jnp.sum(a, axis=-1, keepdims=True)
    sub = sum(emb) / (sum(num) + 1e-8)
    sub = sub / jnp.maximum(jnp.linalg.norm(sub, axis=-1, keepdims=True), 1e-12)
    e = embeds / jnp.maximum(jnp.linalg.norm(embeds, axis=-1, keepdims=True), 1e-12)
    s = jnp.sum(sub * e, axis=-1) + (-jnp.log(-jnp.log(noise_u[:, 0])))
    return s, jax.lax.top_k(s, NUM_MASK_CAND)[1]


if __name__ == "__main__":
    N, D = 256, 128
    key = jax.random.PRNGKey(0)
    k_adj, k_emb, k_noise, k_mask = jax.random.split(key, 4)

    # Dense emulation of the sparse adjacency (density ~0.1).
    adj = (jax.random.uniform(k_adj, (N, N)) < 0.1).astype(jnp.float32)
    embeds = jax.random.normal(k_emb, (N, D), dtype=jnp.float32)

    # Pre-draw dropout masks (torch: floor(rand + keep_prob)) and the Gumbel
    # base uniforms so the Pallas path and the reference see identical RNG.
    masks = []
    mk = k_mask
    for i in range(MASK_DEPTH):
        mk, sub = jax.random.split(mk)
        keep = PATH_PROB ** (i + 1)
        masks.append(
            jnp.floor(jax.random.uniform(sub, (N, N)) + keep).astype(jnp.float32))
    masks = tuple(masks)
    noise_u = jax.random.uniform(k_noise, (N, 1), dtype=jnp.float32)

    fwd = jax.jit(local_graph_forward)
    scores, candidates = fwd(adj, embeds, masks, noise_u)
    scores = jax.block_until_ready(scores)
    candidates = jax.block_until_ready(candidates)

    ref_scores, _ = reference_forward(adj, embeds, masks, noise_u)
    # bf16 matmul operands on the emb path (f32 accumulation, exact num path)
    # -> slightly looser tolerance than pure f32.
    np.testing.assert_allclose(
        np.asarray(scores), np.asarray(ref_scores), rtol=2e-2, atol=1e-1)

    assert scores.shape == (N,) and candidates.shape == (NUM_MASK_CAND,)
    print("KERNEL_OK")
</pallas_src>

<mosaic_0001>
module attributes {stable_mosaic.version = 11 : i64} {
  func.func @_init_kernel(%arg0: i32, %arg1: memref<128x256xbf16, #tpu.memory_space<vmem>>, %arg2: memref<256x128xf32, #tpu.memory_space<vmem>>, %arg3: memref<128x256xf32, #tpu.memory_space<vmem>>) attributes {dimension_semantics = [#tpu.dimension_semantics<parallel>], iteration_bounds = array<i64: 2>, scalar_prefetch = 0 : i64, scratch_operands = 0 : i64, tpu.core_type = #tpu.core_type<tc>, window_params = [{transform_indices = @transform_0, window_bounds = array<i64: 128, 256>}, {pipeline_mode = #tpu.pipeline_mode<synchronous>, transform_indices = @transform_1, window_bounds = array<i64: 256, 128>}, {transform_indices = @transform_2, window_bounds = array<i64: 128, 256>}]} {
    %c128_i32 = arith.constant 128 : i32
    %0 = arith.muli %arg0, %c128_i32 : i32
    %1 = tpu.assume_multiple %0, 128 : i32
    %c0 = arith.constant 0 : index
    %c0_0 = arith.constant 0 : index
    %2 = vector.load %arg1[%c0, %c0_0] : memref<128x256xbf16, #tpu.memory_space<vmem>>, vector<128x256xbf16>
    %3 = arith.extf %2 : vector<128x256xbf16> to vector<128x256xf32>
    %cst = arith.constant dense<0.000000e+00> : vector<128xf32>
    %4 = vector.multi_reduction <add>, %3, %cst [1] : vector<128x256xf32> to vector<128xf32>
    %5 = vector.shape_cast %4 : vector<128xf32> to vector<128x1xf32>
    %c0_1 = arith.constant 0 : index
    %c0_2 = arith.constant 0 : index
    %6 = vector.load %arg2[%c0_1, %c0_2] : memref<256x128xf32, #tpu.memory_space<vmem>>, vector<256x128xf32>
    %7 = arith.truncf %6 : vector<256x128xf32> to vector<256x128xbf16>
    %cst_3 = arith.constant dense<0.000000e+00> : vector<128x128xf32>
    %8 = tpu.matmul %2, %7, %cst_3 {dimension_numbers = #tpu.dot_dimension_numbers<[1], [0], [0], [1], [0, 0, 1, 1], [], []>} : vector<128x256xbf16>, vector<256x128xbf16>, vector<128x128xf32> -> vector<128x128xf32>
    %9 = arith.index_cast %1 : i32 to index
    %c0_4 = arith.constant 0 : index
    %10 = vector.load %arg2[%9, %c0_4] : memref<256x128xf32, #tpu.memory_space<vmem>>, vector<128x128xf32>
    %11 = arith.subf %8, %10 : vector<128x128xf32>
    %c0_5 = arith.constant 0 : index
    %c0_6 = arith.constant 0 : index
    %12 = vector.load %arg3[%c0_5, %c0_6] : memref<128x256xf32, #tpu.memory_space<vmem>>, vector<128x128xf32>
    tpu.vector_store %arg3[%c0_5, %c0_6], %11 {strides = array<i32>} : memref<128x256xf32, #tpu.memory_space<vmem>>, vector<128x128xf32>,
    %13 = tpu.iota {dimensions = array<i32: 1>} : vector<128x128xi32>
    %c1_i32 = arith.constant 1 : i32
    %14 = vector.broadcast %c1_i32 : i32 to vector<128x128xi32>
    %15 = arith.cmpi sle, %13, %14 : vector<128x128xi32>
    %cst_7 = arith.constant 0.000000e+00 : f32
    %16 = vector.shape_cast %5 : vector<128x1xf32> to vector<128x1xf32>
    %17 = vector.broadcast %16 : vector<128x1xf32> to vector<128x128xf32>
    %18 = vector.broadcast %cst_7 : f32 to vector<128x128xf32>
    %19 = arith.select %15, %17, %18 : vector<128x128xi1>, vector<128x128xf32>
    %c0_8 = arith.constant 0 : index
    %c128 = arith.constant 128 : index
    %20 = vector.load %arg3[%c0_8, %c128] : memref<128x256xf32, #tpu.memory_space<vmem>>, vector<128x128xf32>
    tpu.vector_store %arg3[%c0_8, %c128], %19 {strides = array<i32>} : memref<128x256xf32, #tpu.memory_space<vmem>>, vector<128x128xf32>,
    return
  }
  func.func @transform_0(%arg0: i32) -> (i32, i32) {
    %c0_i32 = arith.constant 0 : i32
    %c0_i32_0 = arith.constant 0 : i32
    return %arg0, %c0_i32 : i32, i32
  }
  func.func @transform_1(%arg0: i32) -> (i32, i32) {
    %c0_i32 = arith.constant 0 : i32
    %c0_i32_0 = arith.constant 0 : i32
    %c0_i32_1 = arith.constant 0 : i32
    return %c0_i32, %c0_i32_0 : i32, i32
  }
  func.func @transform_2(%arg0: i32) -> (i32, i32) {
    %c0_i32 = arith.constant 0 : i32
    %c0_i32_0 = arith.constant 0 : i32
    return %arg0, %c0_i32 : i32, i32
  }
}

module attributes {stable_mosaic.version = 11 : i64} {
  func.func @_depth_kernel(%arg0: i32, %arg1: memref<128x256xbf16, #tpu.memory_space<vmem>>, %arg2: memref<128x256xbf16, #tpu.memory_space<vmem>>, %arg3: memref<256x256xf32, #tpu.memory_space<vmem>>, %arg4: memref<1x256xf32, #tpu.memory_space<vmem>>, %arg5: memref<128x256xf32, #tpu.memory_space<vmem>>, %arg6: memref<128x256xbf16, #tpu.memory_space<vmem>>, %arg7: memref<128x256xf32, #tpu.memory_space<vmem>>, %arg8: memref<128x256xf32, #tpu.memory_space<vmem>>) attributes {dimension_semantics = [#tpu.dimension_semantics<parallel>], iteration_bounds = array<i64: 2>, scalar_prefetch = 0 : i64, scratch_operands = 0 : i64, tpu.core_type = #tpu.core_type<tc>, window_params = [{transform_indices = @transform_0, window_bounds = array<i64: 128, 256>}, {transform_indices = @transform_1, window_bounds = array<i64: 128, 256>}, {pipeline_mode = #tpu.pipeline_mode<synchronous>, transform_indices = @transform_2, window_bounds = array<i64: 256, 256>}, {pipeline_mode = #tpu.pipeline_mode<synchronous>, transform_indices = @transform_3, window_bounds = array<i64: 1, 256>}, {transform_indices = @transform_4, window_bounds = array<i64: 128, 256>}, {transform_indices = @transform_5, window_bounds = array<i64: 128, 256>}, {transform_indices = @transform_6, window_bounds = array<i64: 128, 256>}, {transform_indices = @transform_7, window_bounds = array<i64: 128, 256>}]} {
    %c128_i32 = arith.constant 128 : i32
    %0 = arith.muli %arg0, %c128_i32 : i32
    %1 = tpu.assume_multiple %0, 128 : i32
    %c0 = arith.constant 0 : index
    %c0_0 = arith.constant 0 : index
    %2 = vector.load %arg1[%c0, %c0_0] : memref<128x256xbf16, #tpu.memory_space<vmem>>, vector<128x256xbf16>
    %c0_1 = arith.constant 0 : index
    %c0_2 = arith.constant 0 : index
    %3 = vector.load %arg2[%c0_1, %c0_2] : memref<128x256xbf16, #tpu.memory_space<vmem>>, vector<128x256xbf16>
    %4 = arith.mulf %2, %3 : vector<128x256xbf16>
    %c0_3 = arith.constant 0 : index
    %c0_4 = arith.constant 0 : index
    %5 = vector.load %arg6[%c0_3, %c0_4] : memref<128x256xbf16, #tpu.memory_space<vmem>>, vector<128x256xbf16>
    tpu.vector_store %arg6[%c0_3, %c0_4], %4 {strides = array<i32>} : memref<128x256xbf16, #tpu.memory_space<vmem>>, vector<128x256xbf16>,
    %6 = arith.extf %4 : vector<128x256xbf16> to vector<128x256xf32>
    %cst = arith.constant dense<0.000000e+00> : vector<128xf32>
    %7 = vector.multi_reduction <add>, %6, %cst [1] : vector<128x256xf32> to vector<128xf32>
    %8 = vector.shape_cast %7 : vector<128xf32> to vector<128x1xf32>
    %9 = arith.index_cast %1 : i32 to index
    %c0_5 = arith.constant 0 : index
    %10 = vector.load %arg3[%9, %c0_5] : memref<256x256xf32, #tpu.memory_space<vmem>>, vector<128x256xf32>
    %11 = vector.extract_strided_slice %10 {offsets = [0, 128], sizes = [128, 1], strides = [1, 1]} : vector<128x256xf32> to vector<128x1xf32>
    %12 = vector.extract_strided_slice %10 {offsets = [0, 129], sizes = [128, 1], strides = [1, 1]} : vector<128x256xf32> to vector<128x1xf32>
    %c0_6 = arith.constant 0 : index
    %c0_7 = arith.constant 0 : index
    %13 = vector.load %arg3[%c0_6, %c0_7] : memref<256x256xf32, #tpu.memory_space<vmem>>, vector<256x256xf32>
    %14 = arith.truncf %13 : vector<256x256xf32> to vector<256x256xbf16>
    %cst_8 = arith.constant dense<0.000000e+00> : vector<128x256xf32>
    %15 = tpu.matmul %4, %14, %cst_8 {dimension_numbers = #tpu.dot_dimension_numbers<[1], [0], [0], [1], [0, 0, 1, 1], [], []>} : vector<128x256xbf16>, vector<256x256xbf16>, vector<128x256xf32> -> vector<128x256xf32>
    %c0_9 = arith.constant 0 : index
    %c0_10 = arith.constant 0 : index
    %16 = vector.load %arg4[%c0_9, %c0_10] : memref<1x256xf32, #tpu.memory_space<vmem>>, vector<1x256xf32>
    %17 = vector.broadcast %16 : vector<1x256xf32> to vector<128x256xf32>
    %18 = arith.mulf %6, %17 : vector<128x256xf32>
    %cst_11 = arith.constant dense<0.000000e+00> : vector<128xf32>
    %19 = vector.multi_reduction <add>, %18, %cst_11 [1] : vector<128x256xf32> to vector<128xf32>
    %20 = vector.shape_cast %19 : vector<128xf32> to vector<128x1xf32>
    %21 = arith.subf %20, %11 : vector<128x1xf32>
    %22 = arith.subf %21, %12 : vector<128x1xf32>
    %23 = tpu.iota {dimensions = array<i32: 1>} : vector<128x256xi32>
    %c128_i32_12 = arith.constant 128 : i32
    %24 = vector.broadcast %c128_i32_12 : i32 to vector<128x256xi32>
    %25 = arith.cmpi slt, %23, %24 : vector<128x256xi32>
    %cst_13 = arith.constant 0.000000e+00 : f32
    %26 = vector.broadcast %cst_13 : f32 to vector<128x256xf32>
    %27 = arith.select %25, %10, %26 : vector<128x256xi1>, vector<128x256xf32>
    %28 = arith.subf %15, %10 : vector<128x256xf32>
    %29 = vector.broadcast %12 : vector<128x1xf32> to vector<128x256xf32>
    %30 = arith.mulf %29, %27 : vector<128x256xf32>
    %31 = arith.subf %28, %30 : vector<128x256xf32>
    %c128_i32_14 = arith.constant 128 : i32
    %32 = vector.broadcast %c128_i32_14 : i32 to vector<128x256xi32>
    %33 = arith.cmpi eq, %23, %32 : vector<128x256xi32>
    %34 = vector.shape_cast %22 : vector<128x1xf32> to vector<128x1xf32>
    %35 = vector.broadcast %34 : vector<128x1xf32> to vector<128x256xf32>
    %36 = arith.select %33, %35, %31 : vector<128x256xi1>, vector<128x256xf32>
    %c129_i32 = arith.constant 129 : i32
    %37 = vector.broadcast %c129_i32 : i32 to vector<128x256xi32>
    %38 = arith.cmpi eq, %23, %37 : vector<128x256xi32>
    %39 = vector.shape_cast %8 : vector<128x1xf32> to vector<128x1xf32>
    %40 = vector.broadcast %39 : vector<128x1xf32> to vector<128x256xf32>
    %41 = arith.select %38, %40, %36 : vector<128x256xi1>, vector<128x256xf32>
    %c0_15 = arith.constant 0 : index
    %c0_16 = arith.constant 0 : index
    %42 = vector.load %arg7[%c0_15, %c0_16] : memref<128x256xf32, #tpu.memory_space<vmem>>, vector<128x256xf32>
    tpu.vector_store %arg7[%c0_15, %c0_16], %41 {strides = array<i32>} : memref<128x256xf32, #tpu.memory_space<vmem>>, vector<128x256xf32>,
    %c0_17 = arith.constant 0 : index
    %c0_18 = arith.constant 0 : index
    %43 = vector.load %arg5[%c0_17, %c0_18] : memref<128x256xf32, #tpu.memory_space<vmem>>, vector<128x256xf32>
    %44 = arith.addf %43, %41 : vector<128x256xf32>
    %c0_19 = arith.constant 0 : index
    %c0_20 = arith.constant 0 : index
    %45 = vector.load %arg8[%c0_19, %c0_20] : memref<128x256xf32, #tpu.memory_space<vmem>>, vector<128x256xf32>
    tpu.vector_store %arg8[%c0_19, %c0_20], %44 {strides = array<i32>} : memref<128x256xf32, #tpu.memory_space<vmem>>, vector<128x256xf32>,
    return
  }
  func.func @transform_0(%arg0: i32) -> (i32, i32) {
    %c0_i32 = arith.constant 0 : i32
    %c0_i32_0 = arith.constant 0 : i32
    return %arg0, %c0_i32 : i32, i32
  }
  func.func @transform_1(%arg0: i32) -> (i32, i32) {
    %c0_i32 = arith.constant 0 : i32
    %c0_i32_0 = arith.constant 0 : i32
    return %arg0, %c0_i32 : i32, i32
  }
  func.func @transform_2(%arg0: i32) -> (i32, i32) {
    %c0_i32 = arith.constant 0 : i32
    %c0_i32_0 = arith.constant 0 : i32
    %c0_i32_1 = arith.constant 0 : i32
    return %c0_i32, %c0_i32_0 : i32, i32
  }
  func.func @transform_3(%arg0: i32) -> (i32, i32) {
    %c0_i32 = arith.constant 0 : i32
    %c0_i32_0 = arith.constant 0 : i32
    %c0_i32_1 = arith.constant 0 : i32
    return %c0_i32, %c0_i32_0 : i32, i32
  }
  func.func @transform_4(%arg0: i32) -> (i32, i32) {
    %c0_i32 = arith.constant 0 : i32
    %c0_i32_0 = arith.constant 0 : i32
    return %arg0, %c0_i32 : i32, i32
  }
  func.func @transform_5(%arg0: i32) -> (i32, i32) {
    %c0_i32 = arith.constant 0 : i32
    %c0_i32_0 = arith.constant 0 : i32
    return %arg0, %c0_i32 : i32, i32
  }
  func.func @transform_6(%arg0: i32) -> (i32, i32) {
    %c0_i32 = arith.constant 0 : i32
    %c0_i32_0 = arith.constant 0 : i32
    return %arg0, %c0_i32 : i32, i32
  }
  func.func @transform_7(%arg0: i32) -> (i32, i32) {
    %c0_i32 = arith.constant 0 : i32
    %c0_i32_0 = arith.constant 0 : i32
    return %arg0, %c0_i32 : i32, i32
  }
}

module attributes {stable_mosaic.version = 11 : i64} {
  func.func @_score_kernel(%arg0: i32, %arg1: memref<128x256xf32, #tpu.memory_space<vmem>>, %arg2: memref<128x128xf32, #tpu.memory_space<vmem>>, %arg3: memref<128x1xf32, #tpu.memory_space<vmem>>, %arg4: memref<128x1xf32, #tpu.memory_space<vmem>>) attributes {dimension_semantics = [#tpu.dimension_semantics<parallel>], iteration_bounds = array<i64: 2>, scalar_prefetch = 0 : i64, scratch_operands = 0 : i64, tpu.core_type = #tpu.core_type<tc>, window_params = [{transform_indices = @transform_0, window_bounds = array<i64: 128, 256>}, {transform_indices = @transform_1, window_bounds = array<i64: 128, 128>}, {transform_indices = @transform_2, window_bounds = array<i64: 128, 1>}, {transform_indices = @transform_3, window_bounds = array<i64: 128, 1>}]} {
    %c0 = arith.constant 0 : index
    %c0_0 = arith.constant 0 : index
    %0 = vector.load %arg1[%c0, %c0_0] : memref<128x256xf32, #tpu.memory_space<vmem>>, vector<128x128xf32>
    %c0_1 = arith.constant 0 : index
    %c128 = arith.constant 128 : index
    %1 = vector.load %arg1[%c0_1, %c128] : memref<128x256xf32, #tpu.memory_space<vmem>>, vector<128x1xf32>
    %cst = arith.constant 9.99999993E-9 : f32
    %2 = vector.broadcast %cst : f32 to vector<128x1xf32>
    %3 = arith.addf %1, %2 : vector<128x1xf32>
    %cst_2 = arith.constant 1.000000e+00 : f32
    %4 = vector.broadcast %cst_2 : f32 to vector<128x1xf32>
    %5 = arith.divf %4, %3 : vector<128x1xf32>
    %6 = vector.broadcast %5 : vector<128x1xf32> to vector<128x128xf32>
    %7 = arith.mulf %0, %6 : vector<128x128xf32>
    %8 = arith.mulf %7, %7 : vector<128x128xf32>
    %cst_3 = arith.constant dense<0.000000e+00> : vector<128xf32>
    %9 = vector.multi_reduction <add>, %8, %cst_3 [1] : vector<128x128xf32> to vector<128xf32>
    %10 = vector.shape_cast %9 : vector<128xf32> to vector<128x1xf32>
    %cst_4 = arith.constant 1.000000e-24 : f32
    %11 = vector.broadcast %cst_4 : f32 to vector<128x1xf32>
    %12 = arith.maximumf %10, %11 : vector<128x1xf32>
    %13 = math.rsqrt %12 : vector<128x1xf32>
    %14 = vector.broadcast %13 : vector<128x1xf32> to vector<128x128xf32>
    %15 = arith.mulf %7, %14 : vector<128x128xf32>
    %c0_5 = arith.constant 0 : index
    %c0_6 = arith.constant 0 : index
    %16 = vector.load %arg2[%c0_5, %c0_6] : memref<128x128xf32, #tpu.memory_space<vmem>>, vector<128x128xf32>
    %17 = arith.mulf %16, %16 : vector<128x128xf32>
    %cst_7 = arith.constant dense<0.000000e+00> : vector<128xf32>
    %18 = vector.multi_reduction <add>, %17, %cst_7 [1] : vector<128x128xf32> to vector<128xf32>
    %19 = vector.shape_cast %18 : vector<128xf32> to vector<128x1xf32>
    %cst_8 = arith.constant 1.000000e-24 : f32
    %20 = vector.broadcast %cst_8 : f32 to vector<128x1xf32>
    %21 = arith.maximumf %19, %20 : vector<128x1xf32>
    %22 = math.rsqrt %21 : vector<128x1xf32>
    %23 = vector.broadcast %22 : vector<128x1xf32> to vector<128x128xf32>
    %24 = arith.mulf %16, %23 : vector<128x128xf32>
    %25 = arith.mulf %15, %24 : vector<128x128xf32>
    %cst_9 = arith.constant dense<0.000000e+00> : vector<128xf32>
    %26 = vector.multi_reduction <add>, %25, %cst_9 [1] : vector<128x128xf32> to vector<128xf32>
    %27 = vector.shape_cast %26 : vector<128xf32> to vector<128x1xf32>
    %c0_10 = arith.constant 0 : index
    %c0_11 = arith.constant 0 : index
    %28 = vector.load %arg3[%c0_10, %c0_11] : memref<128x1xf32, #tpu.memory_space<vmem>>, vector<128x1xf32>
    %29 = math.log %28 : vector<128x1xf32>
    %cst_12 = arith.constant 0.000000e+00 : f32
    %30 = vector.broadcast %cst_12 : f32 to vector<128x1xf32>
    %31 = arith.subf %30, %29 : vector<128x1xf32>
    %32 = math.log %31 : vector<128x1xf32>
    %cst_13 = arith.constant 0.000000e+00 : f32
    %33 = vector.broadcast %cst_13 : f32 to vector<128x1xf32>
    %34 = arith.subf %33, %32 : vector<128x1xf32>
    %35 = arith.addf %27, %34 : vector<128x1xf32>
    %c0_14 = arith.constant 0 : index
    %c0_15 = arith.constant 0 : index
    %36 = vector.load %arg4[%c0_14, %c0_15] : memref<128x1xf32, #tpu.memory_space<vmem>>, vector<128x1xf32>
    tpu.vector_store %arg4[%c0_14, %c0_15], %35 {strides = array<i32>} : memref<128x1xf32, #tpu.memory_space<vmem>>, vector<128x1xf32>,
    return
  }
  func.func @transform_0(%arg0: i32) -> (i32, i32) {
    %c0_i32 = arith.constant 0 : i32
    %c0_i32_0 = arith.constant 0 : i32
    return %arg0, %c0_i32 : i32, i32
  }
  func.func @transform_1(%arg0: i32) -> (i32, i32) {
    %c0_i32 = arith.constant 0 : i32
    %c0_i32_0 = arith.constant 0 : i32
    return %arg0, %c0_i32 : i32, i32
  }
  func.func @transform_2(%arg0: i32) -> (i32, i32) {
    %c0_i32 = arith.constant 0 : i32
    %c0_i32_0 = arith.constant 0 : i32
    return %arg0, %c0_i32 : i32, i32
  }
  func.func @transform_3(%arg0: i32) -> (i32, i32) {
    %c0_i32 = arith.constant 0 : i32
    %c0_i32_0 = arith.constant 0 : i32
    return %arg0, %c0_i32 : i32, i32
  }
}

module attributes {stable_mosaic.version = 11 : i64} {
  func.func @_depth_kernel(%arg0: i32, %arg1: memref<128x256xbf16, #tpu.memory_space<vmem>>, %arg2: memref<128x256xbf16, #tpu.memory_space<vmem>>, %arg3: memref<256x256xf32, #tpu.memory_space<vmem>>, %arg4: memref<1x256xf32, #tpu.memory_space<vmem>>, %arg5: memref<128x256xf32, #tpu.memory_space<vmem>>, %arg6: memref<128x256xbf16, #tpu.memory_space<vmem>>, %arg7: memref<128x256xf32, #tpu.memory_space<vmem>>, %arg8: memref<128x256xf32, #tpu.memory_space<vmem>>) attributes {dimension_semantics = [#tpu.dimension_semantics<parallel>], iteration_bounds = array<i64: 2>, scalar_prefetch = 0 : i64, scratch_operands = 0 : i64, tpu.core_type = #tpu.core_type<tc>, window_params = [{transform_indices = @transform_0, window_bounds = array<i64: 128, 256>}, {transform_indices = @transform_1, window_bounds = array<i64: 128, 256>}, {pipeline_mode = #tpu.pipeline_mode<synchronous>, transform_indices = @transform_2, window_bounds = array<i64: 256, 256>}, {pipeline_mode = #tpu.pipeline_mode<synchronous>, transform_indices = @transform_3, window_bounds = array<i64: 1, 256>}, {transform_indices = @transform_4, window_bounds = array<i64: 128, 256>}, {transform_indices = @transform_5, window_bounds = array<i64: 128, 256>}, {transform_indices = @transform_6, window_bounds = array<i64: 128, 256>}, {transform_indices = @transform_7, window_bounds = array<i64: 128, 256>}]} {
    %c128_i32 = arith.constant 128 : i32
    %0 = arith.muli %arg0, %c128_i32 : i32
    %1 = tpu.assume_multiple %0, 128 : i32
    %c0 = arith.constant 0 : index
    %c0_0 = arith.constant 0 : index
    %2 = vector.load %arg1[%c0, %c0_0] : memref<128x256xbf16, #tpu.memory_space<vmem>>, vector<128x256xbf16>
    %c0_1 = arith.constant 0 : index
    %c0_2 = arith.constant 0 : index
    %3 = vector.load %arg2[%c0_1, %c0_2] : memref<128x256xbf16, #tpu.memory_space<vmem>>, vector<128x256xbf16>
    %4 = arith.mulf %2, %3 : vector<128x256xbf16>
    %c0_3 = arith.constant 0 : index
    %c0_4 = arith.constant 0 : index
    %5 = vector.load %arg6[%c0_3, %c0_4] : memref<128x256xbf16, #tpu.memory_space<vmem>>, vector<128x256xbf16>
    tpu.vector_store %arg6[%c0_3, %c0_4], %4 {strides = array<i32>} : memref<128x256xbf16, #tpu.memory_space<vmem>>, vector<128x256xbf16>,
    %6 = arith.extf %4 : vector<128x256xbf16> to vector<128x256xf32>
    %cst = arith.constant dense<0.000000e+00> : vector<128xf32>
    %7 = vector.multi_reduction <add>, %6, %cst [1] : vector<128x256xf32> to vector<128xf32>
    %8 = vector.shape_cast %7 : vector<128xf32> to vector<128x1xf32>
    %9 = arith.index_cast %1 : i32 to index
    %c0_5 = arith.constant 0 : index
    %10 = vector.load %arg3[%9, %c0_5] : memref<256x256xf32, #tpu.memory_space<vmem>>, vector<128x256xf32>
    %11 = vector.extract_strided_slice %10 {offsets = [0, 128], sizes = [128, 1], strides = [1, 1]} : vector<128x256xf32> to vector<128x1xf32>
    %12 = vector.extract_strided_slice %10 {offsets = [0, 129], sizes = [128, 1], strides = [1, 1]} : vector<128x256xf32> to vector<128x1xf32>
    %c0_6 = arith.constant 0 : index
    %c0_7 = arith.constant 0 : index
    %13 = vector.load %arg3[%c0_6, %c0_7] : memref<256x256xf32, #tpu.memory_space<vmem>>, vector<256x256xf32>
    %14 = arith.truncf %13 : vector<256x256xf32> to vector<256x256xbf16>
    %cst_8 = arith.constant dense<0.000000e+00> : vector<128x256xf32>
    %15 = tpu.matmul %4, %14, %cst_8 {dimension_numbers = #tpu.dot_dimension_numbers<[1], [0], [0], [1], [0, 0, 1, 1], [], []>} : vector<128x256xbf16>, vector<256x256xbf16>, vector<128x256xf32> -> vector<128x256xf32>
    %c0_9 = arith.constant 0 : index
    %c0_10 = arith.constant 0 : index
    %16 = vector.load %arg4[%c0_9, %c0_10] : memref<1x256xf32, #tpu.memory_space<vmem>>, vector<1x256xf32>
    %17 = vector.broadcast %16 : vector<1x256xf32> to vector<128x256xf32>
    %18 = arith.mulf %6, %17 : vector<128x256xf32>
    %cst_11 = arith.constant dense<0.000000e+00> : vector<128xf32>
    %19 = vector.multi_reduction <add>, %18, %cst_11 [1] : vector<128x256xf32> to vector<128xf32>
    %20 = vector.shape_cast %19 : vector<128xf32> to vector<128x1xf32>
    %21 = arith.subf %20, %11 : vector<128x1xf32>
    %22 = arith.subf %21, %12 : vector<128x1xf32>
    %23 = tpu.iota {dimensions = array<i32: 1>} : vector<128x256xi32>
    %c128_i32_12 = arith.constant 128 : i32
    %24 = vector.broadcast %c128_i32_12 : i32 to vector<128x256xi32>
    %25 = arith.cmpi slt, %23, %24 : vector<128x256xi32>
    %cst_13 = arith.constant 0.000000e+00 : f32
    %26 = vector.broadcast %cst_13 : f32 to vector<128x256xf32>
    %27 = arith.select %25, %10, %26 : vector<128x256xi1>, vector<128x256xf32>
    %28 = arith.subf %15, %10 : vector<128x256xf32>
    %29 = vector.broadcast %12 : vector<128x1xf32> to vector<128x256xf32>
    %30 = arith.mulf %29, %27 : vector<128x256xf32>
    %31 = arith.subf %28, %30 : vector<128x256xf32>
    %c128_i32_14 = arith.constant 128 : i32
    %32 = vector.broadcast %c128_i32_14 : i32 to vector<128x256xi32>
    %33 = arith.cmpi eq, %23, %32 : vector<128x256xi32>
    %34 = vector.shape_cast %22 : vector<128x1xf32> to vector<128x1xf32>
    %35 = vector.broadcast %34 : vector<128x1xf32> to vector<128x256xf32>
    %36 = arith.select %33, %35, %31 : vector<128x256xi1>, vector<128x256xf32>
    %c129_i32 = arith.constant 129 : i32
    %37 = vector.broadcast %c129_i32 : i32 to vector<128x256xi32>
    %38 = arith.cmpi eq, %23, %37 : vector<128x256xi32>
    %39 = vector.shape_cast %8 : vector<128x1xf32> to vector<128x1xf32>
    %40 = vector.broadcast %39 : vector<128x1xf32> to vector<128x256xf32>
    %41 = arith.select %38, %40, %36 : vector<128x256xi1>, vector<128x256xf32>
    %c0_15 = arith.constant 0 : index
    %c0_16 = arith.constant 0 : index
    %42 = vector.load %arg7[%c0_15, %c0_16] : memref<128x256xf32, #tpu.memory_space<vmem>>, vector<128x256xf32>
    tpu.vector_store %arg7[%c0_15, %c0_16], %41 {strides = array<i32>} : memref<128x256xf32, #tpu.memory_space<vmem>>, vector<128x256xf32>,
    %c0_17 = arith.constant 0 : index
    %c0_18 = arith.constant 0 : index
    %43 = vector.load %arg5[%c0_17, %c0_18] : memref<128x256xf32, #tpu.memory_space<vmem>>, vector<128x256xf32>
    %44 = arith.addf %43, %41 : vector<128x256xf32>
    %c0_19 = arith.constant 0 : index
    %c0_20 = arith.constant 0 : index
    %45 = vector.load %arg8[%c0_19, %c0_20] : memref<128x256xf32, #tpu.memory_space<vmem>>, vector<128x256xf32>
    tpu.vector_store %arg8[%c0_19, %c0_20], %44 {strides = array<i32>} : memref<128x256xf32, #tpu.memory_space<vmem>>, vector<128x256xf32>,
    return
  }
  func.func @transform_0(%arg0: i32) -> (i32, i32) {
    %c0_i32 = arith.constant 0 : i32
    %c0_i32_0 = arith.constant 0 : i32
    return %arg0, %c0_i32 : i32, i32
  }
  func.func @transform_1(%arg0: i32) -> (i32, i32) {
    %c0_i32 = arith.constant 0 : i32
    %c0_i32_0 = arith.constant 0 : i32
    return %arg0, %c0_i32 : i32, i32
  }
  func.func @transform_2(%arg0: i32) -> (i32, i32) {
    %c0_i32 = arith.constant 0 : i32
    %c0_i32_0 = arith.constant 0 : i32
    %c0_i32_1 = arith.constant 0 : i32
    return %c0_i32, %c0_i32_0 : i32, i32
  }
  func.func @transform_3(%arg0: i32) -> (i32, i32) {
    %c0_i32 = arith.constant 0 : i32
    %c0_i32_0 = arith.constant 0 : i32
    %c0_i32_1 = arith.constant 0 : i32
    return %c0_i32, %c0_i32_0 : i32, i32
  }
  func.func @transform_4(%arg0: i32) -> (i32, i32) {
    %c0_i32 = arith.constant 0 : i32
    %c0_i32_0 = arith.constant 0 : i32
    return %arg0, %c0_i32 : i32, i32
  }
  func.func @transform_5(%arg0: i32) -> (i32, i32) {
    %c0_i32 = arith.constant 0 : i32
    %c0_i32_0 = arith.constant 0 : i32
    return %arg0, %c0_i32 : i32, i32
  }
  func.func @transform_6(%arg0: i32) -> (i32, i32) {
    %c0_i32 = arith.constant 0 : i32
    %c0_i32_0 = arith.constant 0 : i32
    return %arg0, %c0_i32 : i32, i32
  }
  func.func @transform_7(%arg0: i32) -> (i32, i32) {
    %c0_i32 = arith.constant 0 : i32
    %c0_i32_0 = arith.constant 0 : i32
    return %arg0, %c0_i32 : i32, i32
  }
}

</mosaic_0001>

<llo_original>
// kernel: local_graph_forward.7
$region0: #{local_graph_forward.7}
  #allocation0 [shape = 'u32[]', space=smem, size = 0x4, offset = 0x4, fixed_abs, tag = 'smem constant byte address 0x4 - core index']
  #allocation1 [shape = 'u32[144,128]{1,0:T(1,128)}', space=vmem, size = 0x12000, scoped, tag = 'internal scratch']
  %s0 = inlined_call_operand.vmem [shape: f32[256,256], index: 0, kind: input, shape index: {}]
  %s1 = inlined_call_operand.vmem [shape: f32[256,128], index: 1, kind: input, shape index: {}]
  %s2 = inlined_call_operand.vmem [shape: f32[256,1], index: 2, kind: input, shape index: {}]
  %s3 = inlined_call_operand.vmem [shape: f32[256,1], index: 3, kind: output, shape index: {}]
  %s4 = sld [smem:[#allocation0]]
  $region45: #{local_graph_forward.7} parent=0
    _
  %s6 = ssub.s32 1, %s4
  %s7 = scalar_select 0, %s6, %s4
  loop: start=0, step=1, limit=4
  $region2: #{local_graph_forward.7} parent=0 // loop_pre_header
    _
  $region3: #{local_graph_forward.7} parent=0 // loop_header
    %s9 = sphi 0, %s13
    %p10 = scmp.ge.s32.totalorder %s9, 4
    %s19 = sphi 0, %s21
    %s22 = sphi 0, %s19
    %s23 = sphi 0, %s22
    %s39 = sphi 0, %s23
    %s45 = sphi 0, %s47
    %s48 = sphi 0, %s45
    %s49 = sphi 0, %s48
    %s65 = sphi 0, %s49
    %s71 = sphi 0, %s73
    %s74 = sphi 0, %s71
    %s75 = sphi 0, %s74
    %s91 = sphi 0, %s75
    %s97 = sphi 0, %s99
    %s100 = sphi 0, %s97
    %s101 = sphi 0, %s100
    %s117 = sphi 0, %s101
  $region4: #{local_graph_forward.7} parent=0 // loop_header_branch
    %12 = sbr.rel (%p10) target = $region8
  $region5: #{local_graph_forward.7} parent=0 // loop_body
    %s14 = ssub.s32 %s9, 1
    %s15 = ssub.s32 %s9, 2
    %s16 = sadd.s32 %s9, 1
    %s17 = ssub.s32 %s9, %s16
    %p18 = scmp.eq.s32.totalorder %s17, 0
    %s20 = sadd.s32 %s19, 1
    %s21 = scalar_select %p18, %s19, %s20
    %p24 = pneg %p18
    %p25 = scmp.eq.s32.totalorder %s9, 1
    %p26 = por %p24, %p25
    %p27 = scmp.ne.s32.totalorder %s19, %s22
    %p28 = scmp.eq.s32.totalorder %s9, 0
    %p29 = por %p27, %p28
    %p30 = scmp.ne.s32.totalorder %s19, %s22
    %p31 = scmp.eq.s32.totalorder %s14, 1
    %p32 = por %p30, %p31
    %p33 = scmp.ne.s32.totalorder %s22, %s23
    %p34 = scmp.eq.s32.totalorder %s14, 0
    %p35 = por %p33, %p34
    %p36 = scmp.ne.s32.totalorder %s22, %s23
    %p37 = scmp.eq.s32.totalorder %s15, 1
    %p38 = por %p36, %p37
    %p40 = scmp.ne.s32.totalorder %s23, %s39
    %p41 = scmp.eq.s32.totalorder %s15, 0
    %p42 = por %p40, %p41
    %s43 = ssub.s32 %s9, %s16
    %p44 = scmp.eq.s32.totalorder %s43, 0
    %s46 = sadd.s32 %s45, 1
    %s47 = scalar_select %p44, %s45, %s46
    %p50 = pneg %p44
    %p51 = scmp.eq.s32.totalorder %s9, 1
    %p52 = por %p50, %p51
    %p53 = scmp.ne.s32.totalorder %s45, %s48
    %p54 = scmp.eq.s32.totalorder %s9, 0
    %p55 = por %p53, %p54
    %p56 = scmp.ne.s32.totalorder %s45, %s48
    %p57 = scmp.eq.s32.totalorder %s14, 1
    %p58 = por %p56, %p57
    %p59 = scmp.ne.s32.totalorder %s48, %s49
    %p60 = scmp.eq.s32.totalorder %s14, 0
    %p61 = por %p59, %p60
    %p62 = scmp.ne.s32.totalorder %s48, %s49
    %p63 = scmp.eq.s32.totalorder %s15, 1
    %p64 = por %p62, %p63
    %p66 = scmp.ne.s32.totalorder %s49, %s65
    %p67 = scmp.eq.s32.totalorder %s15, 0
    %p68 = por %p66, %p67
    %s69 = ssub.s32 %s9, %s16
    %p70 = scmp.eq.s32.totalorder %s69, 0
    %s72 = sadd.s32 %s71, 1
    %s73 = scalar_select %p70, %s71, %s72
    %p76 = pneg %p70
    %p77 = scmp.eq.s32.totalorder %s9, 1
    %p78 = por %p76, %p77
    %p79 = scmp.ne.s32.totalorder %s71, %s74
    %p80 = scmp.eq.s32.totalorder %s9, 0
    %p81 = por %p79, %p80
    %p82 = scmp.ne.s32.totalorder %s71, %s74
    %p83 = scmp.eq.s32.totalorder %s14, 1
    %p84 = por %p82, %p83
    %p85 = scmp.ne.s32.totalorder %s74, %s75
    %p86 = scmp.eq.s32.totalorder %s14, 0
    %p87 = por %p85, %p86
    %p88 = scmp.ne.s32.totalorder %s74, %s75
    %p89 = scmp.eq.s32.totalorder %s15, 1
    %p90 = por %p88, %p89
    %p92 = scmp.ne.s32.totalorder %s75, %s91
    %p93 = scmp.eq.s32.totalorder %s15, 0
    %p94 = por %p92, %p93
    %s95 = ssub.s32 %s9, %s16
    %p96 = scmp.eq.s32.totalorder %s95, 0
    %s98 = sadd.s32 %s97, 1
    %s99 = scalar_select %p96, %s97, %s98
    %p102 = pneg %p96
    %p103 = scmp.eq.s32.totalorder %s9, 1
    %p104 = por %p102, %p103
    %p105 = scmp.ne.s32.totalorder %s97, %s100
    %p106 = scmp.eq.s32.totalorder %s9, 0
    %p107 = por %p105, %p106
    %p108 = scmp.ne.s32.totalorder %s97, %s100
    %p109 = scmp.eq.s32.totalorder %s14, 1
    %p110 = por %p108, %p109
    %p111 = scmp.ne.s32.totalorder %s100, %s101
    %p112 = scmp.eq.s32.totalorder %s14, 0
    %p113 = por %p111, %p112
    %p114 = scmp.ne.s32.totalorder %s100, %s101
    %p115 = scmp.eq.s32.totalorder %s15, 1
    %p116 = por %p114, %p115
    %p118 = scmp.ne.s32.totalorder %s101, %s117
    %p119 = scmp.eq.s32.totalorder %s15, 0
    %p120 = por %p118, %p119
    %p121 = scmp.le.s32.totalorder 1, %s9
    %p122 = scmp.lt.s32.totalorder %s9, 3
    %p123 = pnand %p121, %p122
    %p124 = pneg %p123
    // Predicated region
    $region9: #{local_graph_forward.7} parent=5 // pred_check
      _
    $region10: #{local_graph_forward.7} parent=5 // pred_check_branch
      %126 = sbr.rel (%p123) target = $region12
    $region11: #{local_graph_forward.7} parent=5 // pred_region
      %s127 = ssub.s32 %s9, 1
    $region12: #{local_graph_forward.7} parent=5 // pred_fallthru
      _
    %p128 = scmp.lt.s32.totalorder %s9, 2
    // Predicated region
    $region13: #{local_graph_forward.7} parent=5 // pred_check
      %p129 = pneg %p128
    $region14: #{local_graph_forward.7} parent=5 // pred_check_branch
      %131 = sbr.rel (%p129) target = $region16
    $region15: #{local_graph_forward.7} parent=5 // pred_region
      // Predicated region
      $region17: #{local_graph_forward.7} parent=15 // pred_check
        %p132 = pneg %p29
      $region18: #{local_graph_forward.7} parent=15 // pred_check_branch
        %134 = sbr.rel (%p132) target = $region20
      $region19: #{local_graph_forward.7} parent=15 // pred_region
        %s135 = smul.u32 16, %s9
        %p136 = scmp.lt.s32.totalorder %s135, 31
        %s137 = scalar_select %p136, %s135, 31
        %s138 = smul.addr %s137, 2
        %s139 = smul.addr %s138, 8
        %s140 = scalar_lea.vmem %s0, %s139
        %s141 = smul.u32 16, %s9
      $region20: #{local_graph_forward.7} parent=15 // pred_fallthru
        _
      // Predicated region
      $region21: #{local_graph_forward.7} parent=15 // pred_check
        %p142 = pneg %p55
      $region22: #{local_graph_forward.7} parent=15 // pred_check_branch
        %144 = sbr.rel (%p142) target = $region24
      $region23: #{local_graph_forward.7} parent=15 // pred_region
        %s145 = smul.u32 16, %s9
        %p146 = scmp.lt.s32.totalorder %s145, 31
        %s147 = scalar_select %p146, %s145, 31
        %s148 = smul.addr %s147, 8
        %s149 = scalar_lea.vmem %s1, %s148
        %s150 = smul.u32 16, %s9
      $region24: #{local_graph_forward.7} parent=15 // pred_fallthru
        _
      // Predicated region
      $region25: #{local_graph_forward.7} parent=15 // pred_check
        %p151 = pneg %p81
      $region26: #{local_graph_forward.7} parent=15 // pred_check_branch
        %153 = sbr.rel (%p151) target = $region28
      $region27: #{local_graph_forward.7} parent=15 // pred_region
        %s154 = smul.u32 16, %s9
        %p155 = scmp.lt.s32.totalorder %s154, 31
        %s156 = scalar_select %p155, %s154, 31
        %s157 = smul.addr %s156, 8
        %s158 = scalar_lea.vmem %s2, %s157
        %s159 = smul.u32 16, %s9
      $region28: #{local_graph_forward.7} parent=15 // pred_fallthru
        _
    $region16: #{local_graph_forward.7} parent=5 // pred_fallthru
      _
    %p160 = scmp.le.s32.totalorder 1, %s9
    %p161 = scmp.lt.s32.totalorder %s9, 3
    %p162 = pnand %p160, %p161
    %p163 = pneg %p162
    // Predicated region
    $region29: #{local_graph_forward.7} parent=5 // pred_check
      _
    $region30: #{local_graph_forward.7} parent=5 // pred_check_branch
      %165 = sbr.rel (%p162) target = $region32
    $region31: #{local_graph_forward.7} parent=5 // pred_region
      %s166 = ssub.s32 %s9, 1
      %s167 = smul.u32 16, %s14
      %p168 = scmp.lt.s32.totalorder %s167, 31
      %s169 = scalar_select %p168, %s167, 31
      %s170 = smul.addr %s169, 2
      %s171 = smul.addr %s170, 8
      %s172 = scalar_lea.vmem %s0, %s171
      %p173 = pneg %p35
      %p174 = pneg %p32
      %s175 = smul.u32 16, %s14
      %p176 = scmp.lt.s32.totalorder %s175, 31
      %s177 = scalar_select %p176, %s175, 31
      %s178 = smul.addr %s177, 8
      %s179 = scalar_lea.vmem %s1, %s178
      %p180 = pneg %p61
      %p181 = pneg %p58
      %s182 = smul.u32 16, %s14
      %p183 = scmp.lt.s32.totalorder %s182, 31
      %s184 = scalar_select %p183, %s182, 31
      %s185 = smul.addr %s184, 8
      %s186 = scalar_lea.vmem %s2, %s185
      %p187 = pneg %p87
      %p188 = pneg %p84
      %p189 = pneg %p113
      %p190 = pneg %p110
      %s191 = smul.u32 16, %s14
      %p192 = scmp.lt.s32.totalorder %s191, 31
      %s193 = scalar_select %p192, %s191, 31
      %s194 = smul.addr %s193, 8
      %s195 = scalar_lea.vmem %s3, %s194
      %s196 = smul.u32 16, %s14
      %p197 = scmp.lt.s32.totalorder %s196, 31
      %s198 = scalar_select %p197, %s196, 31
      %s199 = smul.addr %s198, 2
      %s200 = smul.addr %s199, 8
      %s201 = scalar_lea.vmem %s0, %s200
      %s202 = smul.u32 16, %s14
      %s203 = smul.u32 16, %s14
      %p204 = scmp.lt.s32.totalorder %s203, 31
      %s205 = scalar_select %p204, %s203, 31
      %s206 = smul.addr %s205, 8
      %s207 = scalar_lea.vmem %s1, %s206
      %s208 = smul.u32 16, %s14
      %s209 = smul.u32 16, %s14
      %p210 = scmp.lt.s32.totalorder %s209, 31
      %s211 = scalar_select %p210, %s209, 31
      %s212 = smul.addr %s211, 8
      %s213 = scalar_lea.vmem %s2, %s212
      %s214 = smul.u32 16, %s14
      %s215 = smul.u32 16, %s14
      %p216 = scmp.lt.s32.totalorder %s215, 31
      %s217 = scalar_select %p216, %s215, 31
      %s218 = smul.addr %s217, 8
      %s219 = scalar_lea.vmem %s3, %s218
      %s220 = smul.u32 16, %s14
      %v221 = vld [vmem:[%s201] sm:$0xff]
      %v222 = vld [vmem:[%s201 + $0x10] sm:$0xff]
      %v223 = vld [vmem:[%s201 + $0x20] sm:$0xff]
      %v224 = vld [vmem:[%s201 + $0x30] sm:$0xff]
      %v225 = vld [vmem:[%s201 + $0x40] sm:$0xff]
      %v226 = vld [vmem:[%s201 + $0x50] sm:$0xff]
      %v227 = vld [vmem:[%s201 + $0x60] sm:$0xff]
      %v228 = vld [vmem:[%s201 + $0x70] sm:$0xff]
      %v229 = vld [vmem:[%s201 + $0x80] sm:$0xff]
      %v230 = vld [vmem:[%s201 + $0x90] sm:$0xff]
      %v231 = vld [vmem:[%s201 + $0xa0] sm:$0xff]
      %v232 = vld [vmem:[%s201 + $0xb0] sm:$0xff]
      %v233 = vld [vmem:[%s201 + $0xc0] sm:$0xff]
      %v234 = vld [vmem:[%s201 + $0xd0] sm:$0xff]
      %v235 = vld [vmem:[%s201 + $0xe0] sm:$0xff]
      %v236 = vld [vmem:[%s201 + $0xf0] sm:$0xff]
      %v237 = vld [vmem:[%s201 + $0x8] sm:$0xff]
      %v238 = vld [vmem:[%s201 + $0x18] sm:$0xff]
      %v239 = vld [vmem:[%s201 + $0x28] sm:$0xff]
      %v240 = vld [vmem:[%s201 + $0x38] sm:$0xff]
      %v241 = vld [vmem:[%s201 + $0x48] sm:$0xff]
      %v242 = vld [vmem:[%s201 + $0x58] sm:$0xff]
      %v243 = vld [vmem:[%s201 + $0x68] sm:$0xff]
      %v244 = vld [vmem:[%s201 + $0x78] sm:$0xff]
      %v245 = vld [vmem:[%s201 + $0x88] sm:$0xff]
      %v246 = vld [vmem:[%s201 + $0x98] sm:$0xff]
      %v247 = vld [vmem:[%s201 + $0xa8] sm:$0xff]
      %v248 = vld [vmem:[%s201 + $0xb8] sm:$0xff]
      %v249 = vld [vmem:[%s201 + $0xc8] sm:$0xff]
      %v250 = vld [vmem:[%s201 + $0xd8] sm:$0xff]
      %v251 = vld [vmem:[%s201 + $0xe8] sm:$0xff]
      %v252 = vld [vmem:[%s201 + $0xf8] sm:$0xff]
      %v253 = vadd.f32 %v237, 1e-08
      %v254 = vadd.f32 %v238, 1e-08
      %v255 = vadd.f32 %v239, 1e-08
      %v256 = vadd.f32 %v240, 1e-08
      %v257 = vadd.f32 %v241, 1e-08
      %v258 = vadd.f32 %v242, 1e-08
      %v259 = vadd.f32 %v243, 1e-08
      %v260 = vadd.f32 %v244, 1e-08
      %v261 = vadd.f32 %v245, 1e-08
      %v262 = vadd.f32 %v246, 1e-08
      %v263 = vadd.f32 %v247, 1e-08
      %v264 = vadd.f32 %v248, 1e-08
      %v265 = vadd.f32 %v249, 1e-08
      %v266 = vadd.f32 %v250, 1e-08
      %v267 = vadd.f32 %v251, 1e-08
      %v268 = vadd.f32 %v252, 1e-08
      %v269 = vrcp.pop %v253
      %v270 = vmul.f32 1.0, %v269
      %v271 = vrcp.pop %v254
      %v272 = vmul.f32 1.0, %v271
      %v273 = vrcp.pop %v255
      %v274 = vmul.f32 1.0, %v273
      %v275 = vrcp.pop %v256
      %v276 = vmul.f32 1.0, %v275
      %v277 = vrcp.pop %v257
      %v278 = vmul.f32 1.0, %v277
      %v279 = vrcp.pop %v258
      %v280 = vmul.f32 1.0, %v279
      %v281 = vrcp.pop %v259
      %v282 = vmul.f32 1.0, %v281
      %v283 = vrcp.pop %v260
      %v284 = vmul.f32 1.0, %v283
      %v285 = vrcp.pop %v261
      %v286 = vmul.f32 1.0, %v285
      %v287 = vrcp.pop %v262
      %v288 = vmul.f32 1.0, %v287
      %v289 = vrcp.pop %v263
      %v290 = vmul.f32 1.0, %v289
      %v291 = vrcp.pop %v264
      %v292 = vmul.f32 1.0, %v291
      %v293 = vrcp.pop %v265
      %v294 = vmul.f32 1.0, %v293
      %v295 = vrcp.pop %v266
      %v296 = vmul.f32 1.0, %v295
      %v297 = vrcp.pop %v267
      %v298 = vmul.f32 1.0, %v297
      %v299 = vrcp.pop %v268
      %v300 = vmul.f32 1.0, %v299
      %302 = vset.pattern.permute.xlu0 0
      %303 = vperm.xlu0 %302, %v270
      %v304 = vpop.permute.xlu0 %303
      %307 = vset.pattern.permute.xlu0 0
      %308 = vperm.xlu0 %307, %v272
      %v309 = vpop.permute.xlu0 %308
      %312 = vset.pattern.permute.xlu0 0
      %313 = vperm.xlu0 %312, %v274
      %v314 = vpop.permute.xlu0 %313
      %317 = vset.pattern.permute.xlu0 0
      %318 = vperm.xlu0 %317, %v276
      %v319 = vpop.permute.xlu0 %318
      %322 = vset.pattern.permute.xlu0 0
      %323 = vperm.xlu0 %322, %v278
      %v324 = vpop.permute.xlu0 %323
      %327 = vset.pattern.permute.xlu0 0
      %328 = vperm.xlu0 %327, %v280
      %v329 = vpop.permute.xlu0 %328
      %332 = vset.pattern.permute.xlu0 0
      %333 = vperm.xlu0 %332, %v282
      %v334 = vpop.permute.xlu0 %333
      %337 = vset.pattern.permute.xlu0 0
      %338 = vperm.xlu0 %337, %v284
      %v339 = vpop.permute.xlu0 %338
      %342 = vset.pattern.permute.xlu0 0
      %343 = vperm.xlu0 %342, %v286
      %v344 = vpop.permute.xlu0 %343
      %347 = vset.pattern.permute.xlu0 0
      %348 = vperm.xlu0 %347, %v288
      %v349 = vpop.permute.xlu0 %348
      %352 = vset.pattern.permute.xlu0 0
      %353 = vperm.xlu0 %352, %v290
      %v354 = vpop.permute.xlu0 %353
      %357 = vset.pattern.permute.xlu0 0
      %358 = vperm.xlu0 %357, %v292
      %v359 = vpop.permute.xlu0 %358
      %362 = vset.pattern.permute.xlu0 0
      %363 = vperm.xlu0 %362, %v294
      %v364 = vpop.permute.xlu0 %363
      %367 = vset.pattern.permute.xlu0 0
      %368 = vperm.xlu0 %367, %v296
      %v369 = vpop.permute.xlu0 %368
      %372 = vset.pattern.permute.xlu0 0
      %373 = vperm.xlu0 %372, %v298
      %v374 = vpop.permute.xlu0 %373
      %377 = vset.pattern.permute.xlu0 0
      %378 = vperm.xlu0 %377, %v300
      %v379 = vpop.permute.xlu0 %378
      %v381 = vmul.f32 %v221, %v304
      %v382 = vmul.f32 %v222, %v309
      %v383 = vmul.f32 %v223, %v314
      %v384 = vmul.f32 %v224, %v319
      %v385 = vmul.f32 %v225, %v324
      %v386 = vmul.f32 %v226, %v329
      %v387 = vmul.f32 %v227, %v334
      %v388 = vmul.f32 %v228, %v339
      %v389 = vmul.f32 %v229, %v344
      %v390 = vmul.f32 %v230, %v349
      %v391 = vmul.f32 %v231, %v354
      %v392 = vmul.f32 %v232, %v359
      %v393 = vmul.f32 %v233, %v364
      %v394 = vmul.f32 %v234, %v369
      %v395 = vmul.f32 %v235, %v374
      %v396 = vmul.f32 %v236, %v379
      %v397 = vmul.f32 %v381, %v381
      %v398 = vmul.f32 %v382, %v382
      %v399 = vmul.f32 %v383, %v383
      %v400 = vmul.f32 %v384, %v384
      %v401 = vmul.f32 %v385, %v385
      %v402 = vmul.f32 %v386, %v386
      %v403 = vmul.f32 %v387, %v387
      %v404 = vmul.f32 %v388, %v388
      %v405 = vmul.f32 %v389, %v389
      %v406 = vmul.f32 %v390, %v390
      %v407 = vmul.f32 %v391, %v391
      %v408 = vmul.f32 %v392, %v392
      %v409 = vmul.f32 %v393, %v393
      %v410 = vmul.f32 %v394, %v394
      %v411 = vmul.f32 %v395, %v395
      %v412 = vmul.f32 %v396, %v396
      %413 = vadd.xlane.f32.xlu0 %v397
      %v414 = vpop.xlane.xlu0 %413
      %415 = vadd.xlane.f32.xlu0 %v398
      %v416 = vpop.xlane.xlu0 %415
      %417 = vadd.xlane.f32.xlu0 %v399
      %v418 = vpop.xlane.xlu0 %417
      %419 = vadd.xlane.f32.xlu0 %v400
      %v420 = vpop.xlane.xlu0 %419
      %421 = vadd.xlane.f32.xlu0 %v401
      %v422 = vpop.xlane.xlu0 %421
      %423 = vadd.xlane.f32.xlu0 %v402
      %v424 = vpop.xlane.xlu0 %423
      %425 = vadd.xlane.f32.xlu0 %v403
      %v426 = vpop.xlane.xlu0 %425
      %427 = vadd.xlane.f32.xlu0 %v404
      %v428 = vpop.xlane.xlu0 %427
      %429 = vadd.xlane.f32.xlu0 %v405
      %v430 = vpop.xlane.xlu0 %429
      %431 = vadd.xlane.f32.xlu0 %v406
      %v432 = vpop.xlane.xlu0 %431
      %433 = vadd.xlane.f32.xlu0 %v407
      %v434 = vpop.xlane.xlu0 %433
      %435 = vadd.xlane.f32.xlu0 %v408
      %v436 = vpop.xlane.xlu0 %435
      %437 = vadd.xlane.f32.xlu0 %v409
      %v438 = vpop.xlane.xlu0 %437
      %439 = vadd.xlane.f32.xlu0 %v410
      %v440 = vpop.xlane.xlu0 %439
      %441 = vadd.xlane.f32.xlu0 %v411
      %v442 = vpop.xlane.xlu0 %441
      %443 = vadd.xlane.f32.xlu0 %v412
      %v444 = vpop.xlane.xlu0 %443
      %v445 = vmax.f32 %v414, 1e-24
      %v446 = vmax.f32 %v416, 1e-24
      %v447 = vmax.f32 %v418, 1e-24
      %v448 = vmax.f32 %v420, 1e-24
      %v449 = vmax.f32 %v422, 1e-24
      %v450 = vmax.f32 %v424, 1e-24
      %v451 = vmax.f32 %v426, 1e-24
      %v452 = vmax.f32 %v428, 1e-24
      %v453 = vmax.f32 %v430, 1e-24
      %v454 = vmax.f32 %v432, 1e-24
      %v455 = vmax.f32 %v434, 1e-24
      %v456 = vmax.f32 %v436, 1e-24
      %v457 = vmax.f32 %v438, 1e-24
      %v458 = vmax.f32 %v440, 1e-24
      %v459 = vmax.f32 %v442, 1e-24
      %v460 = vmax.f32 %v444, 1e-24
      %v461 = vrsqrt.pop %v445
      %v462 = vrsqrt.pop %v446
      %v463 = vrsqrt.pop %v447
      %v464 = vrsqrt.pop %v448
      %v465 = vrsqrt.pop %v449
      %v466 = vrsqrt.pop %v450
      %v467 = vrsqrt.pop %v451
      %v468 = vrsqrt.pop %v452
      %v469 = vrsqrt.pop %v453
      %v470 = vrsqrt.pop %v454
      %v471 = vrsqrt.pop %v455
      %v472 = vrsqrt.pop %v456
      %v473 = vrsqrt.pop %v457
      %v474 = vrsqrt.pop %v458
      %v475 = vrsqrt.pop %v459
      %v476 = vrsqrt.pop %v460
      %v477 = vmul.f32 %v381, %v461
      %v478 = vmul.f32 %v382, %v462
      %v479 = vmul.f32 %v383, %v463
      %v480 = vmul.f32 %v384, %v464
      %v481 = vmul.f32 %v385, %v465
      %v482 = vmul.f32 %v386, %v466
      %v483 = vmul.f32 %v387, %v467
      %v484 = vmul.f32 %v388, %v468
      %v485 = vmul.f32 %v389, %v469
      %v486 = vmul.f32 %v390, %v470
      %v487 = vmul.f32 %v391, %v471
      %v488 = vmul.f32 %v392, %v472
      %v489 = vmul.f32 %v393, %v473
      %v490 = vmul.f32 %v394, %v474
      %v491 = vmul.f32 %v395, %v475
      %v492 = vmul.f32 %v396, %v476
      %v493 = vld [vmem:[%s207] sm:$0xff]
      %v494 = vld [vmem:[%s207 + $0x8] sm:$0xff]
      %v495 = vld [vmem:[%s207 + $0x10] sm:$0xff]
      %v496 = vld [vmem:[%s207 + $0x18] sm:$0xff]
      %v497 = vld [vmem:[%s207 + $0x20] sm:$0xff]
      %v498 = vld [vmem:[%s207 + $0x28] sm:$0xff]
      %v499 = vld [vmem:[%s207 + $0x30] sm:$0xff]
      %v500 = vld [vmem:[%s207 + $0x38] sm:$0xff]
      %v501 = vld [vmem:[%s207 + $0x40] sm:$0xff]
      %v502 = vld [vmem:[%s207 + $0x48] sm:$0xff]
      %v503 = vld [vmem:[%s207 + $0x50] sm:$0xff]
      %v504 = vld [vmem:[%s207 + $0x58] sm:$0xff]
      %v505 = vld [vmem:[%s207 + $0x60] sm:$0xff]
      %v506 = vld [vmem:[%s207 + $0x68] sm:$0xff]
      %v507 = vld [vmem:[%s207 + $0x70] sm:$0xff]
      %v508 = vld [vmem:[%s207 + $0x78] sm:$0xff]
      %v509 = vmul.f32 %v493, %v493
      %v510 = vmul.f32 %v494, %v494
      %v511 = vmul.f32 %v495, %v495
      %v512 = vmul.f32 %v496, %v496
      %v513 = vmul.f32 %v497, %v497
      %v514 = vmul.f32 %v498, %v498
      %v515 = vmul.f32 %v499, %v499
      %v516 = vmul.f32 %v500, %v500
      %v517 = vmul.f32 %v501, %v501
      %v518 = vmul.f32 %v502, %v502
      %v519 = vmul.f32 %v503, %v503
      %v520 = vmul.f32 %v504, %v504
      %v521 = vmul.f32 %v505, %v505
      %v522 = vmul.f32 %v506, %v506
      %v523 = vmul.f32 %v507, %v507
      %v524 = vmul.f32 %v508, %v508
      %525 = vadd.xlane.f32.xlu0 %v509
      %v526 = vpop.xlane.xlu0 %525
      %527 = vadd.xlane.f32.xlu0 %v510
      %v528 = vpop.xlane.xlu0 %527
      %529 = vadd.xlane.f32.xlu0 %v511
      %v530 = vpop.xlane.xlu0 %529
      %531 = vadd.xlane.f32.xlu0 %v512
      %v532 = vpop.xlane.xlu0 %531
      %533 = vadd.xlane.f32.xlu0 %v513
      %v534 = vpop.xlane.xlu0 %533
      %535 = vadd.xlane.f32.xlu0 %v514
      %v536 = vpop.xlane.xlu0 %535
      %537 = vadd.xlane.f32.xlu0 %v515
      %v538 = vpop.xlane.xlu0 %537
      %539 = vadd.xlane.f32.xlu0 %v516
      %v540 = vpop.xlane.xlu0 %539
      %541 = vadd.xlane.f32.xlu0 %v517
      %v542 = vpop.xlane.xlu0 %541
      %543 = vadd.xlane.f32.xlu0 %v518
      %v544 = vpop.xlane.xlu0 %543
      %545 = vadd.xlane.f32.xlu0 %v519
      %v546 = vpop.xlane.xlu0 %545
      %547 = vadd.xlane.f32.xlu0 %v520
      %v548 = vpop.xlane.xlu0 %547
      %549 = vadd.xlane.f32.xlu0 %v521
      %v550 = vpop.xlane.xlu0 %549
      %551 = vadd.xlane.f32.xlu0 %v522
      %v552 = vpop.xlane.xlu0 %551
      %553 = vadd.xlane.f32.xlu0 %v523
      %v554 = vpop.xlane.xlu0 %553
      %555 = vadd.xlane.f32.xlu0 %v524
      %v556 = vpop.xlane.xlu0 %555
      %v557 = vmax.f32 %v526, 1e-24
      %v558 = vmax.f32 %v528, 1e-24
      %v559 = vmax.f32 %v530, 1e-24
      %v560 = vmax.f32 %v532, 1e-24
      %v561 = vmax.f32 %v534, 1e-24
      %v562 = vmax.f32 %v536, 1e-24
      %v563 = vmax.f32 %v538, 1e-24
      %v564 = vmax.f32 %v540, 1e-24
      %v565 = vmax.f32 %v542, 1e-24
      %v566 = vmax.f32 %v544, 1e-24
      %v567 = vmax.f32 %v546, 1e-24
      %v568 = vmax.f32 %v548, 1e-24
      %v569 = vmax.f32 %v550, 1e-24
      %v570 = vmax.f32 %v552, 1e-24
      %v571 = vmax.f32 %v554, 1e-24
      %v572 = vmax.f32 %v556, 1e-24
      %v573 = vrsqrt.pop %v557
      %v574 = vrsqrt.pop %v558
      %v575 = vrsqrt.pop %v559
      %v576 = vrsqrt.pop %v560
      %v577 = vrsqrt.pop %v561
      %v578 = vrsqrt.pop %v562
      %v579 = vrsqrt.pop %v563
      %v580 = vrsqrt.pop %v564
      %v581 = vrsqrt.pop %v565
      %v582 = vrsqrt.pop %v566
      %v583 = vrsqrt.pop %v567
      %v584 = vrsqrt.pop %v568
      %v585 = vrsqrt.pop %v569
      %v586 = vrsqrt.pop %v570
      %v587 = vrsqrt.pop %v571
      %v588 = vrsqrt.pop %v572
      %v589 = vmul.f32 %v493, %v573
      %v590 = vmul.f32 %v494, %v574
      %v591 = vmul.f32 %v495, %v575
      %v592 = vmul.f32 %v496, %v576
      %v593 = vmul.f32 %v497, %v577
      %v594 = vmul.f32 %v498, %v578
      %v595 = vmul.f32 %v499, %v579
      %v596 = vmul.f32 %v500, %v580
      %v597 = vmul.f32 %v501, %v581
      %v598 = vmul.f32 %v502, %v582
      %v599 = vmul.f32 %v503, %v583
      %v600 = vmul.f32 %v504, %v584
      %v601 = vmul.f32 %v505, %v585
      %v602 = vmul.f32 %v506, %v586
      %v603 = vmul.f32 %v507, %v587
      %v604 = vmul.f32 %v508, %v588
      %v605 = vmul.f32 %v477, %v589
      %v606 = vmul.f32 %v478, %v590
      %v607 = vmul.f32 %v479, %v591
      %v608 = vmul.f32 %v480, %v592
      %v609 = vmul.f32 %v481, %v593
      %v610 = vmul.f32 %v482, %v594
      %v611 = vmul.f32 %v483, %v595
      %v612 = vmul.f32 %v484, %v596
      %v613 = vmul.f32 %v485, %v597
      %v614 = vmul.f32 %v486, %v598
      %v615 = vmul.f32 %v487, %v599
      %v616 = vmul.f32 %v488, %v600
      %v617 = vmul.f32 %v489, %v601
      %v618 = vmul.f32 %v490, %v602
      %v619 = vmul.f32 %v491, %v603
      %v620 = vmul.f32 %v492, %v604
      %621 = vadd.xlane.f32.xlu0 %v605
      %v622 = vpop.xlane.xlu0 %621
      %623 = vadd.xlane.f32.xlu0 %v606
      %v624 = vpop.xlane.xlu0 %623
      %625 = vadd.xlane.f32.xlu0 %v607
      %v626 = vpop.xlane.xlu0 %625
      %627 = vadd.xlane.f32.xlu0 %v608
      %v628 = vpop.xlane.xlu0 %627
      %629 = vadd.xlane.f32.xlu0 %v609
      %v630 = vpop.xlane.xlu0 %629
      %631 = vadd.xlane.f32.xlu0 %v610
      %v632 = vpop.xlane.xlu0 %631
      %633 = vadd.xlane.f32.xlu0 %v611
      %v634 = vpop.xlane.xlu0 %633
      %635 = vadd.xlane.f32.xlu0 %v612
      %v636 = vpop.xlane.xlu0 %635
      %637 = vadd.xlane.f32.xlu0 %v613
      %v638 = vpop.xlane.xlu0 %637
      %639 = vadd.xlane.f32.xlu0 %v614
      %v640 = vpop.xlane.xlu0 %639
      %641 = vadd.xlane.f32.xlu0 %v615
      %v642 = vpop.xlane.xlu0 %641
      %643 = vadd.xlane.f32.xlu0 %v616
      %v644 = vpop.xlane.xlu0 %643
      %645 = vadd.xlane.f32.xlu0 %v617
      %v646 = vpop.xlane.xlu0 %645
      %647 = vadd.xlane.f32.xlu0 %v618
      %v648 = vpop.xlane.xlu0 %647
      %649 = vadd.xlane.f32.xlu0 %v619
      %v650 = vpop.xlane.xlu0 %649
      %651 = vadd.xlane.f32.xlu0 %v620
      %v652 = vpop.xlane.xlu0 %651
      %v653 = vld [vmem:[%s213] sm:$0xff]
      %v654 = vld [vmem:[%s213 + $0x8] sm:$0xff]
      %v655 = vld [vmem:[%s213 + $0x10] sm:$0xff]
      %v656 = vld [vmem:[%s213 + $0x18] sm:$0xff]
      %v657 = vld [vmem:[%s213 + $0x20] sm:$0xff]
      %v658 = vld [vmem:[%s213 + $0x28] sm:$0xff]
      %v659 = vld [vmem:[%s213 + $0x30] sm:$0xff]
      %v660 = vld [vmem:[%s213 + $0x38] sm:$0xff]
      %v661 = vld [vmem:[%s213 + $0x40] sm:$0xff]
      %v662 = vld [vmem:[%s213 + $0x48] sm:$0xff]
      %v663 = vld [vmem:[%s213 + $0x50] sm:$0xff]
      %v664 = vld [vmem:[%s213 + $0x58] sm:$0xff]
      %v665 = vld [vmem:[%s213 + $0x60] sm:$0xff]
      %v666 = vld [vmem:[%s213 + $0x68] sm:$0xff]
      %v667 = vld [vmem:[%s213 + $0x70] sm:$0xff]
      %v668 = vld [vmem:[%s213 + $0x78] sm:$0xff]
      %v669 = vlog2.pop %v653
      %v670 = vmul.f32 %v669, 0.6931472
      %v671 = vlog2.pop %v654
      %v672 = vmul.f32 %v671, 0.6931472
      %v673 = vlog2.pop %v655
      %v674 = vmul.f32 %v673, 0.6931472
      %v675 = vlog2.pop %v656
      %v676 = vmul.f32 %v675, 0.6931472
      %v677 = vlog2.pop %v657
      %v678 = vmul.f32 %v677, 0.6931472
      %v679 = vlog2.pop %v658
      %v680 = vmul.f32 %v679, 0.6931472
      %v681 = vlog2.pop %v659
      %v682 = vmul.f32 %v681, 0.6931472
      %v683 = vlog2.pop %v660
      %v684 = vmul.f32 %v683, 0.6931472
      %v685 = vlog2.pop %v661
      %v686 = vmul.f32 %v685, 0.6931472
      %v687 = vlog2.pop %v662
      %v688 = vmul.f32 %v687, 0.6931472
      %v689 = vlog2.pop %v663
      %v690 = vmul.f32 %v689, 0.6931472
      %v691 = vlog2.pop %v664
      %v692 = vmul.f32 %v691, 0.6931472
      %v693 = vlog2.pop %v665
      %v694 = vmul.f32 %v693, 0.6931472
      %v695 = vlog2.pop %v666
      %v696 = vmul.f32 %v695, 0.6931472
      %v697 = vlog2.pop %v667
      %v698 = vmul.f32 %v697, 0.6931472
      %v699 = vlog2.pop %v668
      %v700 = vmul.f32 %v699, 0.6931472
      %v701 = vsub.f32 0.0, %v670
      %v702 = vsub.f32 0.0, %v672
      %v703 = vsub.f32 0.0, %v674
      %v704 = vsub.f32 0.0, %v676
      %v705 = vsub.f32 0.0, %v678
      %v706 = vsub.f32 0.0, %v680
      %v707 = vsub.f32 0.0, %v682
      %v708 = vsub.f32 0.0, %v684
      %v709 = vsub.f32 0.0, %v686
      %v710 = vsub.f32 0.0, %v688
      %v711 = vsub.f32 0.0, %v690
      %v712 = vsub.f32 0.0, %v692
      %v713 = vsub.f32 0.0, %v694
      %v714 = vsub.f32 0.0, %v696
      %v715 = vsub.f32 0.0, %v698
      %v716 = vsub.f32 0.0, %v700
      %v717 = vlog2.pop %v701
      %v718 = vmul.f32 %v717, 0.6931472
      %v719 = vlog2.pop %v702
      %v720 = vmul.f32 %v719, 0.6931472
      %v721 = vlog2.pop %v703
      %v722 = vmul.f32 %v721, 0.6931472
      %v723 = vlog2.pop %v704
      %v724 = vmul.f32 %v723, 0.6931472
      %v725 = vlog2.pop %v705
      %v726 = vmul.f32 %v725, 0.6931472
      %v727 = vlog2.pop %v706
      %v728 = vmul.f32 %v727, 0.6931472
      %v729 = vlog2.pop %v707
      %v730 = vmul.f32 %v729, 0.6931472
      %v731 = vlog2.pop %v708
      %v732 = vmul.f32 %v731, 0.6931472
      %v733 = vlog2.pop %v709
      %v734 = vmul.f32 %v733, 0.6931472
      %v735 = vlog2.pop %v710
      %v736 = vmul.f32 %v735, 0.6931472
      %v737 = vlog2.pop %v711
      %v738 = vmul.f32 %v737, 0.6931472
      %v739 = vlog2.pop %v712
      %v740 = vmul.f32 %v739, 0.6931472
      %v741 = vlog2.pop %v713
      %v742 = vmul.f32 %v741, 0.6931472
      %v743 = vlog2.pop %v714
      %v744 = vmul.f32 %v743, 0.6931472
      %v745 = vlog2.pop %v715
      %v746 = vmul.f32 %v745, 0.6931472
      %v747 = vlog2.pop %v716
      %v748 = vmul.f32 %v747, 0.6931472
      %v749 = vsub.f32 0.0, %v718
      %v750 = vsub.f32 0.0, %v720
      %v751 = vsub.f32 0.0, %v722
      %v752 = vsub.f32 0.0, %v724
      %v753 = vsub.f32 0.0, %v726
      %v754 = vsub.f32 0.0, %v728
      %v755 = vsub.f32 0.0, %v730
      %v756 = vsub.f32 0.0, %v732
      %v757 = vsub.f32 0.0, %v734
      %v758 = vsub.f32 0.0, %v736
      %v759 = vsub.f32 0.0, %v738
      %v760 = vsub.f32 0.0, %v740
      %v761 = vsub.f32 0.0, %v742
      %v762 = vsub.f32 0.0, %v744
      %v763 = vsub.f32 0.0, %v746
      %v764 = vsub.f32 0.0, %v748
      %v765 = vadd.f32 %v622, %v749
      %v766 = vadd.f32 %v624, %v750
      %v767 = vadd.f32 %v626, %v751
      %v768 = vadd.f32 %v628, %v752
      %v769 = vadd.f32 %v630, %v753
      %v770 = vadd.f32 %v632, %v754
      %v771 = vadd.f32 %v634, %v755
      %v772 = vadd.f32 %v636, %v756
      %v773 = vadd.f32 %v638, %v757
      %v774 = vadd.f32 %v640, %v758
      %v775 = vadd.f32 %v642, %v759
      %v776 = vadd.f32 %v644, %v760
      %v777 = vadd.f32 %v646, %v761
      %v778 = vadd.f32 %v648, %v762
      %v779 = vadd.f32 %v650, %v763
      %v780 = vadd.f32 %v652, %v764
      %vm781 = vcmask 7168
      %782 = vst.msk [vmem:[%s219] sm:$0xff] %vm781, %v765
      %783 = vst.msk [vmem:[%s219 + $0x8] sm:$0xff] %vm781, %v766
      %784 = vst.msk [vmem:[%s219 + $0x10] sm:$0xff] %vm781, %v767
      %785 = vst.msk [vmem:[%s219 + $0x18] sm:$0xff] %vm781, %v768
      %786 = vst.msk [vmem:[%s219 + $0x20] sm:$0xff] %vm781, %v769
      %787 = vst.msk [vmem:[%s219 + $0x28] sm:$0xff] %vm781, %v770
      %788 = vst.msk [vmem:[%s219 + $0x30] sm:$0xff] %vm781, %v771
      %789 = vst.msk [vmem:[%s219 + $0x38] sm:$0xff] %vm781, %v772
      %790 = vst.msk [vmem:[%s219 + $0x40] sm:$0xff] %vm781, %v773
      %791 = vst.msk [vmem:[%s219 + $0x48] sm:$0xff] %vm781, %v774
      %792 = vst.msk [vmem:[%s219 + $0x50] sm:$0xff] %vm781, %v775
      %793 = vst.msk [vmem:[%s219 + $0x58] sm:$0xff] %vm781, %v776
      %794 = vst.msk [vmem:[%s219 + $0x60] sm:$0xff] %vm781, %v777
      %795 = vst.msk [vmem:[%s219 + $0x68] sm:$0xff] %vm781, %v778
      %796 = vst.msk [vmem:[%s219 + $0x70] sm:$0xff] %vm781, %v779
      %797 = vst.msk [vmem:[%s219 + $0x78] sm:$0xff] %vm781, %v780
      %s798 = smul.u32 16, %s14
      %p799 = scmp.lt.s32.totalorder %s798, 31
      %s800 = scalar_select %p799, %s798, 31
      %s801 = smul.addr %s800, 8
      %s802 = scalar_lea.vmem %s3, %s801
      // Predicated region
      $region33: #{local_graph_forward.7} parent=31 // pred_check
        %p803 = pneg %p110
      $region34: #{local_graph_forward.7} parent=31 // pred_check_branch
        %805 = sbr.rel (%p803) target = $region36
      $region35: #{local_graph_forward.7} parent=31 // pred_region
        %s806 = smul.u32 16, %s14
      $region36: #{local_graph_forward.7} parent=31 // pred_fallthru
        _
    $region32: #{local_graph_forward.7} parent=5 // pred_fallthru
      _
    %p807 = scmp.le.s32.totalorder 2, %s9
    // Predicated region
    $region37: #{local_graph_forward.7} parent=5 // pred_check
      %p808 = pneg %p807
    $region38: #{local_graph_forward.7} parent=5 // pred_check_branch
      %810 = sbr.rel (%p808) target = $region40
    $region39: #{local_graph_forward.7} parent=5 // pred_region
      %s811 = ssub.s32 %s9, 2
      // Predicated region
      $region41: #{local_graph_forward.7} parent=39 // pred_check
        %p812 = pneg %p116
      $region42: #{local_graph_forward.7} parent=39 // pred_check_branch
        %814 = sbr.rel (%p812) target = $region44
      $region43: #{local_graph_forward.7} parent=39 // pred_region
        %s815 = smul.u32 16, %s15
        %p816 = scmp.lt.s32.totalorder %s815, 31
        %s817 = scalar_select %p816, %s815, 31
        %s818 = smul.addr %s817, 8
        %s819 = scalar_lea.vmem %s3, %s818
      $region44: #{local_graph_forward.7} parent=39 // pred_fallthru
        _
    $region40: #{local_graph_forward.7} parent=5 // pred_fallthru
      _
  $region6: #{local_graph_forward.7} parent=0 // loop_footer
    %s13 = sadd.s32 1, %s9
  $region7: #{local_graph_forward.7} parent=0 // loop_footer_branch
    %8 = sbr.rel target = $region3
  $region8: #{local_graph_forward.7} parent=0 // loop_exit
    _

// kernel: local_graph_forward.4
$region0: #{local_graph_forward.4}
  #allocation0 [shape = 'u32[]', space=smem, size = 0x4, offset = 0x4, fixed_abs, tag = 'smem constant byte address 0x4 - core index']
  #allocation1 [shape = 'u32[144,128]{1,0:T(1,128)}', space=vmem, size = 0x12000, scoped, tag = 'internal scratch']
  %s0 = inlined_call_operand.vmem [shape: bf16[256,256], index: 0, kind: input, shape index: {}]
  %s1 = inlined_call_operand.vmem [shape: f32[256,128], index: 1, kind: input, shape index: {}]
  %s2 = inlined_call_operand.vmem [shape: f32[256,256], index: 2, kind: output, shape index: {}]
  %s3 = sld [smem:[#allocation0]]
  $region41: #{local_graph_forward.4} parent=0
    _
  %s5 = ssub.s32 1, %s3
  %s6 = scalar_select 0, %s5, %s3
  loop: start=0, step=1, limit=4
  $region2: #{local_graph_forward.4} parent=0 // loop_pre_header
    _
  $region3: #{local_graph_forward.4} parent=0 // loop_header
    %s8 = sphi 0, %s12
    %p9 = scmp.ge.s32.totalorder %s8, 4
    %s18 = sphi 0, %s20
    %s21 = sphi 0, %s18
    %s22 = sphi 0, %s21
    %s38 = sphi 0, %s22
    %s42 = sphi 0, %s42
    %s44 = sphi 0, %s42
    %s45 = sphi 0, %s44
    %s59 = sphi 0, %s45
    %s65 = sphi 0, %s67
    %s68 = sphi 0, %s65
    %s69 = sphi 0, %s68
    %s85 = sphi 0, %s69
  $region4: #{local_graph_forward.4} parent=0 // loop_header_branch
    %11 = sbr.rel (%p9) target = $region8
  $region5: #{local_graph_forward.4} parent=0 // loop_body
    %s13 = ssub.s32 %s8, 1
    %s14 = ssub.s32 %s8, 2
    %s15 = sadd.s32 %s8, 1
    %s16 = ssub.s32 %s8, %s15
    %p17 = scmp.eq.s32.totalorder %s16, 0
    %s19 = sadd.s32 %s18, 1
    %s20 = scalar_select %p17, %s18, %s19
    %p23 = pneg %p17
    %p24 = scmp.eq.s32.totalorder %s8, 1
    %p25 = por %p23, %p24
    %p26 = scmp.ne.s32.totalorder %s18, %s21
    %p27 = scmp.eq.s32.totalorder %s8, 0
    %p28 = por %p26, %p27
    %p29 = scmp.ne.s32.totalorder %s18, %s21
    %p30 = scmp.eq.s32.totalorder %s13, 1
    %p31 = por %p29, %p30
    %p32 = scmp.ne.s32.totalorder %s21, %s22
    %p33 = scmp.eq.s32.totalorder %s13, 0
    %p34 = por %p32, %p33
    %p35 = scmp.ne.s32.totalorder %s21, %s22
    %p36 = scmp.eq.s32.totalorder %s14, 1
    %p37 = por %p35, %p36
    %p39 = scmp.ne.s32.totalorder %s22, %s38
    %p40 = scmp.eq.s32.totalorder %s14, 0
    %p41 = por %p39, %p40
    %s43 = sadd.s32 %s42, 1
    %p46 = scmp.eq.s32.totalorder %s8, 1
    %p47 = scmp.ne.s32.totalorder %s42, %s44
    %p48 = scmp.eq.s32.totalorder %s8, 0
    %p49 = por %p47, %p48
    %p50 = scmp.ne.s32.totalorder %s42, %s44
    %p51 = scmp.eq.s32.totalorder %s13, 1
    %p52 = por %p50, %p51
    %p53 = scmp.ne.s32.totalorder %s44, %s45
    %p54 = scmp.eq.s32.totalorder %s13, 0
    %p55 = por %p53, %p54
    %p56 = scmp.ne.s32.totalorder %s44, %s45
    %p57 = scmp.eq.s32.totalorder %s14, 1
    %p58 = por %p56, %p57
    %p60 = scmp.ne.s32.totalorder %s45, %s59
    %p61 = scmp.eq.s32.totalorder %s14, 0
    %p62 = por %p60, %p61
    %s63 = ssub.s32 %s8, %s15
    %p64 = scmp.eq.s32.totalorder %s63, 0
    %s66 = sadd.s32 %s65, 1
    %s67 = scalar_select %p64, %s65, %s66
    %p70 = pneg %p64
    %p71 = scmp.eq.s32.totalorder %s8, 1
    %p72 = por %p70, %p71
    %p73 = scmp.ne.s32.totalorder %s65, %s68
    %p74 = scmp.eq.s32.totalorder %s8, 0
    %p75 = por %p73, %p74
    %p76 = scmp.ne.s32.totalorder %s65, %s68
    %p77 = scmp.eq.s32.totalorder %s13, 1
    %p78 = por %p76, %p77
    %p79 = scmp.ne.s32.totalorder %s68, %s69
    %p80 = scmp.eq.s32.totalorder %s13, 0
    %p81 = por %p79, %p80
    %p82 = scmp.ne.s32.totalorder %s68, %s69
    %p83 = scmp.eq.s32.totalorder %s14, 1
    %p84 = por %p82, %p83
    %p86 = scmp.ne.s32.totalorder %s69, %s85
    %p87 = scmp.eq.s32.totalorder %s14, 0
    %p88 = por %p86, %p87
    %p89 = scmp.le.s32.totalorder 1, %s8
    %p90 = scmp.lt.s32.totalorder %s8, 3
    %p91 = pnand %p89, %p90
    %p92 = pneg %p91
    // Predicated region
    $region9: #{local_graph_forward.4} parent=5 // pred_check
      _
    $region10: #{local_graph_forward.4} parent=5 // pred_check_branch
      %94 = sbr.rel (%p91) target = $region12
    $region11: #{local_graph_forward.4} parent=5 // pred_region
      %s95 = ssub.s32 %s8, 1
      // Predicated region
      $region13: #{local_graph_forward.4} parent=11 // pred_check
        %p96 = pneg %p55
      $region14: #{local_graph_forward.4} parent=11 // pred_check_branch
        %98 = sbr.rel (%p96) target = $region16
      $region15: #{local_graph_forward.4} parent=11 // pred_region
        _
      $region16: #{local_graph_forward.4} parent=11 // pred_fallthru
        _
    $region12: #{local_graph_forward.4} parent=5 // pred_fallthru
      _
    %p99 = scmp.lt.s32.totalorder %s8, 2
    // Predicated region
    $region17: #{local_graph_forward.4} parent=5 // pred_check
      %p100 = pneg %p99
    $region18: #{local_graph_forward.4} parent=5 // pred_check_branch
      %102 = sbr.rel (%p100) target = $region20
    $region19: #{local_graph_forward.4} parent=5 // pred_region
      // Predicated region
      $region21: #{local_graph_forward.4} parent=19 // pred_check
        %p103 = pneg %p28
      $region22: #{local_graph_forward.4} parent=19 // pred_check_branch
        %105 = sbr.rel (%p103) target = $region24
      $region23: #{local_graph_forward.4} parent=19 // pred_region
        %s106 = smul.u32 16, %s8
        %p107 = scmp.lt.s32.totalorder %s106, 31
        %s108 = scalar_select %p107, %s106, 31
        %s109 = smul.addr %s108, 2
        %s110 = smul.addr %s109, 4
        %s111 = scalar_lea.vmem %s0, %s110
        %s112 = smul.u32 16, %s8
      $region24: #{local_graph_forward.4} parent=19 // pred_fallthru
        _
    $region20: #{local_graph_forward.4} parent=5 // pred_fallthru
      _
    %p113 = scmp.le.s32.totalorder 1, %s8
    %p114 = scmp.lt.s32.totalorder %s8, 3
    %p115 = pnand %p113, %p114
    %p116 = pneg %p115
    // Predicated region
    $region25: #{local_graph_forward.4} parent=5 // pred_check
      _
    $region26: #{local_graph_forward.4} parent=5 // pred_check_branch
      %118 = sbr.rel (%p115) target = $region28
    $region27: #{local_graph_forward.4} parent=5 // pred_region
      %s119 = ssub.s32 %s8, 1
      %s120 = smul.u32 16, %s13
      %p121 = scmp.lt.s32.totalorder %s120, 31
      %s122 = scalar_select %p121, %s120, 31
      %s123 = smul.addr %s122, 2
      %s124 = smul.addr %s123, 4
      %s125 = scalar_lea.vmem %s0, %s124
      %p126 = pneg %p34
      %p127 = pneg %p31
      %p128 = pneg %p55
      %p129 = pneg %p52
      %p130 = pneg %p81
      %p131 = pneg %p78
      %s132 = smul.u32 16, %s13
      %p133 = scmp.lt.s32.totalorder %s132, 31
      %s134 = scalar_select %p133, %s132, 31
      %s135 = smul.addr %s134, 2
      %s136 = smul.addr %s135, 8
      %s137 = scalar_lea.vmem %s2, %s136
      %s138 = smul.u32 16, %s13
      %p139 = scmp.lt.s32.totalorder %s138, 31
      %s140 = scalar_select %p139, %s138, 31
      %s141 = smul.addr %s140, 2
      %s142 = smul.addr %s141, 4
      %s143 = scalar_lea.vmem %s0, %s142
      %s144 = smul.u32 16, %s13
      %s145 = smul.u32 16, %s13
      %p146 = scmp.lt.s32.totalorder %s145, 31
      %s147 = scalar_select %p146, %s145, 31
      %s148 = smul.addr %s147, 2
      %s149 = smul.addr %s148, 8
      %s150 = scalar_lea.vmem %s2, %s149
      %s151 = smul.u32 16, %s13
      %s153 = smul.u32 %s13, 128
      %v154 = vld [vmem:[%s143] sm:$0xff]
      %v155 = vld [vmem:[%s143 + $0x8] sm:$0xff]
      %v156 = vld [vmem:[%s143 + $0x10] sm:$0xff]
      %v157 = vld [vmem:[%s143 + $0x18] sm:$0xff]
      %v158 = vld [vmem:[%s143 + $0x20] sm:$0xff]
      %v159 = vld [vmem:[%s143 + $0x28] sm:$0xff]
      %v160 = vld [vmem:[%s143 + $0x30] sm:$0xff]
      %v161 = vld [vmem:[%s143 + $0x38] sm:$0xff]
      %v162 = vld [vmem:[%s143 + $0x40] sm:$0xff]
      %v163 = vld [vmem:[%s143 + $0x48] sm:$0xff]
      %v164 = vld [vmem:[%s143 + $0x50] sm:$0xff]
      %v165 = vld [vmem:[%s143 + $0x58] sm:$0xff]
      %v166 = vld [vmem:[%s143 + $0x60] sm:$0xff]
      %v167 = vld [vmem:[%s143 + $0x68] sm:$0xff]
      %v168 = vld [vmem:[%s143 + $0x70] sm:$0xff]
      %v169 = vld [vmem:[%s143 + $0x78] sm:$0xff]
      %v170 = vunpack.c.l.bf16 %v154
      %v171 = vunpack.c.h.bf16 %v154
      %v172 = vunpack.c.l.bf16 %v155
      %v173 = vunpack.c.h.bf16 %v155
      %v174 = vunpack.c.l.bf16 %v156
      %v175 = vunpack.c.h.bf16 %v156
      %v176 = vunpack.c.l.bf16 %v157
      %v177 = vunpack.c.h.bf16 %v157
      %v178 = vunpack.c.l.bf16 %v158
      %v179 = vunpack.c.h.bf16 %v158
      %v180 = vunpack.c.l.bf16 %v159
      %v181 = vunpack.c.h.bf16 %v159
      %v182 = vunpack.c.l.bf16 %v160
      %v183 = vunpack.c.h.bf16 %v160
      %v184 = vunpack.c.l.bf16 %v161
      %v185 = vunpack.c.h.bf16 %v161
      %v186 = vunpack.c.l.bf16 %v162
      %v187 = vunpack.c.h.bf16 %v162
      %v188 = vunpack.c.l.bf16 %v163
      %v189 = vunpack.c.h.bf16 %v163
      %v190 = vunpack.c.l.bf16 %v164
      %v191 = vunpack.c.h.bf16 %v164
      %v192 = vunpack.c.l.bf16 %v165
      %v193 = vunpack.c.h.bf16 %v165
      %v194 = vunpack.c.l.bf16 %v166
      %v195 = vunpack.c.h.bf16 %v166
      %v196 = vunpack.c.l.bf16 %v167
      %v197 = vunpack.c.h.bf16 %v167
      %v198 = vunpack.c.l.bf16 %v168
      %v199 = vunpack.c.h.bf16 %v168
      %v200 = vunpack.c.l.bf16 %v169
      %v201 = vunpack.c.h.bf16 %v169
      %v202 = vadd.f32 %v170, %v171
      %203 = vadd.xlane.f32.xlu0 %v202
      %v204 = vpop.xlane.xlu0 %203
      %v205 = vadd.f32 %v172, %v173
      %206 = vadd.xlane.f32.xlu0 %v205
      %v207 = vpop.xlane.xlu0 %206
      %v208 = vadd.f32 %v174, %v175
      %209 = vadd.xlane.f32.xlu0 %v208
      %v210 = vpop.xlane.xlu0 %209
      %v211 = vadd.f32 %v176, %v177
      %212 = vadd.xlane.f32.xlu0 %v211
      %v213 = vpop.xlane.xlu0 %212
      %v214 = vadd.f32 %v178, %v179
      %215 = vadd.xlane.f32.xlu0 %v214
      %v216 = vpop.xlane.xlu0 %215
      %v217 = vadd.f32 %v180, %v181
      %218 = vadd.xlane.f32.xlu0 %v217
      %v219 = vpop.xlane.xlu0 %218
      %v220 = vadd.f32 %v182, %v183
      %221 = vadd.xlane.f32.xlu0 %v220
      %v222 = vpop.xlane.xlu0 %221
      %v223 = vadd.f32 %v184, %v185
      %224 = vadd.xlane.f32.xlu0 %v223
      %v225 = vpop.xlane.xlu0 %224
      %v226 = vadd.f32 %v186, %v187
      %227 = vadd.xlane.f32.xlu0 %v226
      %v228 = vpop.xlane.xlu0 %227
      %v229 = vadd.f32 %v188, %v189
      %230 = vadd.xlane.f32.xlu0 %v229
      %v231 = vpop.xlane.xlu0 %230
      %v232 = vadd.f32 %v190, %v191
      %233 = vadd.xlane.f32.xlu0 %v232
      %v234 = vpop.xlane.xlu0 %233
      %v235 = vadd.f32 %v192, %v193
      %236 = vadd.xlane.f32.xlu0 %v235
      %v237 = vpop.xlane.xlu0 %236
      %v238 = vadd.f32 %v194, %v195
      %239 = vadd.xlane.f32.xlu0 %v238
      %v240 = vpop.xlane.xlu0 %239
      %v241 = vadd.f32 %v196, %v197
      %242 = vadd.xlane.f32.xlu0 %v241
      %v243 = vpop.xlane.xlu0 %242
      %v244 = vadd.f32 %v198, %v199
      %245 = vadd.xlane.f32.xlu0 %v244
      %v246 = vpop.xlane.xlu0 %245
      %v247 = vadd.f32 %v200, %v201
      %248 = vadd.xlane.f32.xlu0 %v247
      %v249 = vpop.xlane.xlu0 %248
      %v250 = vld [vmem:[%s1] sm:$0xff]
      %v251 = vld [vmem:[%s1 + $0x8] sm:$0xff]
      %v252 = vld [vmem:[%s1 + $0x10] sm:$0xff]
      %v253 = vld [vmem:[%s1 + $0x18] sm:$0xff]
      %v254 = vld [vmem:[%s1 + $0x20] sm:$0xff]
      %v255 = vld [vmem:[%s1 + $0x28] sm:$0xff]
      %v256 = vld [vmem:[%s1 + $0x30] sm:$0xff]
      %v257 = vld [vmem:[%s1 + $0x38] sm:$0xff]
      %v258 = vld [vmem:[%s1 + $0x40] sm:$0xff]
      %v259 = vld [vmem:[%s1 + $0x48] sm:$0xff]
      %v260 = vld [vmem:[%s1 + $0x50] sm:$0xff]
      %v261 = vld [vmem:[%s1 + $0x58] sm:$0xff]
      %v262 = vld [vmem:[%s1 + $0x60] sm:$0xff]
      %v263 = vld [vmem:[%s1 + $0x68] sm:$0xff]
      %v264 = vld [vmem:[%s1 + $0x70] sm:$0xff]
      %v265 = vld [vmem:[%s1 + $0x78] sm:$0xff]
      %v266 = vld [vmem:[%s1 + $0x80] sm:$0xff]
      %v267 = vld [vmem:[%s1 + $0x88] sm:$0xff]
      %v268 = vld [vmem:[%s1 + $0x90] sm:$0xff]
      %v269 = vld [vmem:[%s1 + $0x98] sm:$0xff]
      %v270 = vld [vmem:[%s1 + $0xa0] sm:$0xff]
      %v271 = vld [vmem:[%s1 + $0xa8] sm:$0xff]
      %v272 = vld [vmem:[%s1 + $0xb0] sm:$0xff]
      %v273 = vld [vmem:[%s1 + $0xb8] sm:$0xff]
      %v274 = vld [vmem:[%s1 + $0xc0] sm:$0xff]
      %v275 = vld [vmem:[%s1 + $0xc8] sm:$0xff]
      %v276 = vld [vmem:[%s1 + $0xd0] sm:$0xff]
      %v277 = vld [vmem:[%s1 + $0xd8] sm:$0xff]
      %v278 = vld [vmem:[%s1 + $0xe0] sm:$0xff]
      %v279 = vld [vmem:[%s1 + $0xe8] sm:$0xff]
      %v280 = vld [vmem:[%s1 + $0xf0] sm:$0xff]
      %v281 = vld [vmem:[%s1 + $0xf8] sm:$0xff]
      %v282 = vpack.c.bf16 %v251, %v250
      %v283 = vpack.c.bf16 %v253, %v252
      %v284 = vpack.c.bf16 %v255, %v254
      %v285 = vpack.c.bf16 %v257, %v256
      %v286 = vpack.c.bf16 %v259, %v258
      %v287 = vpack.c.bf16 %v261, %v260
      %v288 = vpack.c.bf16 %v263, %v262
      %v289 = vpack.c.bf16 %v265, %v264
      %v290 = vpack.c.bf16 %v267, %v266
      %v291 = vpack.c.bf16 %v269, %v268
      %v292 = vpack.c.bf16 %v271, %v270
      %v293 = vpack.c.bf16 %v273, %v272
      %v294 = vpack.c.bf16 %v275, %v274
      %v295 = vpack.c.bf16 %v277, %v276
      %v296 = vpack.c.bf16 %v279, %v278
      %v297 = vpack.c.bf16 %v281, %v280
      %v314 = vunpack.c.l.b16 %v154
      %v315 = vunpack.c.h.b16 %v154
      %v316 = vunpack.c.l.b16 %v155
      %v317 = vunpack.c.h.b16 %v155
      %v318 = vunpack.c.l.b16 %v156
      %v319 = vunpack.c.h.b16 %v156
      %v320 = vunpack.c.l.b16 %v157
      %v321 = vunpack.c.h.b16 %v157
      %v322 = vunpack.c.l.b16 %v158
      %v323 = vunpack.c.h.b16 %v158
      %v324 = vunpack.c.l.b16 %v159
      %v325 = vunpack.c.h.b16 %v159
      %v326 = vunpack.c.l.b16 %v160
      %v327 = vunpack.c.h.b16 %v160
      %v328 = vunpack.c.l.b16 %v161
      %v329 = vunpack.c.h.b16 %v161
      %v330 = vunpack.c.l.b16 %v162
      %v331 = vunpack.c.h.b16 %v162
      %v332 = vunpack.c.l.b16 %v163
      %v333 = vunpack.c.h.b16 %v163
      %v334 = vunpack.c.l.b16 %v164
      %v335 = vunpack.c.h.b16 %v164
      %v336 = vunpack.c.l.b16 %v165
      %v337 = vunpack.c.h.b16 %v165
      %v338 = vunpack.c.l.b16 %v166
      %v339 = vunpack.c.h.b16 %v166
      %v340 = vunpack.c.l.b16 %v167
      %v341 = vunpack.c.h.b16 %v167
      %v342 = vunpack.c.l.b16 %v168
      %v343 = vunpack.c.h.b16 %v168
      %v344 = vunpack.c.l.b16 %v169
      %v345 = vunpack.c.h.b16 %v169
      %v346 = vpack.c.b16 %v316, %v314
      %v347 = vpack.c.b16 %v317, %v315
      %v348 = vpack.c.b16 %v320, %v318
      %v349 = vpack.c.b16 %v321, %v319
      %v350 = vpack.c.b16 %v324, %v322
      %v351 = vpack.c.b16 %v325, %v323
      %v352 = vpack.c.b16 %v328, %v326
      %v353 = vpack.c.b16 %v329, %v327
      %v354 = vpack.c.b16 %v332, %v330
      %v355 = vpack.c.b16 %v333, %v331
      %v356 = vpack.c.b16 %v336, %v334
      %v357 = vpack.c.b16 %v337, %v335
      %v358 = vpack.c.b16 %v340, %v338
      %v359 = vpack.c.b16 %v341, %v339
      %v360 = vpack.c.b16 %v344, %v342
      %v361 = vpack.c.b16 %v345, %v343
      %378 = vmatprep.subr.bf16.mxu0 0
      %379 = vmatpush1.bf16.msra.mxu0 %v289
      %380 = vmatprep.subr.bf16.mxu0 0
      %381 = vmatpush1.bf16.msra.mxu0 %v288
      %382 = vmatprep.subr.bf16.mxu0 0
      %383 = vmatpush1.bf16.msra.mxu0 %v287
      %384 = vmatprep.subr.bf16.mxu0 0
      %385 = vmatpush1.bf16.msra.mxu0 %v286
      %386 = vmatprep.subr.bf16.mxu0 0
      %387 = vmatpush1.bf16.msra.mxu0 %v285
      %388 = vmatprep.subr.bf16.mxu0 0
      %389 = vmatpush1.bf16.msra.mxu0 %v284
      %390 = vmatprep.subr.bf16.mxu0 0
      %391 = vmatpush1.bf16.msra.mxu0 %v283
      %392 = vmatprep.subr.bf16.mxu0 0
      %393 = vmatpush1.bf16.msra.mxu0 %v282
      %394 = vmatprep.subr.bf16.mxu0 0
      %395 = vmatpush2.bf16.msra.mxu0 %v297
      %396 = vmatprep.subr.bf16.mxu0 0
      %397 = vmatpush2.bf16.msra.mxu0 %v296
      %398 = vmatprep.subr.bf16.mxu0 0
      %399 = vmatpush2.bf16.msra.mxu0 %v295
      %400 = vmatprep.subr.bf16.mxu0 0
      %401 = vmatpush2.bf16.msra.mxu0 %v294
      %402 = vmatprep.subr.bf16.mxu0 0
      %403 = vmatpush2.bf16.msra.mxu0 %v293
      %404 = vmatprep.subr.bf16.mxu0 0
      %405 = vmatpush2.bf16.msra.mxu0 %v292
      %406 = vmatprep.subr.bf16.mxu0 0
      %407 = vmatpush2.bf16.msra.mxu0 %v291
      %408 = vmatprep.subr.bf16.mxu0 0
      %409 = vmatpush2.bf16.msra.mxu0 %v290
      %410 = vmatprep.mubr.bf16.mxu0 %v347
      %411 = vmatmul.mubr.bf16.gmra.mxu0 %v346
      %v412 = vpop.f32.mrf.mxu0
      %v413 = vadd.f32 0.0, %v412
      %v414 = vpop.f32.mrf.mxu0
      %v415 = vpop.f32.mrf.mxu0
      %v416 = vadd.f32 0.0, %v415
      %v417 = vpop.f32.mrf.mxu0
      %418 = vmatprep.mubr.bf16.mxu0 %v349
      %419 = vmatmul.mubr.bf16.gmra.mxu0 %v348
      %v420 = vpop.f32.mrf.mxu0
      %v421 = vadd.f32 0.0, %v420
      %v422 = vpop.f32.mrf.mxu0
      %v423 = vpop.f32.mrf.mxu0
      %v424 = vadd.f32 0.0, %v423
      %v425 = vpop.f32.mrf.mxu0
      %426 = vmatprep.mubr.bf16.mxu0 %v351
      %427 = vmatmul.mubr.bf16.gmra.mxu0 %v350
      %v428 = vpop.f32.mrf.mxu0
      %v429 = vadd.f32 0.0, %v428
      %v430 = vpop.f32.mrf.mxu0
      %v431 = vpop.f32.mrf.mxu0
      %v432 = vadd.f32 0.0, %v431
      %v433 = vpop.f32.mrf.mxu0
      %434 = vmatprep.mubr.bf16.mxu0 %v353
      %435 = vmatmul.mubr.bf16.gmra.mxu0 %v352
      %v436 = vpop.f32.mrf.mxu0
      %v437 = vadd.f32 0.0, %v436
      %v438 = vpop.f32.mrf.mxu0
      %v439 = vpop.f32.mrf.mxu0
      %v440 = vadd.f32 0.0, %v439
      %v441 = vpop.f32.mrf.mxu0
      %442 = vmatprep.mubr.bf16.mxu0 %v355
      %443 = vmatmul.mubr.bf16.gmra.mxu0 %v354
      %v444 = vpop.f32.mrf.mxu0
      %v445 = vadd.f32 0.0, %v444
      %v446 = vpop.f32.mrf.mxu0
      %v447 = vpop.f32.mrf.mxu0
      %v448 = vadd.f32 0.0, %v447
      %v449 = vpop.f32.mrf.mxu0
      %450 = vmatprep.mubr.bf16.mxu0 %v357
      %451 = vmatmul.mubr.bf16.gmra.mxu0 %v356
      %v452 = vpop.f32.mrf.mxu0
      %v453 = vadd.f32 0.0, %v452
      %v454 = vpop.f32.mrf.mxu0
      %v455 = vpop.f32.mrf.mxu0
      %v456 = vadd.f32 0.0, %v455
      %v457 = vpop.f32.mrf.mxu0
      %458 = vmatprep.mubr.bf16.mxu0 %v359
      %459 = vmatmul.mubr.bf16.gmra.mxu0 %v358
      %v460 = vpop.f32.mrf.mxu0
      %v461 = vadd.f32 0.0, %v460
      %v462 = vpop.f32.mrf.mxu0
      %v463 = vpop.f32.mrf.mxu0
      %v464 = vadd.f32 0.0, %v463
      %v465 = vpop.f32.mrf.mxu0
      %466 = vmatprep.mubr.bf16.mxu0 %v361
      %467 = vmatmul.mubr.bf16.gmra.mxu0 %v360
      %v468 = vpop.f32.mrf.mxu0
      %v469 = vadd.f32 0.0, %v468
      %v470 = vpop.f32.mrf.mxu0
      %v471 = vpop.f32.mrf.mxu0
      %v472 = vadd.f32 0.0, %v471
      %v473 = vpop.f32.mrf.mxu0
      %474 = vdwg.mxu0
      %s475 = scalar_lea.vmem %s1, %s153
      %v476 = vld [vmem:[%s475] sm:$0xff]
      %v477 = vld [vmem:[%s475 + $0x8] sm:$0xff]
      %v478 = vld [vmem:[%s475 + $0x10] sm:$0xff]
      %v479 = vld [vmem:[%s475 + $0x18] sm:$0xff]
      %v480 = vld [vmem:[%s475 + $0x20] sm:$0xff]
      %v481 = vld [vmem:[%s475 + $0x28] sm:$0xff]
      %v482 = vld [vmem:[%s475 + $0x30] sm:$0xff]
      %v483 = vld [vmem:[%s475 + $0x38] sm:$0xff]
      %v484 = vld [vmem:[%s475 + $0x40] sm:$0xff]
      %v485 = vld [vmem:[%s475 + $0x48] sm:$0xff]
      %v486 = vld [vmem:[%s475 + $0x50] sm:$0xff]
      %v487 = vld [vmem:[%s475 + $0x58] sm:$0xff]
      %v488 = vld [vmem:[%s475 + $0x60] sm:$0xff]
      %v489 = vld [vmem:[%s475 + $0x68] sm:$0xff]
      %v490 = vld [vmem:[%s475 + $0x70] sm:$0xff]
      %v491 = vld [vmem:[%s475 + $0x78] sm:$0xff]
      %v492 = vsub.f32 %v413, %v476
      %v493 = vsub.f32 %v416, %v477
      %v494 = vsub.f32 %v421, %v478
      %v495 = vsub.f32 %v424, %v479
      %v496 = vsub.f32 %v429, %v480
      %v497 = vsub.f32 %v432, %v481
      %v498 = vsub.f32 %v437, %v482
      %v499 = vsub.f32 %v440, %v483
      %v500 = vsub.f32 %v445, %v484
      %v501 = vsub.f32 %v448, %v485
      %v502 = vsub.f32 %v453, %v486
      %v503 = vsub.f32 %v456, %v487
      %v504 = vsub.f32 %v461, %v488
      %v505 = vsub.f32 %v464, %v489
      %v506 = vsub.f32 %v469, %v490
      %v507 = vsub.f32 %v472, %v491
      %508 = vst [vmem:[%s150] sm:$0xff] %v492
      %509 = vst [vmem:[%s150 + $0x10] sm:$0xff] %v493
      %510 = vst [vmem:[%s150 + $0x20] sm:$0xff] %v494
      %511 = vst [vmem:[%s150 + $0x30] sm:$0xff] %v495
      %512 = vst [vmem:[%s150 + $0x40] sm:$0xff] %v496
      %513 = vst [vmem:[%s150 + $0x50] sm:$0xff] %v497
      %514 = vst [vmem:[%s150 + $0x60] sm:$0xff] %v498
      %515 = vst [vmem:[%s150 + $0x70] sm:$0xff] %v499
      %516 = vst [vmem:[%s150 + $0x80] sm:$0xff] %v500
      %517 = vst [vmem:[%s150 + $0x90] sm:$0xff] %v501
      %518 = vst [vmem:[%s150 + $0xa0] sm:$0xff] %v502
      %519 = vst [vmem:[%s150 + $0xb0] sm:$0xff] %v503
      %520 = vst [vmem:[%s150 + $0xc0] sm:$0xff] %v504
      %521 = vst [vmem:[%s150 + $0xd0] sm:$0xff] %v505
      %522 = vst [vmem:[%s150 + $0xe0] sm:$0xff] %v506
      %523 = vst [vmem:[%s150 + $0xf0] sm:$0xff] %v507
      %v524 = vlaneseq
      %v525 = vand.u32 %v524, 127
      %vm526 = vcmp.le.s32.totalorder %v525, 1
      %v527 = vsel %vm526, %v204, 0.0
      %v528 = vsel %vm526, %v207, 0.0
      %v529 = vsel %vm526, %v210, 0.0
      %v530 = vsel %vm526, %v213, 0.0
      %v531 = vsel %vm526, %v216, 0.0
      %v532 = vsel %vm526, %v219, 0.0
      %v533 = vsel %vm526, %v222, 0.0
      %v534 = vsel %vm526, %v225, 0.0
      %v535 = vsel %vm526, %v228, 0.0
      %v536 = vsel %vm526, %v231, 0.0
      %v537 = vsel %vm526, %v234, 0.0
      %v538 = vsel %vm526, %v237, 0.0
      %v539 = vsel %vm526, %v240, 0.0
      %v540 = vsel %vm526, %v243, 0.0
      %v541 = vsel %vm526, %v246, 0.0
      %v542 = vsel %vm526, %v249, 0.0
      %543 = vst [vmem:[%s150 + $0x8] sm:$0xff] %v527
      %544 = vst [vmem:[%s150 + $0x18] sm:$0xff] %v528
      %545 = vst [vmem:[%s150 + $0x28] sm:$0xff] %v529
      %546 = vst [vmem:[%s150 + $0x38] sm:$0xff] %v530
      %547 = vst [vmem:[%s150 + $0x48] sm:$0xff] %v531
      %548 = vst [vmem:[%s150 + $0x58] sm:$0xff] %v532
      %549 = vst [vmem:[%s150 + $0x68] sm:$0xff] %v533
      %550 = vst [vmem:[%s150 + $0x78] sm:$0xff] %v534
      %551 = vst [vmem:[%s150 + $0x88] sm:$0xff] %v535
      %552 = vst [vmem:[%s150 + $0x98] sm:$0xff] %v536
      %553 = vst [vmem:[%s150 + $0xa8] sm:$0xff] %v537
      %554 = vst [vmem:[%s150 + $0xb8] sm:$0xff] %v538
      %555 = vst [vmem:[%s150 + $0xc8] sm:$0xff] %v539
      %556 = vst [vmem:[%s150 + $0xd8] sm:$0xff] %v540
      %557 = vst [vmem:[%s150 + $0xe8] sm:$0xff] %v541
      %558 = vst [vmem:[%s150 + $0xf8] sm:$0xff] %v542
      %s559 = smul.u32 16, %s13
      %p560 = scmp.lt.s32.totalorder %s559, 31
      %s561 = scalar_select %p560, %s559, 31
      %s562 = smul.addr %s561, 2
      %s563 = smul.addr %s562, 8
      %s564 = scalar_lea.vmem %s2, %s563
      // Predicated region
      $region29: #{local_graph_forward.4} parent=27 // pred_check
        %p565 = pneg %p78
      $region30: #{local_graph_forward.4} parent=27 // pred_check_branch
        %567 = sbr.rel (%p565) target = $region32
      $region31: #{local_graph_forward.4} parent=27 // pred_region
        %s568 = smul.u32 16, %s13
      $region32: #{local_graph_forward.4} parent=27 // pred_fallthru
        _
    $region28: #{local_graph_forward.4} parent=5 // pred_fallthru
      _
    %p569 = scmp.le.s32.totalorder 2, %s8
    // Predicated region
    $region33: #{local_graph_forward.4} parent=5 // pred_check
      %p570 = pneg %p569
    $region34: #{local_graph_forward.4} parent=5 // pred_check_branch
      %572 = sbr.rel (%p570) target = $region36
    $region35: #{local_graph_forward.4} parent=5 // pred_region
      %s573 = ssub.s32 %s8, 2
      // Predicated region
      $region37: #{local_graph_forward.4} parent=35 // pred_check
        %p574 = pneg %p84
      $region38: #{local_graph_forward.4} parent=35 // pred_check_branch
        %576 = sbr.rel (%p574) target = $region40
      $region39: #{local_graph_forward.4} parent=35 // pred_region
        %s577 = smul.u32 16, %s14
        %p578 = scmp.lt.s32.totalorder %s577, 31
        %s579 = scalar_select %p578, %s577, 31
        %s580 = smul.addr %s579, 2
        %s581 = smul.addr %s580, 8
        %s582 = scalar_lea.vmem %s2, %s581
      $region40: #{local_graph_forward.4} parent=35 // pred_fallthru
        _
    $region36: #{local_graph_forward.4} parent=5 // pred_fallthru
      _
  $region6: #{local_graph_forward.4} parent=0 // loop_footer
    %s12 = sadd.s32 1, %s8
  $region7: #{local_graph_forward.4} parent=0 // loop_footer_branch
    %7 = sbr.rel target = $region3
  $region8: #{local_graph_forward.4} parent=0 // loop_exit
    _

// kernel: local_graph_forward.5
$region0: #{local_graph_forward.5}
  #allocation0 [shape = 'u32[]', space=smem, size = 0x4, offset = 0x4, fixed_abs, tag = 'smem constant byte address 0x4 - core index']
  #allocation1 [shape = 'u32[144,128]{1,0:T(1,128)}', space=vmem, size = 0x12000, scoped, tag = 'internal scratch']
  %s0 = inlined_call_operand.vmem [shape: bf16[256,256], index: 0, kind: input, shape index: {}, may-alias: {0,5}]
  %s1 = inlined_call_operand.vmem [shape: bf16[256,256], index: 1, kind: input, shape index: {}]
  %s2 = inlined_call_operand.vmem [shape: f32[256,256], index: 2, kind: input, shape index: {}, may-alias: {2,4}]
  %s3 = inlined_call_operand.vmem [shape: f32[1,256], index: 3, kind: input, shape index: {}]
  %s4 = inlined_call_operand.vmem [shape: f32[256,256], index: 4, kind: input, shape index: {}, may-alias: {2,4}]
  %s5 = inlined_call_operand.vmem [shape: bf16[256,256], index: 5, kind: output, shape index: {0}, may-alias: {0,5}]
  %s6 = inlined_call_operand.vmem [shape: f32[256,256], index: 6, kind: output, shape index: {1}]
  %s7 = inlined_call_operand.vmem [shape: f32[256,256], index: 7, kind: output, shape index: {2}]
  %8 = xla_tuple %s5, %s6, %s7
  %s9 = sld [smem:[#allocation0]]
  $region69: #{local_graph_forward.5} parent=0
    _
  %s11 = ssub.s32 1, %s9
  %s12 = scalar_select 0, %s11, %s9
  loop: start=0, step=1, limit=4
  $region2: #{local_graph_forward.5} parent=0 // loop_pre_header
    _
  $region3: #{local_graph_forward.5} parent=0 // loop_header
    %s14 = sphi 0, %s18
    %p15 = scmp.ge.s32.totalorder %s14, 4
    %s24 = sphi 0, %s26
    %s27 = sphi 0, %s24
    %s28 = sphi 0, %s27
    %s44 = sphi 0, %s28
    %s50 = sphi 0, %s52
    %s53 = sphi 0, %s50
    %s54 = sphi 0, %s53
    %s70 = sphi 0, %s54
    %s74 = sphi 0, %s74
    %s76 = sphi 0, %s74
    %s77 = sphi 0, %s76
    %s91 = sphi 0, %s77
    %s95 = sphi 0, %s95
    %s97 = sphi 0, %s95
    %s98 = sphi 0, %s97
    %s112 = sphi 0, %s98
    %s118 = sphi 0, %s120
    %s121 = sphi 0, %s118
    %s122 = sphi 0, %s121
    %s138 = sphi 0, %s122
    %s144 = sphi 0, %s146
    %s147 = sphi 0, %s144
    %s148 = sphi 0, %s147
    %s164 = sphi 0, %s148
    %s170 = sphi 0, %s172
    %s173 = sphi 0, %s170
    %s174 = sphi 0, %s173
    %s190 = sphi 0, %s174
    %s196 = sphi 0, %s198
    %s199 = sphi 0, %s196
    %s200 = sphi 0, %s199
    %s216 = sphi 0, %s200
  $region4: #{local_graph_forward.5} parent=0 // loop_header_branch
    %17 = sbr.rel (%p15) target = $region8
  $region5: #{local_graph_forward.5} parent=0 // loop_body
    %s19 = ssub.s32 %s14, 1
    %s20 = ssub.s32 %s14, 2
    %s21 = sadd.s32 %s14, 1
    %s22 = ssub.s32 %s14, %s21
    %p23 = scmp.eq.s32.totalorder %s22, 0
    %s25 = sadd.s32 %s24, 1
    %s26 = scalar_select %p23, %s24, %s25
    %p29 = pneg %p23
    %p30 = scmp.eq.s32.totalorder %s14, 1
    %p31 = por %p29, %p30
    %p32 = scmp.ne.s32.totalorder %s24, %s27
    %p33 = scmp.eq.s32.totalorder %s14, 0
    %p34 = por %p32, %p33
    %p35 = scmp.ne.s32.totalorder %s24, %s27
    %p36 = scmp.eq.s32.totalorder %s19, 1
    %p37 = por %p35, %p36
    %p38 = scmp.ne.s32.totalorder %s27, %s28
    %p39 = scmp.eq.s32.totalorder %s19, 0
    %p40 = por %p38, %p39
    %p41 = scmp.ne.s32.totalorder %s27, %s28
    %p42 = scmp.eq.s32.totalorder %s20, 1
    %p43 = por %p41, %p42
    %p45 = scmp.ne.s32.totalorder %s28, %s44
    %p46 = scmp.eq.s32.totalorder %s20, 0
    %p47 = por %p45, %p46
    %s48 = ssub.s32 %s14, %s21
    %p49 = scmp.eq.s32.totalorder %s48, 0
    %s51 = sadd.s32 %s50, 1
    %s52 = scalar_select %p49, %s50, %s51
    %p55 = pneg %p49
    %p56 = scmp.eq.s32.totalorder %s14, 1
    %p57 = por %p55, %p56
    %p58 = scmp.ne.s32.totalorder %s50, %s53
    %p59 = scmp.eq.s32.totalorder %s14, 0
    %p60 = por %p58, %p59
    %p61 = scmp.ne.s32.totalorder %s50, %s53
    %p62 = scmp.eq.s32.totalorder %s19, 1
    %p63 = por %p61, %p62
    %p64 = scmp.ne.s32.totalorder %s53, %s54
    %p65 = scmp.eq.s32.totalorder %s19, 0
    %p66 = por %p64, %p65
    %p67 = scmp.ne.s32.totalorder %s53, %s54
    %p68 = scmp.eq.s32.totalorder %s20, 1
    %p69 = por %p67, %p68
    %p71 = scmp.ne.s32.totalorder %s54, %s70
    %p72 = scmp.eq.s32.totalorder %s20, 0
    %p73 = por %p71, %p72
    %s75 = sadd.s32 %s74, 1
    %p78 = scmp.eq.s32.totalorder %s14, 1
    %p79 = scmp.ne.s32.totalorder %s74, %s76
    %p80 = scmp.eq.s32.totalorder %s14, 0
    %p81 = por %p79, %p80
    %p82 = scmp.ne.s32.totalorder %s74, %s76
    %p83 = scmp.eq.s32.totalorder %s19, 1
    %p84 = por %p82, %p83
    %p85 = scmp.ne.s32.totalorder %s76, %s77
    %p86 = scmp.eq.s32.totalorder %s19, 0
    %p87 = por %p85, %p86
    %p88 = scmp.ne.s32.totalorder %s76, %s77
    %p89 = scmp.eq.s32.totalorder %s20, 1
    %p90 = por %p88, %p89
    %p92 = scmp.ne.s32.totalorder %s77, %s91
    %p93 = scmp.eq.s32.totalorder %s20, 0
    %p94 = por %p92, %p93
    %s96 = sadd.s32 %s95, 1
    %p99 = scmp.eq.s32.totalorder %s14, 1
    %p100 = scmp.ne.s32.totalorder %s95, %s97
    %p101 = scmp.eq.s32.totalorder %s14, 0
    %p102 = por %p100, %p101
    %p103 = scmp.ne.s32.totalorder %s95, %s97
    %p104 = scmp.eq.s32.totalorder %s19, 1
    %p105 = por %p103, %p104
    %p106 = scmp.ne.s32.totalorder %s97, %s98
    %p107 = scmp.eq.s32.totalorder %s19, 0
    %p108 = por %p106, %p107
    %p109 = scmp.ne.s32.totalorder %s97, %s98
    %p110 = scmp.eq.s32.totalorder %s20, 1
    %p111 = por %p109, %p110
    %p113 = scmp.ne.s32.totalorder %s98, %s112
    %p114 = scmp.eq.s32.totalorder %s20, 0
    %p115 = por %p113, %p114
    %s116 = ssub.s32 %s14, %s21
    %p117 = scmp.eq.s32.totalorder %s116, 0
    %s119 = sadd.s32 %s118, 1
    %s120 = scalar_select %p117, %s118, %s119
    %p123 = pneg %p117
    %p124 = scmp.eq.s32.totalorder %s14, 1
    %p125 = por %p123, %p124
    %p126 = scmp.ne.s32.totalorder %s118, %s121
    %p127 = scmp.eq.s32.totalorder %s14, 0
    %p128 = por %p126, %p127
    %p129 = scmp.ne.s32.totalorder %s118, %s121
    %p130 = scmp.eq.s32.totalorder %s19, 1
    %p131 = por %p129, %p130
    %p132 = scmp.ne.s32.totalorder %s121, %s122
    %p133 = scmp.eq.s32.totalorder %s19, 0
    %p134 = por %p132, %p133
    %p135 = scmp.ne.s32.totalorder %s121, %s122
    %p136 = scmp.eq.s32.totalorder %s20, 1
    %p137 = por %p135, %p136
    %p139 = scmp.ne.s32.totalorder %s122, %s138
    %p140 = scmp.eq.s32.totalorder %s20, 0
    %p141 = por %p139, %p140
    %s142 = ssub.s32 %s14, %s21
    %p143 = scmp.eq.s32.totalorder %s142, 0
    %s145 = sadd.s32 %s144, 1
    %s146 = scalar_select %p143, %s144, %s145
    %p149 = pneg %p143
    %p150 = scmp.eq.s32.totalorder %s14, 1
    %p151 = por %p149, %p150
    %p152 = scmp.ne.s32.totalorder %s144, %s147
    %p153 = scmp.eq.s32.totalorder %s14, 0
    %p154 = por %p152, %p153
    %p155 = scmp.ne.s32.totalorder %s144, %s147
    %p156 = scmp.eq.s32.totalorder %s19, 1
    %p157 = por %p155, %p156
    %p158 = scmp.ne.s32.totalorder %s147, %s148
    %p159 = scmp.eq.s32.totalorder %s19, 0
    %p160 = por %p158, %p159
    %p161 = scmp.ne.s32.totalorder %s147, %s148
    %p162 = scmp.eq.s32.totalorder %s20, 1
    %p163 = por %p161, %p162
    %p165 = scmp.ne.s32.totalorder %s148, %s164
    %p166 = scmp.eq.s32.totalorder %s20, 0
    %p167 = por %p165, %p166
    %s168 = ssub.s32 %s14, %s21
    %p169 = scmp.eq.s32.totalorder %s168, 0
    %s171 = sadd.s32 %s170, 1
    %s172 = scalar_select %p169, %s170, %s171
    %p175 = pneg %p169
    %p176 = scmp.eq.s32.totalorder %s14, 1
    %p177 = por %p175, %p176
    %p178 = scmp.ne.s32.totalorder %s170, %s173
    %p179 = scmp.eq.s32.totalorder %s14, 0
    %p180 = por %p178, %p179
    %p181 = scmp.ne.s32.totalorder %s170, %s173
    %p182 = scmp.eq.s32.totalorder %s19, 1
    %p183 = por %p181, %p182
    %p184 = scmp.ne.s32.totalorder %s173, %s174
    %p185 = scmp.eq.s32.totalorder %s19, 0
    %p186 = por %p184, %p185
    %p187 = scmp.ne.s32.totalorder %s173, %s174
    %p188 = scmp.eq.s32.totalorder %s20, 1
    %p189 = por %p187, %p188
    %p191 = scmp.ne.s32.totalorder %s174, %s190
    %p192 = scmp.eq.s32.totalorder %s20, 0
    %p193 = por %p191, %p192
    %s194 = ssub.s32 %s14, %s21
    %p195 = scmp.eq.s32.totalorder %s194, 0
    %s197 = sadd.s32 %s196, 1
    %s198 = scalar_select %p195, %s196, %s197
    %p201 = pneg %p195
    %p202 = scmp.eq.s32.totalorder %s14, 1
    %p203 = por %p201, %p202
    %p204 = scmp.ne.s32.totalorder %s196, %s199
    %p205 = scmp.eq.s32.totalorder %s14, 0
    %p206 = por %p204, %p205
    %p207 = scmp.ne.s32.totalorder %s196, %s199
    %p208 = scmp.eq.s32.totalorder %s19, 1
    %p209 = por %p207, %p208
    %p210 = scmp.ne.s32.totalorder %s199, %s200
    %p211 = scmp.eq.s32.totalorder %s19, 0
    %p212 = por %p210, %p211
    %p213 = scmp.ne.s32.totalorder %s199, %s200
    %p214 = scmp.eq.s32.totalorder %s20, 1
    %p215 = por %p213, %p214
    %p217 = scmp.ne.s32.totalorder %s200, %s216
    %p218 = scmp.eq.s32.totalorder %s20, 0
    %p219 = por %p217, %p218
    %p220 = scmp.le.s32.totalorder 1, %s14
    %p221 = scmp.lt.s32.totalorder %s14, 3
    %p222 = pnand %p220, %p221
    %p223 = pneg %p222
    // Predicated region
    $region9: #{local_graph_forward.5} parent=5 // pred_check
      _
    $region10: #{local_graph_forward.5} parent=5 // pred_check_branch
      %225 = sbr.rel (%p222) target = $region12
    $region11: #{local_graph_forward.5} parent=5 // pred_region
      %s226 = ssub.s32 %s14, 1
      // Predicated region
      $region13: #{local_graph_forward.5} parent=11 // pred_check
        %p227 = pneg %p87
      $region14: #{local_graph_forward.5} parent=11 // pred_check_branch
        %229 = sbr.rel (%p227) target = $region16
      $region15: #{local_graph_forward.5} parent=11 // pred_region
        _
      $region16: #{local_graph_forward.5} parent=11 // pred_fallthru
        _
      // Predicated region
      $region17: #{local_graph_forward.5} parent=11 // pred_check
        %p230 = pneg %p108
      $region18: #{local_graph_forward.5} parent=11 // pred_check_branch
        %232 = sbr.rel (%p230) target = $region20
      $region19: #{local_graph_forward.5} parent=11 // pred_region
        _
      $region20: #{local_graph_forward.5} parent=11 // pred_fallthru
        _
    $region12: #{local_graph_forward.5} parent=5 // pred_fallthru
      _
    %p233 = scmp.lt.s32.totalorder %s14, 2
    // Predicated region
    $region21: #{local_graph_forward.5} parent=5 // pred_check
      %p234 = pneg %p233
    $region22: #{local_graph_forward.5} parent=5 // pred_check_branch
      %236 = sbr.rel (%p234) target = $region24
    $region23: #{local_graph_forward.5} parent=5 // pred_region
      // Predicated region
      $region25: #{local_graph_forward.5} parent=23 // pred_check
        %p237 = pneg %p34
      $region26: #{local_graph_forward.5} parent=23 // pred_check_branch
        %239 = sbr.rel (%p237) target = $region28
      $region27: #{local_graph_forward.5} parent=23 // pred_region
        %s240 = smul.u32 16, %s14
        %p241 = scmp.lt.s32.totalorder %s240, 31
        %s242 = scalar_select %p241, %s240, 31
        %s243 = smul.addr %s242, 2
        %s244 = smul.addr %s243, 4
        %s245 = scalar_lea.vmem %s0, %s244
        %s246 = smul.u32 16, %s14
      $region28: #{local_graph_forward.5} parent=23 // pred_fallthru
        _
      // Predicated region
      $region29: #{local_graph_forward.5} parent=23 // pred_check
        %p247 = pneg %p60
      $region30: #{local_graph_forward.5} parent=23 // pred_check_branch
        %249 = sbr.rel (%p247) target = $region32
      $region31: #{local_graph_forward.5} parent=23 // pred_region
        %s250 = smul.u32 16, %s14
        %p251 = scmp.lt.s32.totalorder %s250, 31
        %s252 = scalar_select %p251, %s250, 31
        %s253 = smul.addr %s252, 2
        %s254 = smul.addr %s253, 4
        %s255 = scalar_lea.vmem %s1, %s254
        %s256 = smul.u32 16, %s14
      $region32: #{local_graph_forward.5} parent=23 // pred_fallthru
        _
      // Predicated region
      $region33: #{local_graph_forward.5} parent=23 // pred_check
        %p257 = pneg %p128
      $region34: #{local_graph_forward.5} parent=23 // pred_check_branch
        %259 = sbr.rel (%p257) target = $region36
      $region35: #{local_graph_forward.5} parent=23 // pred_region
        %s260 = smul.u32 16, %s14
        %p261 = scmp.lt.s32.totalorder %s260, 31
        %s262 = scalar_select %p261, %s260, 31
        %s263 = smul.addr %s262, 2
        %s264 = smul.addr %s263, 8
        %s265 = scalar_lea.vmem %s4, %s264
        %s266 = smul.u32 16, %s14
      $region36: #{local_graph_forward.5} parent=23 // pred_fallthru
        _
    $region24: #{local_graph_forward.5} parent=5 // pred_fallthru
      _
    %p267 = scmp.le.s32.totalorder 1, %s14
    %p268 = scmp.lt.s32.totalorder %s14, 3
    %p269 = pnand %p267, %p268
    %p270 = pneg %p269
    // Predicated region
    $region37: #{local_graph_forward.5} parent=5 // pred_check
      _
    $region38: #{local_graph_forward.5} parent=5 // pred_check_branch
      %272 = sbr.rel (%p269) target = $region40
    $region39: #{local_graph_forward.5} parent=5 // pred_region
      %s273 = ssub.s32 %s14, 1
      %s274 = smul.u32 16, %s19
      %p275 = scmp.lt.s32.totalorder %s274, 31
      %s276 = scalar_select %p275, %s274, 31
      %s277 = smul.addr %s276, 2
      %s278 = smul.addr %s277, 4
      %s279 = scalar_lea.vmem %s0, %s278
      %p280 = pneg %p40
      %p281 = pneg %p37
      %s282 = smul.u32 16, %s19
      %p283 = scmp.lt.s32.totalorder %s282, 31
      %s284 = scalar_select %p283, %s282, 31
      %s285 = smul.addr %s284, 2
      %s286 = smul.addr %s285, 4
      %s287 = scalar_lea.vmem %s1, %s286
      %p288 = pneg %p66
      %p289 = pneg %p63
      %p290 = pneg %p87
      %p291 = pneg %p84
      %p292 = pneg %p108
      %p293 = pneg %p105
      %s294 = smul.u32 16, %s19
      %p295 = scmp.lt.s32.totalorder %s294, 31
      %s296 = scalar_select %p295, %s294, 31
      %s297 = smul.addr %s296, 2
      %s298 = smul.addr %s297, 8
      %s299 = scalar_lea.vmem %s4, %s298
      %p300 = pneg %p134
      %p301 = pneg %p131
      %p302 = pneg %p160
      %p303 = pneg %p157
      %s304 = smul.u32 16, %s19
      %p305 = scmp.lt.s32.totalorder %s304, 31
      %s306 = scalar_select %p305, %s304, 31
      %s307 = smul.addr %s306, 2
      %s308 = smul.addr %s307, 4
      %s309 = scalar_lea.vmem %s5, %s308
      %p310 = pneg %p186
      %p311 = pneg %p183
      %s312 = smul.u32 16, %s19
      %p313 = scmp.lt.s32.totalorder %s312, 31
      %s314 = scalar_select %p313, %s312, 31
      %s315 = smul.addr %s314, 2
      %s316 = smul.addr %s315, 8
      %s317 = scalar_lea.vmem %s6, %s316
      %p318 = pneg %p212
      %p319 = pneg %p209
      %s320 = smul.u32 16, %s19
      %p321 = scmp.lt.s32.totalorder %s320, 31
      %s322 = scalar_select %p321, %s320, 31
      %s323 = smul.addr %s322, 2
      %s324 = smul.addr %s323, 8
      %s325 = scalar_lea.vmem %s7, %s324
      %s326 = smul.u32 16, %s19
      %p327 = scmp.lt.s32.totalorder %s326, 31
      %s328 = scalar_select %p327, %s326, 31
      %s329 = smul.addr %s328, 2
      %s330 = smul.addr %s329, 4
      %s331 = scalar_lea.vmem %s0, %s330
      %s332 = smul.u32 16, %s19
      %s333 = smul.u32 16, %s19
      %p334 = scmp.lt.s32.totalorder %s333, 31
      %s335 = scalar_select %p334, %s333, 31
      %s336 = smul.addr %s335, 2
      %s337 = smul.addr %s336, 4
      %s338 = scalar_lea.vmem %s1, %s337
      %s339 = smul.u32 16, %s19
      %s340 = smul.u32 16, %s19
      %p341 = scmp.lt.s32.totalorder %s340, 31
      %s342 = scalar_select %p341, %s340, 31
      %s343 = smul.addr %s342, 2
      %s344 = smul.addr %s343, 8
      %s345 = scalar_lea.vmem %s4, %s344
      %s346 = smul.u32 16, %s19
      %s347 = smul.u32 16, %s19
      %p348 = scmp.lt.s32.totalorder %s347, 31
      %s349 = scalar_select %p348, %s347, 31
      %s350 = smul.addr %s349, 2
      %s351 = smul.addr %s350, 4
      %s352 = scalar_lea.vmem %s5, %s351
      %s353 = smul.u32 16, %s19
      %s354 = smul.u32 16, %s19
      %p355 = scmp.lt.s32.totalorder %s354, 31
      %s356 = scalar_select %p355, %s354, 31
      %s357 = smul.addr %s356, 2
      %s358 = smul.addr %s357, 8
      %s359 = scalar_lea.vmem %s6, %s358
      %s360 = smul.u32 16, %s19
      %s361 = smul.u32 16, %s19
      %p362 = scmp.lt.s32.totalorder %s361, 31
      %s363 = scalar_select %p362, %s361, 31
      %s364 = smul.addr %s363, 2
      %s365 = smul.addr %s364, 8
      %s366 = scalar_lea.vmem %s7, %s365
      %s367 = smul.u32 16, %s19
      %s368 = smul.u32 %s19, 128
      %v369 = vld [vmem:[%s331] sm:$0xff]
      %v370 = vld [vmem:[%s331 + $0x8] sm:$0xff]
      %v371 = vld [vmem:[%s331 + $0x10] sm:$0xff]
      %v372 = vld [vmem:[%s331 + $0x18] sm:$0xff]
      %v373 = vld [vmem:[%s331 + $0x20] sm:$0xff]
      %v374 = vld [vmem:[%s331 + $0x28] sm:$0xff]
      %v375 = vld [vmem:[%s331 + $0x30] sm:$0xff]
      %v376 = vld [vmem:[%s331 + $0x38] sm:$0xff]
      %v377 = vld [vmem:[%s331 + $0x40] sm:$0xff]
      %v378 = vld [vmem:[%s331 + $0x48] sm:$0xff]
      %v379 = vld [vmem:[%s331 + $0x50] sm:$0xff]
      %v380 = vld [vmem:[%s331 + $0x58] sm:$0xff]
      %v381 = vld [vmem:[%s331 + $0x60] sm:$0xff]
      %v382 = vld [vmem:[%s331 + $0x68] sm:$0xff]
      %v383 = vld [vmem:[%s331 + $0x70] sm:$0xff]
      %v384 = vld [vmem:[%s331 + $0x78] sm:$0xff]
      %v385 = vld [vmem:[%s338] sm:$0xff]
      %v386 = vld [vmem:[%s338 + $0x8] sm:$0xff]
      %v387 = vld [vmem:[%s338 + $0x10] sm:$0xff]
      %v388 = vld [vmem:[%s338 + $0x18] sm:$0xff]
      %v389 = vld [vmem:[%s338 + $0x20] sm:$0xff]
      %v390 = vld [vmem:[%s338 + $0x28] sm:$0xff]
      %v391 = vld [vmem:[%s338 + $0x30] sm:$0xff]
      %v392 = vld [vmem:[%s338 + $0x38] sm:$0xff]
      %v393 = vld [vmem:[%s338 + $0x40] sm:$0xff]
      %v394 = vld [vmem:[%s338 + $0x48] sm:$0xff]
      %v395 = vld [vmem:[%s338 + $0x50] sm:$0xff]
      %v396 = vld [vmem:[%s338 + $0x58] sm:$0xff]
      %v397 = vld [vmem:[%s338 + $0x60] sm:$0xff]
      %v398 = vld [vmem:[%s338 + $0x68] sm:$0xff]
      %v399 = vld [vmem:[%s338 + $0x70] sm:$0xff]
      %v400 = vld [vmem:[%s338 + $0x78] sm:$0xff]
      %v401 = vmul.bf16 %v369, %v385
      %v402 = vmul.bf16 %v370, %v386
      %v403 = vmul.bf16 %v371, %v387
      %v404 = vmul.bf16 %v372, %v388
      %v405 = vmul.bf16 %v373, %v389
      %v406 = vmul.bf16 %v374, %v390
      %v407 = vmul.bf16 %v375, %v391
      %v408 = vmul.bf16 %v376, %v392
      %v409 = vmul.bf16 %v377, %v393
      %v410 = vmul.bf16 %v378, %v394
      %v411 = vmul.bf16 %v379, %v395
      %v412 = vmul.bf16 %v380, %v396
      %v413 = vmul.bf16 %v381, %v397
      %v414 = vmul.bf16 %v382, %v398
      %v415 = vmul.bf16 %v383, %v399
      %v416 = vmul.bf16 %v384, %v400
      %417 = vst [vmem:[%s352] sm:$0xff] %v401
      %418 = vst [vmem:[%s352 + $0x8] sm:$0xff] %v402
      %419 = vst [vmem:[%s352 + $0x10] sm:$0xff] %v403
      %420 = vst [vmem:[%s352 + $0x18] sm:$0xff] %v404
      %421 = vst [vmem:[%s352 + $0x20] sm:$0xff] %v405
      %422 = vst [vmem:[%s352 + $0x28] sm:$0xff] %v406
      %423 = vst [vmem:[%s352 + $0x30] sm:$0xff] %v407
      %424 = vst [vmem:[%s352 + $0x38] sm:$0xff] %v408
      %425 = vst [vmem:[%s352 + $0x40] sm:$0xff] %v409
      %426 = vst [vmem:[%s352 + $0x48] sm:$0xff] %v410
      %427 = vst [vmem:[%s352 + $0x50] sm:$0xff] %v411
      %428 = vst [vmem:[%s352 + $0x58] sm:$0xff] %v412
      %429 = vst [vmem:[%s352 + $0x60] sm:$0xff] %v413
      %430 = vst [vmem:[%s352 + $0x68] sm:$0xff] %v414
      %431 = vst [vmem:[%s352 + $0x70] sm:$0xff] %v415
      %432 = vst [vmem:[%s352 + $0x78] sm:$0xff] %v416
      %v433 = vunpack.c.l.bf16 %v401
      %v434 = vunpack.c.h.bf16 %v401
      %v435 = vunpack.c.l.bf16 %v402
      %v436 = vunpack.c.h.bf16 %v402
      %v437 = vunpack.c.l.bf16 %v403
      %v438 = vunpack.c.h.bf16 %v403
      %v439 = vunpack.c.l.bf16 %v404
      %v440 = vunpack.c.h.bf16 %v404
      %v441 = vunpack.c.l.bf16 %v405
      %v442 = vunpack.c.h.bf16 %v405
      %v443 = vunpack.c.l.bf16 %v406
      %v444 = vunpack.c.h.bf16 %v406
      %v445 = vunpack.c.l.bf16 %v407
      %v446 = vunpack.c.h.bf16 %v407
      %v447 = vunpack.c.l.bf16 %v408
      %v448 = vunpack.c.h.bf16 %v408
      %v449 = vunpack.c.l.bf16 %v409
      %v450 = vunpack.c.h.bf16 %v409
      %v451 = vunpack.c.l.bf16 %v410
      %v452 = vunpack.c.h.bf16 %v410
      %v453 = vunpack.c.l.bf16 %v411
      %v454 = vunpack.c.h.bf16 %v411
      %v455 = vunpack.c.l.bf16 %v412
      %v456 = vunpack.c.h.bf16 %v412
      %v457 = vunpack.c.l.bf16 %v413
      %v458 = vunpack.c.h.bf16 %v413
      %v459 = vunpack.c.l.bf16 %v414
      %v460 = vunpack.c.h.bf16 %v414
      %v461 = vunpack.c.l.bf16 %v415
      %v462 = vunpack.c.h.bf16 %v415
      %v463 = vunpack.c.l.bf16 %v416
      %v464 = vunpack.c.h.bf16 %v416
      %v465 = vadd.f32 %v433, %v434
      %466 = vadd.xlane.f32.xlu0 %v465
      %v467 = vpop.xlane.xlu0 %466
      %v468 = vadd.f32 %v435, %v436
      %469 = vadd.xlane.f32.xlu0 %v468
      %v470 = vpop.xlane.xlu0 %469
      %v471 = vadd.f32 %v437, %v438
      %472 = vadd.xlane.f32.xlu0 %v471
      %v473 = vpop.xlane.xlu0 %472
      %v474 = vadd.f32 %v439, %v440
      %475 = vadd.xlane.f32.xlu0 %v474
      %v476 = vpop.xlane.xlu0 %475
      %v477 = vadd.f32 %v441, %v442
      %478 = vadd.xlane.f32.xlu0 %v477
      %v479 = vpop.xlane.xlu0 %478
      %v480 = vadd.f32 %v443, %v444
      %481 = vadd.xlane.f32.xlu0 %v480
      %v482 = vpop.xlane.xlu0 %481
      %v483 = vadd.f32 %v445, %v446
      %484 = vadd.xlane.f32.xlu0 %v483
      %v485 = vpop.xlane.xlu0 %484
      %v486 = vadd.f32 %v447, %v448
      %487 = vadd.xlane.f32.xlu0 %v486
      %v488 = vpop.xlane.xlu0 %487
      %v489 = vadd.f32 %v449, %v450
      %490 = vadd.xlane.f32.xlu0 %v489
      %v491 = vpop.xlane.xlu0 %490
      %v492 = vadd.f32 %v451, %v452
      %493 = vadd.xlane.f32.xlu0 %v492
      %v494 = vpop.xlane.xlu0 %493
      %v495 = vadd.f32 %v453, %v454
      %496 = vadd.xlane.f32.xlu0 %v495
      %v497 = vpop.xlane.xlu0 %496
      %v498 = vadd.f32 %v455, %v456
      %499 = vadd.xlane.f32.xlu0 %v498
      %v500 = vpop.xlane.xlu0 %499
      %v501 = vadd.f32 %v457, %v458
      %502 = vadd.xlane.f32.xlu0 %v501
      %v503 = vpop.xlane.xlu0 %502
      %v504 = vadd.f32 %v459, %v460
      %505 = vadd.xlane.f32.xlu0 %v504
      %v506 = vpop.xlane.xlu0 %505
      %v507 = vadd.f32 %v461, %v462
      %508 = vadd.xlane.f32.xlu0 %v507
      %v509 = vpop.xlane.xlu0 %508
      %v510 = vadd.f32 %v463, %v464
      %511 = vadd.xlane.f32.xlu0 %v510
      %v512 = vpop.xlane.xlu0 %511
      %s513 = sshra.s32 %s368, 3
      %s514 = sand.u32 %s368, 7
      %s515 = smul.u32 %s513, 2
      %s516 = smul.addr %s515, 8
      %s517 = scalar_lea.vmem %s2, %s516
      %v518 = vld [vmem:[%s517] sm:$0xff]
      %v519 = vld [vmem:[%s517 + $0x8] sm:$0xff]
      %v520 = vld [vmem:[%s517 + $0x10] sm:$0xff]
      %v521 = vld [vmem:[%s517 + $0x18] sm:$0xff]
      %v522 = vld [vmem:[%s517 + $0x20] sm:$0xff]
      %v523 = vld [vmem:[%s517 + $0x28] sm:$0xff]
      %v524 = vld [vmem:[%s517 + $0x30] sm:$0xff]
      %v525 = vld [vmem:[%s517 + $0x38] sm:$0xff]
      %v526 = vld [vmem:[%s517 + $0x40] sm:$0xff]
      %v527 = vld [vmem:[%s517 + $0x48] sm:$0xff]
      %v528 = vld [vmem:[%s517 + $0x50] sm:$0xff]
      %v529 = vld [vmem:[%s517 + $0x58] sm:$0xff]
      %v530 = vld [vmem:[%s517 + $0x60] sm:$0xff]
      %v531 = vld [vmem:[%s517 + $0x68] sm:$0xff]
      %v532 = vld [vmem:[%s517 + $0x70] sm:$0xff]
      %v533 = vld [vmem:[%s517 + $0x78] sm:$0xff]
      %v534 = vld [vmem:[%s517 + $0x80] sm:$0xff]
      %v535 = vld [vmem:[%s517 + $0x88] sm:$0xff]
      %v536 = vld [vmem:[%s517 + $0x90] sm:$0xff]
      %v537 = vld [vmem:[%s517 + $0x98] sm:$0xff]
      %v538 = vld [vmem:[%s517 + $0xa0] sm:$0xff]
      %v539 = vld [vmem:[%s517 + $0xa8] sm:$0xff]
      %v540 = vld [vmem:[%s517 + $0xb0] sm:$0xff]
      %v541 = vld [vmem:[%s517 + $0xb8] sm:$0xff]
      %v542 = vld [vmem:[%s517 + $0xc0] sm:$0xff]
      %v543 = vld [vmem:[%s517 + $0xc8] sm:$0xff]
      %v544 = vld [vmem:[%s517 + $0xd0] sm:$0xff]
      %v545 = vld [vmem:[%s517 + $0xd8] sm:$0xff]
      %v546 = vld [vmem:[%s517 + $0xe0] sm:$0xff]
      %v547 = vld [vmem:[%s517 + $0xe8] sm:$0xff]
      %v548 = vld [vmem:[%s517 + $0xf0] sm:$0xff]
      %v549 = vld [vmem:[%s517 + $0xf8] sm:$0xff]
      %v550 = vld [vmem:[%s2] sm:$0xff]
      %v551 = vld [vmem:[%s2 + $0x8] sm:$0xff]
      %v552 = vld [vmem:[%s2 + $0x10] sm:$0xff]
      %v553 = vld [vmem:[%s2 + $0x18] sm:$0xff]
      %v554 = vld [vmem:[%s2 + $0x20] sm:$0xff]
      %v555 = vld [vmem:[%s2 + $0x28] sm:$0xff]
      %v556 = vld [vmem:[%s2 + $0x30] sm:$0xff]
      %v557 = vld [vmem:[%s2 + $0x38] sm:$0xff]
      %v558 = vld [vmem:[%s2 + $0x40] sm:$0xff]
      %v559 = vld [vmem:[%s2 + $0x48] sm:$0xff]
      %v560 = vld [vmem:[%s2 + $0x50] sm:$0xff]
      %v561 = vld [vmem:[%s2 + $0x58] sm:$0xff]
      %v562 = vld [vmem:[%s2 + $0x60] sm:$0xff]
      %v563 = vld [vmem:[%s2 + $0x68] sm:$0xff]
      %v564 = vld [vmem:[%s2 + $0x70] sm:$0xff]
      %v565 = vld [vmem:[%s2 + $0x78] sm:$0xff]
      %v566 = vld [vmem:[%s2 + $0x80] sm:$0xff]
      %v567 = vld [vmem:[%s2 + $0x88] sm:$0xff]
      %v568 = vld [vmem:[%s2 + $0x90] sm:$0xff]
      %v569 = vld [vmem:[%s2 + $0x98] sm:$0xff]
      %v570 = vld [vmem:[%s2 + $0xa0] sm:$0xff]
      %v571 = vld [vmem:[%s2 + $0xa8] sm:$0xff]
      %v572 = vld [vmem:[%s2 + $0xb0] sm:$0xff]
      %v573 = vld [vmem:[%s2 + $0xb8] sm:$0xff]
      %v574 = vld [vmem:[%s2 + $0xc0] sm:$0xff]
      %v575 = vld [vmem:[%s2 + $0xc8] sm:$0xff]
      %v576 = vld [vmem:[%s2 + $0xd0] sm:$0xff]
      %v577 = vld [vmem:[%s2 + $0xd8] sm:$0xff]
      %v578 = vld [vmem:[%s2 + $0xe0] sm:$0xff]
      %v579 = vld [vmem:[%s2 + $0xe8] sm:$0xff]
      %v580 = vld [vmem:[%s2 + $0xf0] sm:$0xff]
      %v581 = vld [vmem:[%s2 + $0xf8] sm:$0xff]
      %v582 = vld [vmem:[%s2 + $0x100] sm:$0xff]
      %v583 = vld [vmem:[%s2 + $0x108] sm:$0xff]
      %v584 = vld [vmem:[%s2 + $0x110] sm:$0xff]
      %v585 = vld [vmem:[%s2 + $0x118] sm:$0xff]
      %v586 = vld [vmem:[%s2 + $0x120] sm:$0xff]
      %v587 = vld [vmem:[%s2 + $0x128] sm:$0xff]
      %v588 = vld [vmem:[%s2 + $0x130] sm:$0xff]
      %v589 = vld [vmem:[%s2 + $0x138] sm:$0xff]
      %v590 = vld [vmem:[%s2 + $0x140] sm:$0xff]
      %v591 = vld [vmem:[%s2 + $0x148] sm:$0xff]
      %v592 = vld [vmem:[%s2 + $0x150] sm:$0xff]
      %v593 = vld [vmem:[%s2 + $0x158] sm:$0xff]
      %v594 = vld [vmem:[%s2 + $0x160] sm:$0xff]
      %v595 = vld [vmem:[%s2 + $0x168] sm:$0xff]
      %v596 = vld [vmem:[%s2 + $0x170] sm:$0xff]
      %v597 = vld [vmem:[%s2 + $0x178] sm:$0xff]
      %v598 = vld [vmem:[%s2 + $0x180] sm:$0xff]
      %v599 = vld [vmem:[%s2 + $0x188] sm:$0xff]
      %v600 = vld [vmem:[%s2 + $0x190] sm:$0xff]
      %v601 = vld [vmem:[%s2 + $0x198] sm:$0xff]
      %v602 = vld [vmem:[%s2 + $0x1a0] sm:$0xff]
      %v603 = vld [vmem:[%s2 + $0x1a8] sm:$0xff]
      %v604 = vld [vmem:[%s2 + $0x1b0] sm:$0xff]
      %v605 = vld [vmem:[%s2 + $0x1b8] sm:$0xff]
      %v606 = vld [vmem:[%s2 + $0x1c0] sm:$0xff]
      %v607 = vld [vmem:[%s2 + $0x1c8] sm:$0xff]
      %v608 = vld [vmem:[%s2 + $0x1d0] sm:$0xff]
      %v609 = vld [vmem:[%s2 + $0x1d8] sm:$0xff]
      %v610 = vld [vmem:[%s2 + $0x1e0] sm:$0xff]
      %v611 = vld [vmem:[%s2 + $0x1e8] sm:$0xff]
      %v612 = vld [vmem:[%s2 + $0x1f0] sm:$0xff]
      %v613 = vld [vmem:[%s2 + $0x1f8] sm:$0xff]
      %v614 = vpack.c.bf16 %v552, %v550
      %v615 = vpack.c.bf16 %v553, %v551
      %v616 = vpack.c.bf16 %v556, %v554
      %v617 = vpack.c.bf16 %v557, %v555
      %v618 = vpack.c.bf16 %v560, %v558
      %v619 = vpack.c.bf16 %v561, %v559
      %v620 = vpack.c.bf16 %v564, %v562
      %v621 = vpack.c.bf16 %v565, %v563
      %v622 = vpack.c.bf16 %v568, %v566
      %v623 = vpack.c.bf16 %v569, %v567
      %v624 = vpack.c.bf16 %v572, %v570
      %v625 = vpack.c.bf16 %v573, %v571
      %v626 = vpack.c.bf16 %v576, %v574
      %v627 = vpack.c.bf16 %v577, %v575
      %v628 = vpack.c.bf16 %v580, %v578
      %v629 = vpack.c.bf16 %v581, %v579
      %v630 = vpack.c.bf16 %v584, %v582
      %v631 = vpack.c.bf16 %v585, %v583
      %v632 = vpack.c.bf16 %v588, %v586
      %v633 = vpack.c.bf16 %v589, %v587
      %v634 = vpack.c.bf16 %v592, %v590
      %v635 = vpack.c.bf16 %v593, %v591
      %v636 = vpack.c.bf16 %v596, %v594
      %v637 = vpack.c.bf16 %v597, %v595
      %v638 = vpack.c.bf16 %v600, %v598
      %v639 = vpack.c.bf16 %v601, %v599
      %v640 = vpack.c.bf16 %v604, %v602
      %v641 = vpack.c.bf16 %v605, %v603
      %v642 = vpack.c.bf16 %v608, %v606
      %v643 = vpack.c.bf16 %v609, %v607
      %v644 = vpack.c.bf16 %v612, %v610
      %v645 = vpack.c.bf16 %v613, %v611
      %v662 = vunpack.c.l.b16 %v401
      %v663 = vunpack.c.h.b16 %v401
      %v664 = vunpack.c.l.b16 %v402
      %v665 = vunpack.c.h.b16 %v402
      %v666 = vunpack.c.l.b16 %v403
      %v667 = vunpack.c.h.b16 %v403
      %v668 = vunpack.c.l.b16 %v404
      %v669 = vunpack.c.h.b16 %v404
      %v670 = vunpack.c.l.b16 %v405
      %v671 = vunpack.c.h.b16 %v405
      %v672 = vunpack.c.l.b16 %v406
      %v673 = vunpack.c.h.b16 %v406
      %v674 = vunpack.c.l.b16 %v407
      %v675 = vunpack.c.h.b16 %v407
      %v676 = vunpack.c.l.b16 %v408
      %v677 = vunpack.c.h.b16 %v408
      %v678 = vunpack.c.l.b16 %v409
      %v679 = vunpack.c.h.b16 %v409
      %v680 = vunpack.c.l.b16 %v410
      %v681 = vunpack.c.h.b16 %v410
      %v682 = vunpack.c.l.b16 %v411
      %v683 = vunpack.c.h.b16 %v411
      %v684 = vunpack.c.l.b16 %v412
      %v685 = vunpack.c.h.b16 %v412
      %v686 = vunpack.c.l.b16 %v413
      %v687 = vunpack.c.h.b16 %v413
      %v688 = vunpack.c.l.b16 %v414
      %v689 = vunpack.c.h.b16 %v414
      %v690 = vunpack.c.l.b16 %v415
      %v691 = vunpack.c.h.b16 %v415
      %v692 = vunpack.c.l.b16 %v416
      %v693 = vunpack.c.h.b16 %v416
      %v694 = vpack.c.b16 %v664, %v662
      %v695 = vpack.c.b16 %v665, %v663
      %v696 = vpack.c.b16 %v668, %v666
      %v697 = vpack.c.b16 %v669, %v667
      %v698 = vpack.c.b16 %v672, %v670
      %v699 = vpack.c.b16 %v673, %v671
      %v700 = vpack.c.b16 %v676, %v674
      %v701 = vpack.c.b16 %v677, %v675
      %v702 = vpack.c.b16 %v680, %v678
      %v703 = vpack.c.b16 %v681, %v679
      %v704 = vpack.c.b16 %v684, %v682
      %v705 = vpack.c.b16 %v685, %v683
      %v706 = vpack.c.b16 %v688, %v686
      %v707 = vpack.c.b16 %v689, %v687
      %v708 = vpack.c.b16 %v692, %v690
      %v709 = vpack.c.b16 %v693, %v691
      %726 = vmatprep.subr.bf16.mxu0 %v629
      %727 = vmatpush1.bf16.msra.mxu0 %v628
      %728 = vmatprep.subr.bf16.mxu0 %v627
      %729 = vmatpush1.bf16.msra.mxu0 %v626
      %730 = vmatprep.subr.bf16.mxu0 %v625
      %731 = vmatpush1.bf16.msra.mxu0 %v624
      %732 = vmatprep.subr.bf16.mxu0 %v623
      %733 = vmatpush1.bf16.msra.mxu0 %v622
      %734 = vmatprep.subr.bf16.mxu0 %v621
      %735 = vmatpush1.bf16.msra.mxu0 %v620
      %736 = vmatprep.subr.bf16.mxu0 %v619
      %737 = vmatpush1.bf16.msra.mxu0 %v618
      %738 = vmatprep.subr.bf16.mxu0 %v617
      %739 = vmatpush1.bf16.msra.mxu0 %v616
      %740 = vmatprep.subr.bf16.mxu0 %v615
      %741 = vmatpush1.bf16.msra.mxu0 %v614
      %742 = vmatprep.subr.bf16.mxu0 %v645
      %743 = vmatpush2.bf16.msra.mxu0 %v644
      %744 = vmatprep.subr.bf16.mxu0 %v643
      %745 = vmatpush2.bf16.msra.mxu0 %v642
      %746 = vmatprep.subr.bf16.mxu0 %v641
      %747 = vmatpush2.bf16.msra.mxu0 %v640
      %748 = vmatprep.subr.bf16.mxu0 %v639
      %749 = vmatpush2.bf16.msra.mxu0 %v638
      %750 = vmatprep.subr.bf16.mxu0 %v637
      %751 = vmatpush2.bf16.msra.mxu0 %v636
      %752 = vmatprep.subr.bf16.mxu0 %v635
      %753 = vmatpush2.bf16.msra.mxu0 %v634
      %754 = vmatprep.subr.bf16.mxu0 %v633
      %755 = vmatpush2.bf16.msra.mxu0 %v632
      %756 = vmatprep.subr.bf16.mxu0 %v631
      %757 = vmatpush2.bf16.msra.mxu0 %v630
      %758 = vmatprep.mubr.bf16.mxu0 %v695
      %759 = vmatmul.mubr.bf16.gmra.mxu0 %v694
      %v760 = vpop.f32.mrf.mxu0
      %v761 = vadd.f32 0.0, %v760
      %v762 = vpop.f32.mrf.mxu0
      %v763 = vadd.f32 0.0, %v762
      %v764 = vpop.f32.mrf.mxu0
      %v765 = vadd.f32 0.0, %v764
      %v766 = vpop.f32.mrf.mxu0
      %v767 = vadd.f32 0.0, %v766
      %768 = vmatprep.mubr.bf16.mxu0 %v697
      %769 = vmatmul.mubr.bf16.gmra.mxu0 %v696
      %v770 = vpop.f32.mrf.mxu0
      %v771 = vadd.f32 0.0, %v770
      %v772 = vpop.f32.mrf.mxu0
      %v773 = vadd.f32 0.0, %v772
      %v774 = vpop.f32.mrf.mxu0
      %v775 = vadd.f32 0.0, %v774
      %v776 = vpop.f32.mrf.mxu0
      %v777 = vadd.f32 0.0, %v776
      %778 = vmatprep.mubr.bf16.mxu0 %v699
      %779 = vmatmul.mubr.bf16.gmra.mxu0 %v698
      %v780 = vpop.f32.mrf.mxu0
      %v781 = vadd.f32 0.0, %v780
      %v782 = vpop.f32.mrf.mxu0
      %v783 = vadd.f32 0.0, %v782
      %v784 = vpop.f32.mrf.mxu0
      %v785 = vadd.f32 0.0, %v784
      %v786 = vpop.f32.mrf.mxu0
      %v787 = vadd.f32 0.0, %v786
      %788 = vmatprep.mubr.bf16.mxu0 %v701
      %789 = vmatmul.mubr.bf16.gmra.mxu0 %v700
      %v790 = vpop.f32.mrf.mxu0
      %v791 = vadd.f32 0.0, %v790
      %v792 = vpop.f32.mrf.mxu0
      %v793 = vadd.f32 0.0, %v792
      %v794 = vpop.f32.mrf.mxu0
      %v795 = vadd.f32 0.0, %v794
      %v796 = vpop.f32.mrf.mxu0
      %v797 = vadd.f32 0.0, %v796
      %798 = vmatprep.mubr.bf16.mxu0 %v703
      %799 = vmatmul.mubr.bf16.gmra.mxu0 %v702
      %v800 = vpop.f32.mrf.mxu0
      %v801 = vadd.f32 0.0, %v800
      %v802 = vpop.f32.mrf.mxu0
      %v803 = vadd.f32 0.0, %v802
      %v804 = vpop.f32.mrf.mxu0
      %v805 = vadd.f32 0.0, %v804
      %v806 = vpop.f32.mrf.mxu0
      %v807 = vadd.f32 0.0, %v806
      %808 = vmatprep.mubr.bf16.mxu0 %v705
      %809 = vmatmul.mubr.bf16.gmra.mxu0 %v704
      %v810 = vpop.f32.mrf.mxu0
      %v811 = vadd.f32 0.0, %v810
      %v812 = vpop.f32.mrf.mxu0
      %v813 = vadd.f32 0.0, %v812
      %v814 = vpop.f32.mrf.mxu0
      %v815 = vadd.f32 0.0, %v814
      %v816 = vpop.f32.mrf.mxu0
      %v817 = vadd.f32 0.0, %v816
      %818 = vmatprep.mubr.bf16.mxu0 %v707
      %819 = vmatmul.mubr.bf16.gmra.mxu0 %v706
      %v820 = vpop.f32.mrf.mxu0
      %v821 = vadd.f32 0.0, %v820
      %v822 = vpop.f32.mrf.mxu0
      %v823 = vadd.f32 0.0, %v822
      %v824 = vpop.f32.mrf.mxu0
      %v825 = vadd.f32 0.0, %v824
      %v826 = vpop.f32.mrf.mxu0
      %v827 = vadd.f32 0.0, %v826
      %828 = vmatprep.mubr.bf16.mxu0 %v709
      %829 = vmatmul.mubr.bf16.gmra.mxu0 %v708
      %v830 = vpop.f32.mrf.mxu0
      %v831 = vadd.f32 0.0, %v830
      %v832 = vpop.f32.mrf.mxu0
      %v833 = vadd.f32 0.0, %v832
      %v834 = vpop.f32.mrf.mxu0
      %v835 = vadd.f32 0.0, %v834
      %v836 = vpop.f32.mrf.mxu0
      %v837 = vadd.f32 0.0, %v836
      %838 = vdwg.mxu0
      %v839 = vld [vmem:[%s3] sm:$0x3]
      %v841 = vlaneseq
      %v842 = vshrl.u32 %v841, 7
      %v843 = vsub.s32 0, %v842
      %v844 = vrot.slane %v839, %v843
      %v845 = vlaneseq
      %v846 = vshrl.u32 %v845, 7
      %v847 = vsub.s32 1, %v846
      %v848 = vrot.slane %v839, %v847
      %v851 = vmul.f32 %v433, %v844
      %v852 = vmul.f32 %v434, %v848
      %v853 = vmul.f32 %v435, %v844
      %v854 = vmul.f32 %v436, %v848
      %v855 = vmul.f32 %v437, %v844
      %v856 = vmul.f32 %v438, %v848
      %v857 = vmul.f32 %v439, %v844
      %v858 = vmul.f32 %v440, %v848
      %v859 = vmul.f32 %v441, %v844
      %v860 = vmul.f32 %v442, %v848
      %v861 = vmul.f32 %v443, %v844
      %v862 = vmul.f32 %v444, %v848
      %v863 = vmul.f32 %v445, %v844
      %v864 = vmul.f32 %v446, %v848
      %v865 = vmul.f32 %v447, %v844
      %v866 = vmul.f32 %v448, %v848
      %v867 = vmul.f32 %v449, %v844
      %v868 = vmul.f32 %v450, %v848
      %v869 = vmul.f32 %v451, %v844
      %v870 = vmul.f32 %v452, %v848
      %v871 = vmul.f32 %v453, %v844
      %v872 = vmul.f32 %v454, %v848
      %v873 = vmul.f32 %v455, %v844
      %v874 = vmul.f32 %v456, %v848
      %v875 = vmul.f32 %v457, %v844
      %v876 = vmul.f32 %v458, %v848
      %v877 = vmul.f32 %v459, %v844
      %v878 = vmul.f32 %v460, %v848
      %v879 = vmul.f32 %v461, %v844
      %v880 = vmul.f32 %v462, %v848
      %v881 = vmul.f32 %v463, %v844
      %v882 = vmul.f32 %v464, %v848
      %v883 = vadd.f32 %v851, %v852
      %884 = vadd.xlane.f32.xlu0 %v883
      %v885 = vpop.xlane.xlu0 %884
      %v886 = vadd.f32 %v853, %v854
      %887 = vadd.xlane.f32.xlu0 %v886
      %v888 = vpop.xlane.xlu0 %887
      %v889 = vadd.f32 %v855, %v856
      %890 = vadd.xlane.f32.xlu0 %v889
      %v891 = vpop.xlane.xlu0 %890
      %v892 = vadd.f32 %v857, %v858
      %893 = vadd.xlane.f32.xlu0 %v892
      %v894 = vpop.xlane.xlu0 %893
      %v895 = vadd.f32 %v859, %v860
      %896 = vadd.xlane.f32.xlu0 %v895
      %v897 = vpop.xlane.xlu0 %896
      %v898 = vadd.f32 %v861, %v862
      %899 = vadd.xlane.f32.xlu0 %v898
      %v900 = vpop.xlane.xlu0 %899
      %v901 = vadd.f32 %v863, %v864
      %902 = vadd.xlane.f32.xlu0 %v901
      %v903 = vpop.xlane.xlu0 %902
      %v904 = vadd.f32 %v865, %v866
      %905 = vadd.xlane.f32.xlu0 %v904
      %v906 = vpop.xlane.xlu0 %905
      %v907 = vadd.f32 %v867, %v868
      %908 = vadd.xlane.f32.xlu0 %v907
      %v909 = vpop.xlane.xlu0 %908
      %v910 = vadd.f32 %v869, %v870
      %911 = vadd.xlane.f32.xlu0 %v910
      %v912 = vpop.xlane.xlu0 %911
      %v913 = vadd.f32 %v871, %v872
      %914 = vadd.xlane.f32.xlu0 %v913
      %v915 = vpop.xlane.xlu0 %914
      %v916 = vadd.f32 %v873, %v874
      %917 = vadd.xlane.f32.xlu0 %v916
      %v918 = vpop.xlane.xlu0 %917
      %v919 = vadd.f32 %v875, %v876
      %920 = vadd.xlane.f32.xlu0 %v919
      %v921 = vpop.xlane.xlu0 %920
      %v922 = vadd.f32 %v877, %v878
      %923 = vadd.xlane.f32.xlu0 %v922
      %v924 = vpop.xlane.xlu0 %923
      %v925 = vadd.f32 %v879, %v880
      %926 = vadd.xlane.f32.xlu0 %v925
      %v927 = vpop.xlane.xlu0 %926
      %v928 = vadd.f32 %v881, %v882
      %929 = vadd.xlane.f32.xlu0 %v928
      %v930 = vpop.xlane.xlu0 %929
      %v931 = vsub.f32 %v885, %v519
      %v932 = vsub.f32 %v888, %v521
      %v933 = vsub.f32 %v891, %v523
      %v934 = vsub.f32 %v894, %v525
      %v935 = vsub.f32 %v897, %v527
      %v936 = vsub.f32 %v900, %v529
      %v937 = vsub.f32 %v903, %v531
      %v938 = vsub.f32 %v906, %v533
      %v939 = vsub.f32 %v909, %v535
      %v940 = vsub.f32 %v912, %v537
      %v941 = vsub.f32 %v915, %v539
      %v942 = vsub.f32 %v918, %v541
      %v943 = vsub.f32 %v921, %v543
      %v944 = vsub.f32 %v924, %v545
      %v945 = vsub.f32 %v927, %v547
      %v946 = vsub.f32 %v930, %v549
      %963 = vrot.lane.b32.xlu0 %v519, 127
      %v964 = vpop.permute.xlu0 %963
      %965 = vrot.lane.b32.xlu0 %v521, 127
      %v966 = vpop.permute.xlu0 %965
      %967 = vrot.lane.b32.xlu0 %v523, 127
      %v968 = vpop.permute.xlu0 %967
      %969 = vrot.lane.b32.xlu0 %v525, 127
      %v970 = vpop.permute.xlu0 %969
      %971 = vrot.lane.b32.xlu0 %v527, 127
      %v972 = vpop.permute.xlu0 %971
      %973 = vrot.lane.b32.xlu0 %v529, 127
      %v974 = vpop.permute.xlu0 %973
      %975 = vrot.lane.b32.xlu0 %v531, 127
      %v976 = vpop.permute.xlu0 %975
      %977 = vrot.lane.b32.xlu0 %v533, 127
      %v978 = vpop.permute.xlu0 %977
      %979 = vrot.lane.b32.xlu0 %v535, 127
      %v980 = vpop.permute.xlu0 %979
      %981 = vrot.lane.b32.xlu0 %v537, 127
      %v982 = vpop.permute.xlu0 %981
      %983 = vrot.lane.b32.xlu0 %v539, 127
      %v984 = vpop.permute.xlu0 %983
      %985 = vrot.lane.b32.xlu0 %v541, 127
      %v986 = vpop.permute.xlu0 %985
      %987 = vrot.lane.b32.xlu0 %v543, 127
      %v988 = vpop.permute.xlu0 %987
      %989 = vrot.lane.b32.xlu0 %v545, 127
      %v990 = vpop.permute.xlu0 %989
      %991 = vrot.lane.b32.xlu0 %v547, 127
      %v992 = vpop.permute.xlu0 %991
      %993 = vrot.lane.b32.xlu0 %v549, 127
      %v994 = vpop.permute.xlu0 %993
      %v1011 = vsub.f32 %v931, %v964
      %v1012 = vsub.f32 %v932, %v966
      %v1013 = vsub.f32 %v933, %v968
      %v1014 = vsub.f32 %v934, %v970
      %v1015 = vsub.f32 %v935, %v972
      %v1016 = vsub.f32 %v936, %v974
      %v1017 = vsub.f32 %v937, %v976
      %v1018 = vsub.f32 %v938, %v978
      %v1019 = vsub.f32 %v939, %v980
      %v1020 = vsub.f32 %v940, %v982
      %v1021 = vsub.f32 %v941, %v984
      %v1022 = vsub.f32 %v942, %v986
      %v1023 = vsub.f32 %v943, %v988
      %v1024 = vsub.f32 %v944, %v990
      %v1025 = vsub.f32 %v945, %v992
      %v1026 = vsub.f32 %v946, %v994
      %v1027 = vlaneseq
      %v1028 = vand.u32 %v1027, 127
      %v1029 = vadd.s32 %v1028, 128
      %vm1030 = vcmp.lt.s32.totalorder %v1028, 128
      %vm1031 = vcmp.lt.s32.totalorder %v1029, 128
      %v1032 = vsel %vm1030, %v518, 0.0
      %v1033 = vsel %vm1031, %v519, 0.0
      %v1034 = vsel %vm1030, %v520, 0.0
      %v1035 = vsel %vm1031, %v521, 0.0
      %v1036 = vsel %vm1030, %v522, 0.0
      %v1037 = vsel %vm1031, %v523, 0.0
      %v1038 = vsel %vm1030, %v524, 0.0
      %v1039 = vsel %vm1031, %v525, 0.0
      %v1040 = vsel %vm1030, %v526, 0.0
      %v1041 = vsel %vm1031, %v527, 0.0
      %v1042 = vsel %vm1030, %v528, 0.0
      %v1043 = vsel %vm1031, %v529, 0.0
      %v1044 = vsel %vm1030, %v530, 0.0
      %v1045 = vsel %vm1031, %v531, 0.0
      %v1046 = vsel %vm1030, %v532, 0.0
      %v1047 = vsel %vm1031, %v533, 0.0
      %v1048 = vsel %vm1030, %v534, 0.0
      %v1049 = vsel %vm1031, %v535, 0.0
      %v1050 = vsel %vm1030, %v536, 0.0
      %v1051 = vsel %vm1031, %v537, 0.0
      %v1052 = vsel %vm1030, %v538, 0.0
      %v1053 = vsel %vm1031, %v539, 0.0
      %v1054 = vsel %vm1030, %v540, 0.0
      %v1055 = vsel %vm1031, %v541, 0.0
      %v1056 = vsel %vm1030, %v542, 0.0
      %v1057 = vsel %vm1031, %v543, 0.0
      %v1058 = vsel %vm1030, %v544, 0.0
      %v1059 = vsel %vm1031, %v545, 0.0
      %v1060 = vsel %vm1030, %v546, 0.0
      %v1061 = vsel %vm1031, %v547, 0.0
      %v1062 = vsel %vm1030, %v548, 0.0
      %v1063 = vsel %vm1031, %v549, 0.0
      %v1064 = vsub.f32 %v761, %v518
      %v1065 = vsub.f32 %v763, %v519
      %v1066 = vsub.f32 %v765, %v520
      %v1067 = vsub.f32 %v767, %v521
      %v1068 = vsub.f32 %v771, %v522
      %v1069 = vsub.f32 %v773, %v523
      %v1070 = vsub.f32 %v775, %v524
      %v1071 = vsub.f32 %v777, %v525
      %v1072 = vsub.f32 %v781, %v526
      %v1073 = vsub.f32 %v783, %v527
      %v1074 = vsub.f32 %v785, %v528
      %v1075 = vsub.f32 %v787, %v529
      %v1076 = vsub.f32 %v791, %v530
      %v1077 = vsub.f32 %v793, %v531
      %v1078 = vsub.f32 %v795, %v532
      %v1079 = vsub.f32 %v797, %v533
      %v1080 = vsub.f32 %v801, %v534
      %v1081 = vsub.f32 %v803, %v535
      %v1082 = vsub.f32 %v805, %v536
      %v1083 = vsub.f32 %v807, %v537
      %v1084 = vsub.f32 %v811, %v538
      %v1085 = vsub.f32 %v813, %v539
      %v1086 = vsub.f32 %v815, %v540
      %v1087 = vsub.f32 %v817, %v541
      %v1088 = vsub.f32 %v821, %v542
      %v1089 = vsub.f32 %v823, %v543
      %v1090 = vsub.f32 %v825, %v544
      %v1091 = vsub.f32 %v827, %v545
      %v1092 = vsub.f32 %v831, %v546
      %v1093 = vsub.f32 %v833, %v547
      %v1094 = vsub.f32 %v835, %v548
      %v1095 = vsub.f32 %v837, %v549
      %1096 = vset.pattern.permute.xlu0 1
      %1097 = vperm.xlu0 %1096, %v519
      %v1098 = vpop.permute.xlu0 %1097
      %1100 = vset.pattern.permute.xlu0 1
      %1101 = vperm.xlu0 %1100, %v521
      %v1102 = vpop.permute.xlu0 %1101
      %1104 = vset.pattern.permute.xlu0 1
      %1105 = vperm.xlu0 %1104, %v523
      %v1106 = vpop.permute.xlu0 %1105
      %1108 = vset.pattern.permute.xlu0 1
      %1109 = vperm.xlu0 %1108, %v525
      %v1110 = vpop.permute.xlu0 %1109
      %1112 = vset.pattern.permute.xlu0 1
      %1113 = vperm.xlu0 %1112, %v527
      %v1114 = vpop.permute.xlu0 %1113
      %1116 = vset.pattern.permute.xlu0 1
      %1117 = vperm.xlu0 %1116, %v529
      %v1118 = vpop.permute.xlu0 %1117
      %1120 = vset.pattern.permute.xlu0 1
      %1121 = vperm.xlu0 %1120, %v531
      %v1122 = vpop.permute.xlu0 %1121
      %1124 = vset.pattern.permute.xlu0 1
      %1125 = vperm.xlu0 %1124, %v533
      %v1126 = vpop.permute.xlu0 %1125
      %1128 = vset.pattern.permute.xlu0 1
      %1129 = vperm.xlu0 %1128, %v535
      %v1130 = vpop.permute.xlu0 %1129
      %1132 = vset.pattern.permute.xlu0 1
      %1133 = vperm.xlu0 %1132, %v537
      %v1134 = vpop.permute.xlu0 %1133
      %1136 = vset.pattern.permute.xlu0 1
      %1137 = vperm.xlu0 %1136, %v539
      %v1138 = vpop.permute.xlu0 %1137
      %1140 = vset.pattern.permute.xlu0 1
      %1141 = vperm.xlu0 %1140, %v541
      %v1142 = vpop.permute.xlu0 %1141
      %1144 = vset.pattern.permute.xlu0 1
      %1145 = vperm.xlu0 %1144, %v543
      %v1146 = vpop.permute.xlu0 %1145
      %1148 = vset.pattern.permute.xlu0 1
      %1149 = vperm.xlu0 %1148, %v545
      %v1150 = vpop.permute.xlu0 %1149
      %1152 = vset.pattern.permute.xlu0 1
      %1153 = vperm.xlu0 %1152, %v547
      %v1154 = vpop.permute.xlu0 %1153
      %1156 = vset.pattern.permute.xlu0 1
      %1157 = vperm.xlu0 %1156, %v549
      %v1158 = vpop.permute.xlu0 %1157
      %v1160 = vmul.f32 %v1098, %v1032
      %v1161 = vmul.f32 %v1098, %v1033
      %v1162 = vmul.f32 %v1102, %v1034
      %v1163 = vmul.f32 %v1102, %v1035
      %v1164 = vmul.f32 %v1106, %v1036
      %v1165 = vmul.f32 %v1106, %v1037
      %v1166 = vmul.f32 %v1110, %v1038
      %v1167 = vmul.f32 %v1110, %v1039
      %v1168 = vmul.f32 %v1114, %v1040
      %v1169 = vmul.f32 %v1114, %v1041
      %v1170 = vmul.f32 %v1118, %v1042
      %v1171 = vmul.f32 %v1118, %v1043
      %v1172 = vmul.f32 %v1122, %v1044
      %v1173 = vmul.f32 %v1122, %v1045
      %v1174 = vmul.f32 %v1126, %v1046
      %v1175 = vmul.f32 %v1126, %v1047
      %v1176 = vmul.f32 %v1130, %v1048
      %v1177 = vmul.f32 %v1130, %v1049
      %v1178 = vmul.f32 %v1134, %v1050
      %v1179 = vmul.f32 %v1134, %v1051
      %v1180 = vmul.f32 %v1138, %v1052
      %v1181 = vmul.f32 %v1138, %v1053
      %v1182 = vmul.f32 %v1142, %v1054
      %v1183 = vmul.f32 %v1142, %v1055
      %v1184 = vmul.f32 %v1146, %v1056
      %v1185 = vmul.f32 %v1146, %v1057
      %v1186 = vmul.f32 %v1150, %v1058
      %v1187 = vmul.f32 %v1150, %v1059
      %v1188 = vmul.f32 %v1154, %v1060
      %v1189 = vmul.f32 %v1154, %v1061
      %v1190 = vmul.f32 %v1158, %v1062
      %v1191 = vmul.f32 %v1158, %v1063
      %v1192 = vsub.f32 %v1064, %v1160
      %v1193 = vsub.f32 %v1065, %v1161
      %v1194 = vsub.f32 %v1066, %v1162
      %v1195 = vsub.f32 %v1067, %v1163
      %v1196 = vsub.f32 %v1068, %v1164
      %v1197 = vsub.f32 %v1069, %v1165
      %v1198 = vsub.f32 %v1070, %v1166
      %v1199 = vsub.f32 %v1071, %v1167
      %v1200 = vsub.f32 %v1072, %v1168
      %v1201 = vsub.f32 %v1073, %v1169
      %v1202 = vsub.f32 %v1074, %v1170
      %v1203 = vsub.f32 %v1075, %v1171
      %v1204 = vsub.f32 %v1076, %v1172
      %v1205 = vsub.f32 %v1077, %v1173
      %v1206 = vsub.f32 %v1078, %v1174
      %v1207 = vsub.f32 %v1079, %v1175
      %v1208 = vsub.f32 %v1080, %v1176
      %v1209 = vsub.f32 %v1081, %v1177
      %v1210 = vsub.f32 %v1082, %v1178
      %v1211 = vsub.f32 %v1083, %v1179
      %v1212 = vsub.f32 %v1084, %v1180
      %v1213 = vsub.f32 %v1085, %v1181
      %v1214 = vsub.f32 %v1086, %v1182
      %v1215 = vsub.f32 %v1087, %v1183
      %v1216 = vsub.f32 %v1088, %v1184
      %v1217 = vsub.f32 %v1089, %v1185
      %v1218 = vsub.f32 %v1090, %v1186
      %v1219 = vsub.f32 %v1091, %v1187
      %v1220 = vsub.f32 %v1092, %v1188
      %v1221 = vsub.f32 %v1093, %v1189
      %v1222 = vsub.f32 %v1094, %v1190
      %v1223 = vsub.f32 %v1095, %v1191
      %vm1224 = vcmp.eq.s32.totalorder %v1028, 128
      %vm1225 = vcmp.eq.s32.totalorder %v1029, 128
      %1227 = vset.pattern.permute.xlu0 0
      %1228 = vperm.xlu0 %1227, %v1011
      %v1229 = vpop.permute.xlu0 %1228
      %1232 = vset.pattern.permute.xlu0 0
      %1233 = vperm.xlu0 %1232, %v1012
      %v1234 = vpop.permute.xlu0 %1233
      %1237 = vset.pattern.permute.xlu0 0
      %1238 = vperm.xlu0 %1237, %v1013
      %v1239 = vpop.permute.xlu0 %1238
      %1242 = vset.pattern.permute.xlu0 0
      %1243 = vperm.xlu0 %1242, %v1014
      %v1244 = vpop.permute.xlu0 %1243
      %1247 = vset.pattern.permute.xlu0 0
      %1248 = vperm.xlu0 %1247, %v1015
      %v1249 = vpop.permute.xlu0 %1248
      %1252 = vset.pattern.permute.xlu0 0
      %1253 = vperm.xlu0 %1252, %v1016
      %v1254 = vpop.permute.xlu0 %1253
      %1257 = vset.pattern.permute.xlu0 0
      %1258 = vperm.xlu0 %1257, %v1017
      %v1259 = vpop.permute.xlu0 %1258
      %1262 = vset.pattern.permute.xlu0 0
      %1263 = vperm.xlu0 %1262, %v1018
      %v1264 = vpop.permute.xlu0 %1263
      %1267 = vset.pattern.permute.xlu0 0
      %1268 = vperm.xlu0 %1267, %v1019
      %v1269 = vpop.permute.xlu0 %1268
      %1272 = vset.pattern.permute.xlu0 0
      %1273 = vperm.xlu0 %1272, %v1020
      %v1274 = vpop.permute.xlu0 %1273
      %1277 = vset.pattern.permute.xlu0 0
      %1278 = vperm.xlu0 %1277, %v1021
      %v1279 = vpop.permute.xlu0 %1278
      %1282 = vset.pattern.permute.xlu0 0
      %1283 = vperm.xlu0 %1282, %v1022
      %v1284 = vpop.permute.xlu0 %1283
      %1287 = vset.pattern.permute.xlu0 0
      %1288 = vperm.xlu0 %1287, %v1023
      %v1289 = vpop.permute.xlu0 %1288
      %1292 = vset.pattern.permute.xlu0 0
      %1293 = vperm.xlu0 %1292, %v1024
      %v1294 = vpop.permute.xlu0 %1293
      %1297 = vset.pattern.permute.xlu0 0
      %1298 = vperm.xlu0 %1297, %v1025
      %v1299 = vpop.permute.xlu0 %1298
      %1302 = vset.pattern.permute.xlu0 0
      %1303 = vperm.xlu0 %1302, %v1026
      %v1304 = vpop.permute.xlu0 %1303
      %v1306 = vsel %vm1224, %v1229, %v1192
      %v1307 = vsel %vm1225, %v1229, %v1193
      %v1308 = vsel %vm1224, %v1234, %v1194
      %v1309 = vsel %vm1225, %v1234, %v1195
      %v1310 = vsel %vm1224, %v1239, %v1196
      %v1311 = vsel %vm1225, %v1239, %v1197
      %v1312 = vsel %vm1224, %v1244, %v1198
      %v1313 = vsel %vm1225, %v1244, %v1199
      %v1314 = vsel %vm1224, %v1249, %v1200
      %v1315 = vsel %vm1225, %v1249, %v1201
      %v1316 = vsel %vm1224, %v1254, %v1202
      %v1317 = vsel %vm1225, %v1254, %v1203
      %v1318 = vsel %vm1224, %v1259, %v1204
      %v1319 = vsel %vm1225, %v1259, %v1205
      %v1320 = vsel %vm1224, %v1264, %v1206
      %v1321 = vsel %vm1225, %v1264, %v1207
      %v1322 = vsel %vm1224, %v1269, %v1208
      %v1323 = vsel %vm1225, %v1269, %v1209
      %v1324 = vsel %vm1224, %v1274, %v1210
      %v1325 = vsel %vm1225, %v1274, %v1211
      %v1326 = vsel %vm1224, %v1279, %v1212
      %v1327 = vsel %vm1225, %v1279, %v1213
      %v1328 = vsel %vm1224, %v1284, %v1214
      %v1329 = vsel %vm1225, %v1284, %v1215
      %v1330 = vsel %vm1224, %v1289, %v1216
      %v1331 = vsel %vm1225, %v1289, %v1217
      %v1332 = vsel %vm1224, %v1294, %v1218
      %v1333 = vsel %vm1225, %v1294, %v1219
      %v1334 = vsel %vm1224, %v1299, %v1220
      %v1335 = vsel %vm1225, %v1299, %v1221
      %v1336 = vsel %vm1224, %v1304, %v1222
      %v1337 = vsel %vm1225, %v1304, %v1223
      %vm1338 = vcmp.eq.s32.totalorder %v1028, 129
      %vm1339 = vcmp.eq.s32.totalorder %v1029, 129
      %v1340 = vsel %vm1338, %v467, %v1306
      %v1341 = vsel %vm1339, %v467, %v1307
      %v1342 = vsel %vm1338, %v470, %v1308
      %v1343 = vsel %vm1339, %v470, %v1309
      %v1344 = vsel %vm1338, %v473, %v1310
      %v1345 = vsel %vm1339, %v473, %v1311
      %v1346 = vsel %vm1338, %v476, %v1312
      %v1347 = vsel %vm1339, %v476, %v1313
      %v1348 = vsel %vm1338, %v479, %v1314
      %v1349 = vsel %vm1339, %v479, %v1315
      %v1350 = vsel %vm1338, %v482, %v1316
      %v1351 = vsel %vm1339, %v482, %v1317
      %v1352 = vsel %vm1338, %v485, %v1318
      %v1353 = vsel %vm1339, %v485, %v1319
      %v1354 = vsel %vm1338, %v488, %v1320
      %v1355 = vsel %vm1339, %v488, %v1321
      %v1356 = vsel %vm1338, %v491, %v1322
      %v1357 = vsel %vm1339, %v491, %v1323
      %v1358 = vsel %vm1338, %v494, %v1324
      %v1359 = vsel %vm1339, %v494, %v1325
      %v1360 = vsel %vm1338, %v497, %v1326
      %v1361 = vsel %vm1339, %v497, %v1327
      %v1362 = vsel %vm1338, %v500, %v1328
      %v1363 = vsel %vm1339, %v500, %v1329
      %v1364 = vsel %vm1338, %v503, %v1330
      %v1365 = vsel %vm1339, %v503, %v1331
      %v1366 = vsel %vm1338, %v506, %v1332
      %v1367 = vsel %vm1339, %v506, %v1333
      %v1368 = vsel %vm1338, %v509, %v1334
      %v1369 = vsel %vm1339, %v509, %v1335
      %v1370 = vsel %vm1338, %v512, %v1336
      %v1371 = vsel %vm1339, %v512, %v1337
      %1372 = vst [vmem:[%s359] sm:$0xff] %v1340
      %1373 = vst [vmem:[%s359 + $0x8] sm:$0xff] %v1341
      %1374 = vst [vmem:[%s359 + $0x10] sm:$0xff] %v1342
      %1375 = vst [vmem:[%s359 + $0x18] sm:$0xff] %v1343
      %1376 = vst [vmem:[%s359 + $0x20] sm:$0xff] %v1344
      %1377 = vst [vmem:[%s359 + $0x28] sm:$0xff] %v1345
      %1378 = vst [vmem:[%s359 + $0x30] sm:$0xff] %v1346
      %1379 = vst [vmem:[%s359 + $0x38] sm:$0xff] %v1347
      %1380 = vst [vmem:[%s359 + $0x40] sm:$0xff] %v1348
      %1381 = vst [vmem:[%s359 + $0x48] sm:$0xff] %v1349
      %1382 = vst [vmem:[%s359 + $0x50] sm:$0xff] %v1350
      %1383 = vst [vmem:[%s359 + $0x58] sm:$0xff] %v1351
      %1384 = vst [vmem:[%s359 + $0x60] sm:$0xff] %v1352
      %1385 = vst [vmem:[%s359 + $0x68] sm:$0xff] %v1353
      %1386 = vst [vmem:[%s359 + $0x70] sm:$0xff] %v1354
      %1387 = vst [vmem:[%s359 + $0x78] sm:$0xff] %v1355
      %1388 = vst [vmem:[%s359 + $0x80] sm:$0xff] %v1356
      %1389 = vst [vmem:[%s359 + $0x88] sm:$0xff] %v1357
      %1390 = vst [vmem:[%s359 + $0x90] sm:$0xff] %v1358
      %1391 = vst [vmem:[%s359 + $0x98] sm:$0xff] %v1359
      %1392 = vst [vmem:[%s359 + $0xa0] sm:$0xff] %v1360
      %1393 = vst [vmem:[%s359 + $0xa8] sm:$0xff] %v1361
      %1394 = vst [vmem:[%s359 + $0xb0] sm:$0xff] %v1362
      %1395 = vst [vmem:[%s359 + $0xb8] sm:$0xff] %v1363
      %1396 = vst [vmem:[%s359 + $0xc0] sm:$0xff] %v1364
      %1397 = vst [vmem:[%s359 + $0xc8] sm:$0xff] %v1365
      %1398 = vst [vmem:[%s359 + $0xd0] sm:$0xff] %v1366
      %1399 = vst [vmem:[%s359 + $0xd8] sm:$0xff] %v1367
      %1400 = vst [vmem:[%s359 + $0xe0] sm:$0xff] %v1368
      %1401 = vst [vmem:[%s359 + $0xe8] sm:$0xff] %v1369
      %1402 = vst [vmem:[%s359 + $0xf0] sm:$0xff] %v1370
      %1403 = vst [vmem:[%s359 + $0xf8] sm:$0xff] %v1371
      %v1404 = vld [vmem:[%s345] sm:$0xff]
      %v1405 = vld [vmem:[%s345 + $0x8] sm:$0xff]
      %v1406 = vld [vmem:[%s345 + $0x10] sm:$0xff]
      %v1407 = vld [vmem:[%s345 + $0x18] sm:$0xff]
      %v1408 = vld [vmem:[%s345 + $0x20] sm:$0xff]
      %v1409 = vld [vmem:[%s345 + $0x28] sm:$0xff]
      %v1410 = vld [vmem:[%s345 + $0x30] sm:$0xff]
      %v1411 = vld [vmem:[%s345 + $0x38] sm:$0xff]
      %v1412 = vld [vmem:[%s345 + $0x40] sm:$0xff]
      %v1413 = vld [vmem:[%s345 + $0x48] sm:$0xff]
      %v1414 = vld [vmem:[%s345 + $0x50] sm:$0xff]
      %v1415 = vld [vmem:[%s345 + $0x58] sm:$0xff]
      %v1416 = vld [vmem:[%s345 + $0x60] sm:$0xff]
      %v1417 = vld [vmem:[%s345 + $0x68] sm:$0xff]
      %v1418 = vld [vmem:[%s345 + $0x70] sm:$0xff]
      %v1419 = vld [vmem:[%s345 + $0x78] sm:$0xff]
      %v1420 = vld [vmem:[%s345 + $0x80] sm:$0xff]
      %v1421 = vld [vmem:[%s345 + $0x88] sm:$0xff]
      %v1422 = vld [vmem:[%s345 + $0x90] sm:$0xff]
      %v1423 = vld [vmem:[%s345 + $0x98] sm:$0xff]
      %v1424 = vld [vmem:[%s345 + $0xa0] sm:$0xff]
      %v1425 = vld [vmem:[%s345 + $0xa8] sm:$0xff]
      %v1426 = vld [vmem:[%s345 + $0xb0] sm:$0xff]
      %v1427 = vld [vmem:[%s345 + $0xb8] sm:$0xff]
      %v1428 = vld [vmem:[%s345 + $0xc0] sm:$0xff]
      %v1429 = vld [vmem:[%s345 + $0xc8] sm:$0xff]
      %v1430 = vld [vmem:[%s345 + $0xd0] sm:$0xff]
      %v1431 = vld [vmem:[%s345 + $0xd8] sm:$0xff]
      %v1432 = vld [vmem:[%s345 + $0xe0] sm:$0xff]
      %v1433 = vld [vmem:[%s345 + $0xe8] sm:$0xff]
      %v1434 = vld [vmem:[%s345 + $0xf0] sm:$0xff]
      %v1435 = vld [vmem:[%s345 + $0xf8] sm:$0xff]
      %v1436 = vadd.f32 %v1404, %v1340
      %v1437 = vadd.f32 %v1405, %v1341
      %v1438 = vadd.f32 %v1406, %v1342
      %v1439 = vadd.f32 %v1407, %v1343
      %v1440 = vadd.f32 %v1408, %v1344
      %v1441 = vadd.f32 %v1409, %v1345
      %v1442 = vadd.f32 %v1410, %v1346
      %v1443 = vadd.f32 %v1411, %v1347
      %v1444 = vadd.f32 %v1412, %v1348
      %v1445 = vadd.f32 %v1413, %v1349
      %v1446 = vadd.f32 %v1414, %v1350
      %v1447 = vadd.f32 %v1415, %v1351
      %v1448 = vadd.f32 %v1416, %v1352
      %v1449 = vadd.f32 %v1417, %v1353
      %v1450 = vadd.f32 %v1418, %v1354
      %v1451 = vadd.f32 %v1419, %v1355
      %v1452 = vadd.f32 %v1420, %v1356
      %v1453 = vadd.f32 %v1421, %v1357
      %v1454 = vadd.f32 %v1422, %v1358
      %v1455 = vadd.f32 %v1423, %v1359
      %v1456 = vadd.f32 %v1424, %v1360
      %v1457 = vadd.f32 %v1425, %v1361
      %v1458 = vadd.f32 %v1426, %v1362
      %v1459 = vadd.f32 %v1427, %v1363
      %v1460 = vadd.f32 %v1428, %v1364
      %v1461 = vadd.f32 %v1429, %v1365
      %v1462 = vadd.f32 %v1430, %v1366
      %v1463 = vadd.f32 %v1431, %v1367
      %v1464 = vadd.f32 %v1432, %v1368
      %v1465 = vadd.f32 %v1433, %v1369
      %v1466 = vadd.f32 %v1434, %v1370
      %v1467 = vadd.f32 %v1435, %v1371
      %1468 = vst [vmem:[%s366] sm:$0xff] %v1436
      %1469 = vst [vmem:[%s366 + $0x8] sm:$0xff] %v1437
      %1470 = vst [vmem:[%s366 + $0x10] sm:$0xff] %v1438
      %1471 = vst [vmem:[%s366 + $0x18] sm:$0xff] %v1439
      %1472 = vst [vmem:[%s366 + $0x20] sm:$0xff] %v1440
      %1473 = vst [vmem:[%s366 + $0x28] sm:$0xff] %v1441
      %1474 = vst [vmem:[%s366 + $0x30] sm:$0xff] %v1442
      %1475 = vst [vmem:[%s366 + $0x38] sm:$0xff] %v1443
      %1476 = vst [vmem:[%s366 + $0x40] sm:$0xff] %v1444
      %1477 = vst [vmem:[%s366 + $0x48] sm:$0xff] %v1445
      %1478 = vst [vmem:[%s366 + $0x50] sm:$0xff] %v1446
      %1479 = vst [vmem:[%s366 + $0x58] sm:$0xff] %v1447
      %1480 = vst [vmem:[%s366 + $0x60] sm:$0xff] %v1448
      %1481 = vst [vmem:[%s366 + $0x68] sm:$0xff] %v1449
      %1482 = vst [vmem:[%s366 + $0x70] sm:$0xff] %v1450
      %1483 = vst [vmem:[%s366 + $0x78] sm:$0xff] %v1451
      %1484 = vst [vmem:[%s366 + $0x80] sm:$0xff] %v1452
      %1485 = vst [vmem:[%s366 + $0x88] sm:$0xff] %v1453
      %1486 = vst [vmem:[%s366 + $0x90] sm:$0xff] %v1454
      %1487 = vst [vmem:[%s366 + $0x98] sm:$0xff] %v1455
      %1488 = vst [vmem:[%s366 + $0xa0] sm:$0xff] %v1456
      %1489 = vst [vmem:[%s366 + $0xa8] sm:$0xff] %v1457
      %1490 = vst [vmem:[%s366 + $0xb0] sm:$0xff] %v1458
      %1491 = vst [vmem:[%s366 + $0xb8] sm:$0xff] %v1459
      %1492 = vst [vmem:[%s366 + $0xc0] sm:$0xff] %v1460
      %1493 = vst [vmem:[%s366 + $0xc8] sm:$0xff] %v1461
      %1494 = vst [vmem:[%s366 + $0xd0] sm:$0xff] %v1462
      %1495 = vst [vmem:[%s366 + $0xd8] sm:$0xff] %v1463
      %1496 = vst [vmem:[%s366 + $0xe0] sm:$0xff] %v1464
      %1497 = vst [vmem:[%s366 + $0xe8] sm:$0xff] %v1465
      %1498 = vst [vmem:[%s366 + $0xf0] sm:$0xff] %v1466
      %1499 = vst [vmem:[%s366 + $0xf8] sm:$0xff] %v1467
      %s1500 = smul.u32 16, %s19
      %p1501 = scmp.lt.s32.totalorder %s1500, 31
      %s1502 = scalar_select %p1501, %s1500, 31
      %s1503 = smul.addr %s1502, 2
      %s1504 = smul.addr %s1503, 4
      %s1505 = scalar_lea.vmem %s5, %s1504
      %s1506 = smul.u32 16, %s19
      %p1507 = scmp.lt.s32.totalorder %s1506, 31
      %s1508 = scalar_select %p1507, %s1506, 31
      %s1509 = smul.addr %s1508, 2
      %s1510 = smul.addr %s1509, 8
      %s1511 = scalar_lea.vmem %s6, %s1510
      %s1512 = smul.u32 16, %s19
      %p1513 = scmp.lt.s32.totalorder %s1512, 31
      %s1514 = scalar_select %p1513, %s1512, 31
      %s1515 = smul.addr %s1514, 2
      %s1516 = smul.addr %s1515, 8
      %s1517 = scalar_lea.vmem %s7, %s1516
      // Predicated region
      $region41: #{local_graph_forward.5} parent=39 // pred_check
        %p1518 = pneg %p157
      $region42: #{local_graph_forward.5} parent=39 // pred_check_branch
        %1520 = sbr.rel (%p1518) target = $region44
      $region43: #{local_graph_forward.5} parent=39 // pred_region
        %s1521 = smul.u32 16, %s19
      $region44: #{local_graph_forward.5} parent=39 // pred_fallthru
        _
      // Predicated region
      $region45: #{local_graph_forward.5} parent=39 // pred_check
        %p1522 = pneg %p183
      $region46: #{local_graph_forward.5} parent=39 // pred_check_branch
        %1524 = sbr.rel (%p1522) target = $region48
      $region47: #{local_graph_forward.5} parent=39 // pred_region
        %s1525 = smul.u32 16, %s19
      $region48: #{local_graph_forward.5} parent=39 // pred_fallthru
        _
      // Predicated region
      $region49: #{local_graph_forward.5} parent=39 // pred_check
        %p1526 = pneg %p209
      $region50: #{local_graph_forward.5} parent=39 // pred_check_branch
        %1528 = sbr.rel (%p1526) target = $region52
      $region51: #{local_graph_forward.5} parent=39 // pred_region
        %s1529 = smul.u32 16, %s19
      $region52: #{local_graph_forward.5} parent=39 // pred_fallthru
        _
    $region40: #{local_graph_forward.5} parent=5 // pred_fallthru
      _
    %p1530 = scmp.le.s32.totalorder 2, %s14
    // Predicated region
    $region53: #{local_graph_forward.5} parent=5 // pred_check
      %p1531 = pneg %p1530
    $region54: #{local_graph_forward.5} parent=5 // pred_check_branch
      %1533 = sbr.rel (%p1531) target = $region56
    $region55: #{local_graph_forward.5} parent=5 // pred_region
      %s1534 = ssub.s32 %s14, 2
      // Predicated region
      $region57: #{local_graph_forward.5} parent=55 // pred_check
        %p1535 = pneg %p163
      $region58: #{local_graph_forward.5} parent=55 // pred_check_branch
        %1537 = sbr.rel (%p1535) target = $region60
      $region59: #{local_graph_forward.5} parent=55 // pred_region
        %s1538 = smul.u32 16, %s20
        %p1539 = scmp.lt.s32.totalorder %s1538, 31
        %s1540 = scalar_select %p1539, %s1538, 31
        %s1541 = smul.addr %s1540, 2
        %s1542 = smul.addr %s1541, 4
        %s1543 = scalar_lea.vmem %s5, %s1542
      $region60: #{local_graph_forward.5} parent=55 // pred_fallthru
        _
      // Predicated region
      $region61: #{local_graph_forward.5} parent=55 // pred_check
        %p1544 = pneg %p189
      $region62: #{local_graph_forward.5} parent=55 // pred_check_branch
        %1546 = sbr.rel (%p1544) target = $region64
      $region63: #{local_graph_forward.5} parent=55 // pred_region
        %s1547 = smul.u32 16, %s20
        %p1548 = scmp.lt.s32.totalorder %s1547, 31
        %s1549 = scalar_select %p1548, %s1547, 31
        %s1550 = smul.addr %s1549, 2
        %s1551 = smul.addr %s1550, 8
        %s1552 = scalar_lea.vmem %s6, %s1551
      $region64: #{local_graph_forward.5} parent=55 // pred_fallthru
        _
      // Predicated region
      $region65: #{local_graph_forward.5} parent=55 // pred_check
        %p1553 = pneg %p215
      $region66: #{local_graph_forward.5} parent=55 // pred_check_branch
        %1555 = sbr.rel (%p1553) target = $region68
      $region67: #{local_graph_forward.5} parent=55 // pred_region
        %s1556 = smul.u32 16, %s20
        %p1557 = scmp.lt.s32.totalorder %s1556, 31
        %s1558 = scalar_select %p1557, %s1556, 31
        %s1559 = smul.addr %s1558, 2
        %s1560 = smul.addr %s1559, 8
        %s1561 = scalar_lea.vmem %s7, %s1560
      $region68: #{local_graph_forward.5} parent=55 // pred_fallthru
        _
    $region56: #{local_graph_forward.5} parent=5 // pred_fallthru
      _
  $region6: #{local_graph_forward.5} parent=0 // loop_footer
    %s18 = sadd.s32 1, %s14
  $region7: #{local_graph_forward.5} parent=0 // loop_footer_branch
    %13 = sbr.rel target = $region3
  $region8: #{local_graph_forward.5} parent=0 // loop_exit
    _

// kernel: local_graph_forward.6
$region0: #{local_graph_forward.6}
  #allocation0 [shape = 'u32[]', space=smem, size = 0x4, offset = 0x4, fixed_abs, tag = 'smem constant byte address 0x4 - core index']
  #allocation1 [shape = 'u32[144,128]{1,0:T(1,128)}', space=vmem, size = 0x12000, scoped, tag = 'internal scratch']
  %s0 = inlined_call_operand.vmem [shape: bf16[256,256], index: 0, kind: input, shape index: {}, may-alias: {0,5}]
  %s1 = inlined_call_operand.vmem [shape: bf16[256,256], index: 1, kind: input, shape index: {}]
  %s2 = inlined_call_operand.vmem [shape: f32[256,256], index: 2, kind: input, shape index: {}]
  %s3 = inlined_call_operand.vmem [shape: f32[1,256], index: 3, kind: input, shape index: {}]
  %s4 = inlined_call_operand.vmem [shape: f32[256,256], index: 4, kind: input, shape index: {}]
  %s5 = inlined_call_operand.vmem [shape: bf16[256,256], index: 5, kind: output, shape index: {0}, may-alias: {0,5}]
  %s6 = inlined_call_operand.hbm [shape: f32[256,256], index: 6, kind: output, shape index: {1}]
  %s7 = inlined_call_operand.vmem [shape: f32[256,256], index: 7, kind: output, shape index: {2}]
  %8 = xla_tuple %s5, %s6, %s7
  %s9 = sld [smem:[#allocation0]]
  $region69: #{local_graph_forward.6} parent=0
    _
  %s11 = ssub.s32 1, %s9
  %s12 = scalar_select 0, %s11, %s9
  $region1: #{local_graph_forward.6} parent=0
    #allocation2 [shape = 'u8[262144]{0}', space=vmem, size = 0x40000, scoped, tag = 'output window, operand 1']
    #allocation3 [shape = 's32[2]{0}', space=sflag, size = 0x8, scoped, tag = 'scoped memory for local_graph_forward.6']
    %13 = vsyncpa [#allocation3], 0
    %s14 = scalar_lea.sflag [#allocation3], 1
    %15 = vsyncpa %s14, 0
    loop: start=0, step=1, limit=4
    $region2: #{local_graph_forward.6} parent=1 // loop_pre_header
      _
    $region3: #{local_graph_forward.6} parent=1 // loop_header
      %s17 = sphi 0, %s21
      %p18 = scmp.ge.s32.totalorder %s17, 4
      %s27 = sphi 0, %s29
      %s30 = sphi 0, %s27
      %s31 = sphi 0, %s30
      %s47 = sphi 0, %s31
      %s53 = sphi 0, %s55
      %s56 = sphi 0, %s53
      %s57 = sphi 0, %s56
      %s73 = sphi 0, %s57
      %s77 = sphi 0, %s77
      %s79 = sphi 0, %s77
      %s80 = sphi 0, %s79
      %s94 = sphi 0, %s80
      %s98 = sphi 0, %s98
      %s100 = sphi 0, %s98
      %s101 = sphi 0, %s100
      %s115 = sphi 0, %s101
      %s121 = sphi 0, %s123
      %s124 = sphi 0, %s121
      %s125 = sphi 0, %s124
      %s141 = sphi 0, %s125
      %s147 = sphi 0, %s149
      %s150 = sphi 0, %s147
      %s151 = sphi 0, %s150
      %s167 = sphi 0, %s151
      %s173 = sphi 0, %s175
      %s176 = sphi 0, %s173
      %s177 = sphi 0, %s176
      %s193 = sphi 0, %s177
      %s199 = sphi 0, %s201
      %s202 = sphi 0, %s199
      %s203 = sphi 0, %s202
      %s219 = sphi 0, %s203
    $region4: #{local_graph_forward.6} parent=1 // loop_header_branch
      %20 = sbr.rel (%p18) target = $region8
    $region5: #{local_graph_forward.6} parent=1 // loop_body
      %s22 = ssub.s32 %s17, 1
      %s23 = ssub.s32 %s17, 2
      %s24 = sadd.s32 %s17, 1
      %s25 = ssub.s32 %s17, %s24
      %p26 = scmp.eq.s32.totalorder %s25, 0
      %s28 = sadd.s32 %s27, 1
      %s29 = scalar_select %p26, %s27, %s28
      %p32 = pneg %p26
      %p33 = scmp.eq.s32.totalorder %s17, 1
      %p34 = por %p32, %p33
      %p35 = scmp.ne.s32.totalorder %s27, %s30
      %p36 = scmp.eq.s32.totalorder %s17, 0
      %p37 = por %p35, %p36
      %p38 = scmp.ne.s32.totalorder %s27, %s30
      %p39 = scmp.eq.s32.totalorder %s22, 1
      %p40 = por %p38, %p39
      %p41 = scmp.ne.s32.totalorder %s30, %s31
      %p42 = scmp.eq.s32.totalorder %s22, 0
      %p43 = por %p41, %p42
      %p44 = scmp.ne.s32.totalorder %s30, %s31
      %p45 = scmp.eq.s32.totalorder %s23, 1
      %p46 = por %p44, %p45
      %p48 = scmp.ne.s32.totalorder %s31, %s47
      %p49 = scmp.eq.s32.totalorder %s23, 0
      %p50 = por %p48, %p49
      %s51 = ssub.s32 %s17, %s24
      %p52 = scmp.eq.s32.totalorder %s51, 0
      %s54 = sadd.s32 %s53, 1
      %s55 = scalar_select %p52, %s53, %s54
      %p58 = pneg %p52
      %p59 = scmp.eq.s32.totalorder %s17, 1
      %p60 = por %p58, %p59
      %p61 = scmp.ne.s32.totalorder %s53, %s56
      %p62 = scmp.eq.s32.totalorder %s17, 0
      %p63 = por %p61, %p62
      %p64 = scmp.ne.s32.totalorder %s53, %s56
      %p65 = scmp.eq.s32.totalorder %s22, 1
      %p66 = por %p64, %p65
      %p67 = scmp.ne.s32.totalorder %s56, %s57
      %p68 = scmp.eq.s32.totalorder %s22, 0
      %p69 = por %p67, %p68
      %p70 = scmp.ne.s32.totalorder %s56, %s57
      %p71 = scmp.eq.s32.totalorder %s23, 1
      %p72 = por %p70, %p71
      %p74 = scmp.ne.s32.totalorder %s57, %s73
      %p75 = scmp.eq.s32.totalorder %s23, 0
      %p76 = por %p74, %p75
      %s78 = sadd.s32 %s77, 1
      %p81 = scmp.eq.s32.totalorder %s17, 1
      %p82 = scmp.ne.s32.totalorder %s77, %s79
      %p83 = scmp.eq.s32.totalorder %s17, 0
      %p84 = por %p82, %p83
      %p85 = scmp.ne.s32.totalorder %s77, %s79
      %p86 = scmp.eq.s32.totalorder %s22, 1
      %p87 = por %p85, %p86
      %p88 = scmp.ne.s32.totalorder %s79, %s80
      %p89 = scmp.eq.s32.totalorder %s22, 0
      %p90 = por %p88, %p89
      %p91 = scmp.ne.s32.totalorder %s79, %s80
      %p92 = scmp.eq.s32.totalorder %s23, 1
      %p93 = por %p91, %p92
      %p95 = scmp.ne.s32.totalorder %s80, %s94
      %p96 = scmp.eq.s32.totalorder %s23, 0
      %p97 = por %p95, %p96
      %s99 = sadd.s32 %s98, 1
      %p102 = scmp.eq.s32.totalorder %s17, 1
      %p103 = scmp.ne.s32.totalorder %s98, %s100
      %p104 = scmp.eq.s32.totalorder %s17, 0
      %p105 = por %p103, %p104
      %p106 = scmp.ne.s32.totalorder %s98, %s100
      %p107 = scmp.eq.s32.totalorder %s22, 1
      %p108 = por %p106, %p107
      %p109 = scmp.ne.s32.totalorder %s100, %s101
      %p110 = scmp.eq.s32.totalorder %s22, 0
      %p111 = por %p109, %p110
      %p112 = scmp.ne.s32.totalorder %s100, %s101
      %p113 = scmp.eq.s32.totalorder %s23, 1
      %p114 = por %p112, %p113
      %p116 = scmp.ne.s32.totalorder %s101, %s115
      %p117 = scmp.eq.s32.totalorder %s23, 0
      %p118 = por %p116, %p117
      %s119 = ssub.s32 %s17, %s24
      %p120 = scmp.eq.s32.totalorder %s119, 0
      %s122 = sadd.s32 %s121, 1
      %s123 = scalar_select %p120, %s121, %s122
      %p126 = pneg %p120
      %p127 = scmp.eq.s32.totalorder %s17, 1
      %p128 = por %p126, %p127
      %p129 = scmp.ne.s32.totalorder %s121, %s124
      %p130 = scmp.eq.s32.totalorder %s17, 0
      %p131 = por %p129, %p130
      %p132 = scmp.ne.s32.totalorder %s121, %s124
      %p133 = scmp.eq.s32.totalorder %s22, 1
      %p134 = por %p132, %p133
      %p135 = scmp.ne.s32.totalorder %s124, %s125
      %p136 = scmp.eq.s32.totalorder %s22, 0
      %p137 = por %p135, %p136
      %p138 = scmp.ne.s32.totalorder %s124, %s125
      %p139 = scmp.eq.s32.totalorder %s23, 1
      %p140 = por %p138, %p139
      %p142 = scmp.ne.s32.totalorder %s125, %s141
      %p143 = scmp.eq.s32.totalorder %s23, 0
      %p144 = por %p142, %p143
      %s145 = ssub.s32 %s17, %s24
      %p146 = scmp.eq.s32.totalorder %s145, 0
      %s148 = sadd.s32 %s147, 1
      %s149 = scalar_select %p146, %s147, %s148
      %p152 = pneg %p146
      %p153 = scmp.eq.s32.totalorder %s17, 1
      %p154 = por %p152, %p153
      %p155 = scmp.ne.s32.totalorder %s147, %s150
      %p156 = scmp.eq.s32.totalorder %s17, 0
      %p157 = por %p155, %p156
      %p158 = scmp.ne.s32.totalorder %s147, %s150
      %p159 = scmp.eq.s32.totalorder %s22, 1
      %p160 = por %p158, %p159
      %p161 = scmp.ne.s32.totalorder %s150, %s151
      %p162 = scmp.eq.s32.totalorder %s22, 0
      %p163 = por %p161, %p162
      %p164 = scmp.ne.s32.totalorder %s150, %s151
      %p165 = scmp.eq.s32.totalorder %s23, 1
      %p166 = por %p164, %p165
      %p168 = scmp.ne.s32.totalorder %s151, %s167
      %p169 = scmp.eq.s32.totalorder %s23, 0
      %p170 = por %p168, %p169
      %s171 = ssub.s32 %s17, %s24
      %p172 = scmp.eq.s32.totalorder %s171, 0
      %s174 = sadd.s32 %s173, 1
      %s175 = scalar_select %p172, %s173, %s174
      %p178 = pneg %p172
      %p179 = scmp.eq.s32.totalorder %s17, 1
      %p180 = por %p178, %p179
      %p181 = scmp.ne.s32.totalorder %s173, %s176
      %p182 = scmp.eq.s32.totalorder %s17, 0
      %p183 = por %p181, %p182
      %p184 = scmp.ne.s32.totalorder %s173, %s176
      %p185 = scmp.eq.s32.totalorder %s22, 1
      %p186 = por %p184, %p185
      %p187 = scmp.ne.s32.totalorder %s176, %s177
      %p188 = scmp.eq.s32.totalorder %s22, 0
      %p189 = por %p187, %p188
      %p190 = scmp.ne.s32.totalorder %s176, %s177
      %p191 = scmp.eq.s32.totalorder %s23, 1
      %p192 = por %p190, %p191
      %p194 = scmp.ne.s32.totalorder %s177, %s193
      %p195 = scmp.eq.s32.totalorder %s23, 0
      %p196 = por %p194, %p195
      %s197 = ssub.s32 %s17, %s24
      %p198 = scmp.eq.s32.totalorder %s197, 0
      %s200 = sadd.s32 %s199, 1
      %s201 = scalar_select %p198, %s199, %s200
      %p204 = pneg %p198
      %p205 = scmp.eq.s32.totalorder %s17, 1
      %p206 = por %p204, %p205
      %p207 = scmp.ne.s32.totalorder %s199, %s202
      %p208 = scmp.eq.s32.totalorder %s17, 0
      %p209 = por %p207, %p208
      %p210 = scmp.ne.s32.totalorder %s199, %s202
      %p211 = scmp.eq.s32.totalorder %s22, 1
      %p212 = por %p210, %p211
      %p213 = scmp.ne.s32.totalorder %s202, %s203
      %p214 = scmp.eq.s32.totalorder %s22, 0
      %p215 = por %p213, %p214
      %p216 = scmp.ne.s32.totalorder %s202, %s203
      %p217 = scmp.eq.s32.totalorder %s23, 1
      %p218 = por %p216, %p217
      %p220 = scmp.ne.s32.totalorder %s203, %s219
      %p221 = scmp.eq.s32.totalorder %s23, 0
      %p222 = por %p220, %p221
      %p223 = scmp.le.s32.totalorder 1, %s17
      %p224 = scmp.lt.s32.totalorder %s17, 3
      %p225 = pnand %p223, %p224
      %p226 = pneg %p225
      // Predicated region
      $region9: #{local_graph_forward.6} parent=5 // pred_check
        _
      $region10: #{local_graph_forward.6} parent=5 // pred_check_branch
        %228 = sbr.rel (%p225) target = $region12
      $region11: #{local_graph_forward.6} parent=5 // pred_region
        %s229 = ssub.s32 %s17, 1
        // Predicated region
        $region13: #{local_graph_forward.6} parent=11 // pred_check
          %p230 = pneg %p90
        $region14: #{local_graph_forward.6} parent=11 // pred_check_branch
          %232 = sbr.rel (%p230) target = $region16
        $region15: #{local_graph_forward.6} parent=11 // pred_region
          _
        $region16: #{local_graph_forward.6} parent=11 // pred_fallthru
          _
        // Predicated region
        $region17: #{local_graph_forward.6} parent=11 // pred_check
          %p233 = pneg %p111
        $region18: #{local_graph_forward.6} parent=11 // pred_check_branch
          %235 = sbr.rel (%p233) target = $region20
        $region19: #{local_graph_forward.6} parent=11 // pred_region
          _
        $region20: #{local_graph_forward.6} parent=11 // pred_fallthru
          _
      $region12: #{local_graph_forward.6} parent=5 // pred_fallthru
        _
      %p236 = scmp.lt.s32.totalorder %s17, 2
      // Predicated region
      $region21: #{local_graph_forward.6} parent=5 // pred_check
        %p237 = pneg %p236
      $region22: #{local_graph_forward.6} parent=5 // pred_check_branch
        %239 = sbr.rel (%p237) target = $region24
      $region23: #{local_graph_forward.6} parent=5 // pred_region
        // Predicated region
        $region25: #{local_graph_forward.6} parent=23 // pred_check
          %p240 = pneg %p37
        $region26: #{local_graph_forward.6} parent=23 // pred_check_branch
          %242 = sbr.rel (%p240) target = $region28
        $region27: #{local_graph_forward.6} parent=23 // pred_region
          %s243 = smul.u32 16, %s17
          %p244 = scmp.lt.s32.totalorder %s243, 31
          %s245 = scalar_select %p244, %s243, 31
          %s246 = smul.addr %s245, 2
          %s247 = smul.addr %s246, 4
          %s248 = scalar_lea.vmem %s0, %s247
          %s249 = smul.u32 16, %s17
        $region28: #{local_graph_forward.6} parent=23 // pred_fallthru
          _
        // Predicated region
        $region29: #{local_graph_forward.6} parent=23 // pred_check
          %p250 = pneg %p63
        $region30: #{local_graph_forward.6} parent=23 // pred_check_branch
          %252 = sbr.rel (%p250) target = $region32
        $region31: #{local_graph_forward.6} parent=23 // pred_region
          %s253 = smul.u32 16, %s17
          %p254 = scmp.lt.s32.totalorder %s253, 31
          %s255 = scalar_select %p254, %s253, 31
          %s256 = smul.addr %s255, 2
          %s257 = smul.addr %s256, 4
          %s258 = scalar_lea.vmem %s1, %s257
          %s259 = smul.u32 16, %s17
        $region32: #{local_graph_forward.6} parent=23 // pred_fallthru
          _
        // Predicated region
        $region33: #{local_graph_forward.6} parent=23 // pred_check
          %p260 = pneg %p131
        $region34: #{local_graph_forward.6} parent=23 // pred_check_branch
          %262 = sbr.rel (%p260) target = $region36
        $region35: #{local_graph_forward.6} parent=23 // pred_region
          %s263 = smul.u32 16, %s17
          %p264 = scmp.lt.s32.totalorder %s263, 31
          %s265 = scalar_select %p264, %s263, 31
          %s266 = smul.addr %s265, 2
          %s267 = smul.addr %s266, 8
          %s268 = scalar_lea.vmem %s4, %s267
          %s269 = smul.u32 16, %s17
        $region36: #{local_graph_forward.6} parent=23 // pred_fallthru
          _
      $region24: #{local_graph_forward.6} parent=5 // pred_fallthru
        _
      %p270 = scmp.le.s32.totalorder 1, %s17
      %p271 = scmp.lt.s32.totalorder %s17, 3
      %p272 = pnand %p270, %p271
      %p273 = pneg %p272
      // Predicated region
      $region37: #{local_graph_forward.6} parent=5 // pred_check
        _
      $region38: #{local_graph_forward.6} parent=5 // pred_check_branch
        %275 = sbr.rel (%p272) target = $region40
      $region39: #{local_graph_forward.6} parent=5 // pred_region
        %s276 = ssub.s32 %s17, 1
        %s277 = smul.u32 16, %s22
        %p278 = scmp.lt.s32.totalorder %s277, 31
        %s279 = scalar_select %p278, %s277, 31
        %s280 = smul.addr %s279, 2
        %s281 = smul.addr %s280, 4
        %s282 = scalar_lea.vmem %s0, %s281
        %p283 = pneg %p43
        %p284 = pneg %p40
        %s285 = smul.u32 16, %s22
        %p286 = scmp.lt.s32.totalorder %s285, 31
        %s287 = scalar_select %p286, %s285, 31
        %s288 = smul.addr %s287, 2
        %s289 = smul.addr %s288, 4
        %s290 = scalar_lea.vmem %s1, %s289
        %p291 = pneg %p69
        %p292 = pneg %p66
        %p293 = pneg %p90
        %p294 = pneg %p87
        %p295 = pneg %p111
        %p296 = pneg %p108
        %s297 = smul.u32 16, %s22
        %p298 = scmp.lt.s32.totalorder %s297, 31
        %s299 = scalar_select %p298, %s297, 31
        %s300 = smul.addr %s299, 2
        %s301 = smul.addr %s300, 8
        %s302 = scalar_lea.vmem %s4, %s301
        %p303 = pneg %p137
        %p304 = pneg %p134
        %p305 = pneg %p163
        %p306 = pneg %p160
        %s307 = smul.u32 16, %s22
        %p308 = scmp.lt.s32.totalorder %s307, 31
        %s309 = scalar_select %p308, %s307, 31
        %s310 = smul.addr %s309, 2
        %s311 = smul.addr %s310, 4
        %s312 = scalar_lea.vmem %s5, %s311
        %p313 = pneg %p189
        %p314 = pneg %p186
        %s315 = sand.u32 %s176, 1
        %s316 = scalar_lea.sflag [#allocation3], %s315
        %s317 = sand.u32 %s176, 1
        %s318 = smul.addr %s317, 256
        %s319 = scalar_lea.vmem [#allocation2], %s318
        %p320 = pneg %p215
        %p321 = pneg %p212
        %s322 = smul.u32 16, %s22
        %p323 = scmp.lt.s32.totalorder %s322, 31
        %s324 = scalar_select %p323, %s322, 31
        %s325 = smul.addr %s324, 2
        %s326 = smul.addr %s325, 8
        %s327 = scalar_lea.vmem %s7, %s326
        %s328 = smul.u32 16, %s22
        %p329 = scmp.lt.s32.totalorder %s328, 31
        %s330 = scalar_select %p329, %s328, 31
        %s331 = smul.addr %s330, 2
        %s332 = smul.addr %s331, 4
        %s333 = scalar_lea.vmem %s0, %s332
        %s334 = smul.u32 16, %s22
        %s335 = smul.u32 16, %s22
        %p336 = scmp.lt.s32.totalorder %s335, 31
        %s337 = scalar_select %p336, %s335, 31
        %s338 = smul.addr %s337, 2
        %s339 = smul.addr %s338, 4
        %s340 = scalar_lea.vmem %s1, %s339
        %s341 = smul.u32 16, %s22
        %s342 = smul.u32 16, %s22
        %p343 = scmp.lt.s32.totalorder %s342, 31
        %s344 = scalar_select %p343, %s342, 31
        %s345 = smul.addr %s344, 2
        %s346 = smul.addr %s345, 8
        %s347 = scalar_lea.vmem %s4, %s346
        %s348 = smul.u32 16, %s22
        %s349 = smul.u32 16, %s22
        %p350 = scmp.lt.s32.totalorder %s349, 31
        %s351 = scalar_select %p350, %s349, 31
        %s352 = smul.addr %s351, 2
        %s353 = smul.addr %s352, 4
        %s354 = scalar_lea.vmem %s5, %s353
        %s355 = smul.u32 16, %s22
        %s356 = smul.u32 16, %s22
        %s357 = smul.u32 16, %s22
        %p358 = scmp.lt.s32.totalorder %s357, 31
        %s359 = scalar_select %p358, %s357, 31
        %s360 = smul.addr %s359, 2
        %s361 = smul.addr %s360, 8
        %s362 = scalar_lea.vmem %s7, %s361
        %s363 = smul.u32 16, %s22
        %s364 = smul.u32 %s22, 128
        %v365 = vld [vmem:[%s333] sm:$0xff]
        %v366 = vld [vmem:[%s333 + $0x8] sm:$0xff]
        %v367 = vld [vmem:[%s333 + $0x10] sm:$0xff]
        %v368 = vld [vmem:[%s333 + $0x18] sm:$0xff]
        %v369 = vld [vmem:[%s333 + $0x20] sm:$0xff]
        %v370 = vld [vmem:[%s333 + $0x28] sm:$0xff]
        %v371 = vld [vmem:[%s333 + $0x30] sm:$0xff]
        %v372 = vld [vmem:[%s333 + $0x38] sm:$0xff]
        %v373 = vld [vmem:[%s333 + $0x40] sm:$0xff]
        %v374 = vld [vmem:[%s333 + $0x48] sm:$0xff]
        %v375 = vld [vmem:[%s333 + $0x50] sm:$0xff]
        %v376 = vld [vmem:[%s333 + $0x58] sm:$0xff]
        %v377 = vld [vmem:[%s333 + $0x60] sm:$0xff]
        %v378 = vld [vmem:[%s333 + $0x68] sm:$0xff]
        %v379 = vld [vmem:[%s333 + $0x70] sm:$0xff]
        %v380 = vld [vmem:[%s333 + $0x78] sm:$0xff]
        %v381 = vld [vmem:[%s340] sm:$0xff]
        %v382 = vld [vmem:[%s340 + $0x8] sm:$0xff]
        %v383 = vld [vmem:[%s340 + $0x10] sm:$0xff]
        %v384 = vld [vmem:[%s340 + $0x18] sm:$0xff]
        %v385 = vld [vmem:[%s340 + $0x20] sm:$0xff]
        %v386 = vld [vmem:[%s340 + $0x28] sm:$0xff]
        %v387 = vld [vmem:[%s340 + $0x30] sm:$0xff]
        %v388 = vld [vmem:[%s340 + $0x38] sm:$0xff]
        %v389 = vld [vmem:[%s340 + $0x40] sm:$0xff]
        %v390 = vld [vmem:[%s340 + $0x48] sm:$0xff]
        %v391 = vld [vmem:[%s340 + $0x50] sm:$0xff]
        %v392 = vld [vmem:[%s340 + $0x58] sm:$0xff]
        %v393 = vld [vmem:[%s340 + $0x60] sm:$0xff]
        %v394 = vld [vmem:[%s340 + $0x68] sm:$0xff]
        %v395 = vld [vmem:[%s340 + $0x70] sm:$0xff]
        %v396 = vld [vmem:[%s340 + $0x78] sm:$0xff]
        %v397 = vmul.bf16 %v365, %v381
        %v398 = vmul.bf16 %v366, %v382
        %v399 = vmul.bf16 %v367, %v383
        %v400 = vmul.bf16 %v368, %v384
        %v401 = vmul.bf16 %v369, %v385
        %v402 = vmul.bf16 %v370, %v386
        %v403 = vmul.bf16 %v371, %v387
        %v404 = vmul.bf16 %v372, %v388
        %v405 = vmul.bf16 %v373, %v389
        %v406 = vmul.bf16 %v374, %v390
        %v407 = vmul.bf16 %v375, %v391
        %v408 = vmul.bf16 %v376, %v392
        %v409 = vmul.bf16 %v377, %v393
        %v410 = vmul.bf16 %v378, %v394
        %v411 = vmul.bf16 %v379, %v395
        %v412 = vmul.bf16 %v380, %v396
        %413 = vst [vmem:[%s354] sm:$0xff] %v397
        %414 = vst [vmem:[%s354 + $0x8] sm:$0xff] %v398
        %415 = vst [vmem:[%s354 + $0x10] sm:$0xff] %v399
        %416 = vst [vmem:[%s354 + $0x18] sm:$0xff] %v400
        %417 = vst [vmem:[%s354 + $0x20] sm:$0xff] %v401
        %418 = vst [vmem:[%s354 + $0x28] sm:$0xff] %v402
        %419 = vst [vmem:[%s354 + $0x30] sm:$0xff] %v403
        %420 = vst [vmem:[%s354 + $0x38] sm:$0xff] %v404
        %421 = vst [vmem:[%s354 + $0x40] sm:$0xff] %v405
        %422 = vst [vmem:[%s354 + $0x48] sm:$0xff] %v406
        %423 = vst [vmem:[%s354 + $0x50] sm:$0xff] %v407
        %424 = vst [vmem:[%s354 + $0x58] sm:$0xff] %v408
        %425 = vst [vmem:[%s354 + $0x60] sm:$0xff] %v409
        %426 = vst [vmem:[%s354 + $0x68] sm:$0xff] %v410
        %427 = vst [vmem:[%s354 + $0x70] sm:$0xff] %v411
        %428 = vst [vmem:[%s354 + $0x78] sm:$0xff] %v412
        %v429 = vunpack.c.l.bf16 %v397
        %v430 = vunpack.c.h.bf16 %v397
        %v431 = vunpack.c.l.bf16 %v398
        %v432 = vunpack.c.h.bf16 %v398
        %v433 = vunpack.c.l.bf16 %v399
        %v434 = vunpack.c.h.bf16 %v399
        %v435 = vunpack.c.l.bf16 %v400
        %v436 = vunpack.c.h.bf16 %v400
        %v437 = vunpack.c.l.bf16 %v401
        %v438 = vunpack.c.h.bf16 %v401
        %v439 = vunpack.c.l.bf16 %v402
        %v440 = vunpack.c.h.bf16 %v402
        %v441 = vunpack.c.l.bf16 %v403
        %v442 = vunpack.c.h.bf16 %v403
        %v443 = vunpack.c.l.bf16 %v404
        %v444 = vunpack.c.h.bf16 %v404
        %v445 = vunpack.c.l.bf16 %v405
        %v446 = vunpack.c.h.bf16 %v405
        %v447 = vunpack.c.l.bf16 %v406
        %v448 = vunpack.c.h.bf16 %v406
        %v449 = vunpack.c.l.bf16 %v407
        %v450 = vunpack.c.h.bf16 %v407
        %v451 = vunpack.c.l.bf16 %v408
        %v452 = vunpack.c.h.bf16 %v408
        %v453 = vunpack.c.l.bf16 %v409
        %v454 = vunpack.c.h.bf16 %v409
        %v455 = vunpack.c.l.bf16 %v410
        %v456 = vunpack.c.h.bf16 %v410
        %v457 = vunpack.c.l.bf16 %v411
        %v458 = vunpack.c.h.bf16 %v411
        %v459 = vunpack.c.l.bf16 %v412
        %v460 = vunpack.c.h.bf16 %v412
        %v461 = vadd.f32 %v429, %v430
        %462 = vadd.xlane.f32.xlu0 %v461
        %v463 = vpop.xlane.xlu0 %462
        %v464 = vadd.f32 %v431, %v432
        %465 = vadd.xlane.f32.xlu0 %v464
        %v466 = vpop.xlane.xlu0 %465
        %v467 = vadd.f32 %v433, %v434
        %468 = vadd.xlane.f32.xlu0 %v467
        %v469 = vpop.xlane.xlu0 %468
        %v470 = vadd.f32 %v435, %v436
        %471 = vadd.xlane.f32.xlu0 %v470
        %v472 = vpop.xlane.xlu0 %471
        %v473 = vadd.f32 %v437, %v438
        %474 = vadd.xlane.f32.xlu0 %v473
        %v475 = vpop.xlane.xlu0 %474
        %v476 = vadd.f32 %v439, %v440
        %477 = vadd.xlane.f32.xlu0 %v476
        %v478 = vpop.xlane.xlu0 %477
        %v479 = vadd.f32 %v441, %v442
        %480 = vadd.xlane.f32.xlu0 %v479
        %v481 = vpop.xlane.xlu0 %480
        %v482 = vadd.f32 %v443, %v444
        %483 = vadd.xlane.f32.xlu0 %v482
        %v484 = vpop.xlane.xlu0 %483
        %v485 = vadd.f32 %v445, %v446
        %486 = vadd.xlane.f32.xlu0 %v485
        %v487 = vpop.xlane.xlu0 %486
        %v488 = vadd.f32 %v447, %v448
        %489 = vadd.xlane.f32.xlu0 %v488
        %v490 = vpop.xlane.xlu0 %489
        %v491 = vadd.f32 %v449, %v450
        %492 = vadd.xlane.f32.xlu0 %v491
        %v493 = vpop.xlane.xlu0 %492
        %v494 = vadd.f32 %v451, %v452
        %495 = vadd.xlane.f32.xlu0 %v494
        %v496 = vpop.xlane.xlu0 %495
        %v497 = vadd.f32 %v453, %v454
        %498 = vadd.xlane.f32.xlu0 %v497
        %v499 = vpop.xlane.xlu0 %498
        %v500 = vadd.f32 %v455, %v456
        %501 = vadd.xlane.f32.xlu0 %v500
        %v502 = vpop.xlane.xlu0 %501
        %v503 = vadd.f32 %v457, %v458
        %504 = vadd.xlane.f32.xlu0 %v503
        %v505 = vpop.xlane.xlu0 %504
        %v506 = vadd.f32 %v459, %v460
        %507 = vadd.xlane.f32.xlu0 %v506
        %v508 = vpop.xlane.xlu0 %507
        %s509 = sshra.s32 %s364, 3
        %s510 = sand.u32 %s364, 7
        %s511 = smul.u32 %s509, 2
        %s512 = smul.addr %s511, 8
        %s513 = scalar_lea.vmem %s2, %s512
        %v514 = vld [vmem:[%s513] sm:$0xff]
        %v515 = vld [vmem:[%s513 + $0x8] sm:$0xff]
        %v516 = vld [vmem:[%s513 + $0x10] sm:$0xff]
        %v517 = vld [vmem:[%s513 + $0x18] sm:$0xff]
        %v518 = vld [vmem:[%s513 + $0x20] sm:$0xff]
        %v519 = vld [vmem:[%s513 + $0x28] sm:$0xff]
        %v520 = vld [vmem:[%s513 + $0x30] sm:$0xff]
        %v521 = vld [vmem:[%s513 + $0x38] sm:$0xff]
        %v522 = vld [vmem:[%s513 + $0x40] sm:$0xff]
        %v523 = vld [vmem:[%s513 + $0x48] sm:$0xff]
        %v524 = vld [vmem:[%s513 + $0x50] sm:$0xff]
        %v525 = vld [vmem:[%s513 + $0x58] sm:$0xff]
        %v526 = vld [vmem:[%s513 + $0x60] sm:$0xff]
        %v527 = vld [vmem:[%s513 + $0x68] sm:$0xff]
        %v528 = vld [vmem:[%s513 + $0x70] sm:$0xff]
        %v529 = vld [vmem:[%s513 + $0x78] sm:$0xff]
        %v530 = vld [vmem:[%s513 + $0x80] sm:$0xff]
        %v531 = vld [vmem:[%s513 + $0x88] sm:$0xff]
        %v532 = vld [vmem:[%s513 + $0x90] sm:$0xff]
        %v533 = vld [vmem:[%s513 + $0x98] sm:$0xff]
        %v534 = vld [vmem:[%s513 + $0xa0] sm:$0xff]
        %v535 = vld [vmem:[%s513 + $0xa8] sm:$0xff]
        %v536 = vld [vmem:[%s513 + $0xb0] sm:$0xff]
        %v537 = vld [vmem:[%s513 + $0xb8] sm:$0xff]
        %v538 = vld [vmem:[%s513 + $0xc0] sm:$0xff]
        %v539 = vld [vmem:[%s513 + $0xc8] sm:$0xff]
        %v540 = vld [vmem:[%s513 + $0xd0] sm:$0xff]
        %v541 = vld [vmem:[%s513 + $0xd8] sm:$0xff]
        %v542 = vld [vmem:[%s513 + $0xe0] sm:$0xff]
        %v543 = vld [vmem:[%s513 + $0xe8] sm:$0xff]
        %v544 = vld [vmem:[%s513 + $0xf0] sm:$0xff]
        %v545 = vld [vmem:[%s513 + $0xf8] sm:$0xff]
        %v546 = vld [vmem:[%s2] sm:$0xff]
        %v547 = vld [vmem:[%s2 + $0x8] sm:$0xff]
        %v548 = vld [vmem:[%s2 + $0x10] sm:$0xff]
        %v549 = vld [vmem:[%s2 + $0x18] sm:$0xff]
        %v550 = vld [vmem:[%s2 + $0x20] sm:$0xff]
        %v551 = vld [vmem:[%s2 + $0x28] sm:$0xff]
        %v552 = vld [vmem:[%s2 + $0x30] sm:$0xff]
        %v553 = vld [vmem:[%s2 + $0x38] sm:$0xff]
        %v554 = vld [vmem:[%s2 + $0x40] sm:$0xff]
        %v555 = vld [vmem:[%s2 + $0x48] sm:$0xff]
        %v556 = vld [vmem:[%s2 + $0x50] sm:$0xff]
        %v557 = vld [vmem:[%s2 + $0x58] sm:$0xff]
        %v558 = vld [vmem:[%s2 + $0x60] sm:$0xff]
        %v559 = vld [vmem:[%s2 + $0x68] sm:$0xff]
        %v560 = vld [vmem:[%s2 + $0x70] sm:$0xff]
        %v561 = vld [vmem:[%s2 + $0x78] sm:$0xff]
        %v562 = vld [vmem:[%s2 + $0x80] sm:$0xff]
        %v563 = vld [vmem:[%s2 + $0x88] sm:$0xff]
        %v564 = vld [vmem:[%s2 + $0x90] sm:$0xff]
        %v565 = vld [vmem:[%s2 + $0x98] sm:$0xff]
        %v566 = vld [vmem:[%s2 + $0xa0] sm:$0xff]
        %v567 = vld [vmem:[%s2 + $0xa8] sm:$0xff]
        %v568 = vld [vmem:[%s2 + $0xb0] sm:$0xff]
        %v569 = vld [vmem:[%s2 + $0xb8] sm:$0xff]
        %v570 = vld [vmem:[%s2 + $0xc0] sm:$0xff]
        %v571 = vld [vmem:[%s2 + $0xc8] sm:$0xff]
        %v572 = vld [vmem:[%s2 + $0xd0] sm:$0xff]
        %v573 = vld [vmem:[%s2 + $0xd8] sm:$0xff]
        %v574 = vld [vmem:[%s2 + $0xe0] sm:$0xff]
        %v575 = vld [vmem:[%s2 + $0xe8] sm:$0xff]
        %v576 = vld [vmem:[%s2 + $0xf0] sm:$0xff]
        %v577 = vld [vmem:[%s2 + $0xf8] sm:$0xff]
        %v578 = vld [vmem:[%s2 + $0x100] sm:$0xff]
        %v579 = vld [vmem:[%s2 + $0x108] sm:$0xff]
        %v580 = vld [vmem:[%s2 + $0x110] sm:$0xff]
        %v581 = vld [vmem:[%s2 + $0x118] sm:$0xff]
        %v582 = vld [vmem:[%s2 + $0x120] sm:$0xff]
        %v583 = vld [vmem:[%s2 + $0x128] sm:$0xff]
        %v584 = vld [vmem:[%s2 + $0x130] sm:$0xff]
        %v585 = vld [vmem:[%s2 + $0x138] sm:$0xff]
        %v586 = vld [vmem:[%s2 + $0x140] sm:$0xff]
        %v587 = vld [vmem:[%s2 + $0x148] sm:$0xff]
        %v588 = vld [vmem:[%s2 + $0x150] sm:$0xff]
        %v589 = vld [vmem:[%s2 + $0x158] sm:$0xff]
        %v590 = vld [vmem:[%s2 + $0x160] sm:$0xff]
        %v591 = vld [vmem:[%s2 + $0x168] sm:$0xff]
        %v592 = vld [vmem:[%s2 + $0x170] sm:$0xff]
        %v593 = vld [vmem:[%s2 + $0x178] sm:$0xff]
        %v594 = vld [vmem:[%s2 + $0x180] sm:$0xff]
        %v595 = vld [vmem:[%s2 + $0x188] sm:$0xff]
        %v596 = vld [vmem:[%s2 + $0x190] sm:$0xff]
        %v597 = vld [vmem:[%s2 + $0x198] sm:$0xff]
        %v598 = vld [vmem:[%s2 + $0x1a0] sm:$0xff]
        %v599 = vld [vmem:[%s2 + $0x1a8] sm:$0xff]
        %v600 = vld [vmem:[%s2 + $0x1b0] sm:$0xff]
        %v601 = vld [vmem:[%s2 + $0x1b8] sm:$0xff]
        %v602 = vld [vmem:[%s2 + $0x1c0] sm:$0xff]
        %v603 = vld [vmem:[%s2 + $0x1c8] sm:$0xff]
        %v604 = vld [vmem:[%s2 + $0x1d0] sm:$0xff]
        %v605 = vld [vmem:[%s2 + $0x1d8] sm:$0xff]
        %v606 = vld [vmem:[%s2 + $0x1e0] sm:$0xff]
        %v607 = vld [vmem:[%s2 + $0x1e8] sm:$0xff]
        %v608 = vld [vmem:[%s2 + $0x1f0] sm:$0xff]
        %v609 = vld [vmem:[%s2 + $0x1f8] sm:$0xff]
        %v610 = vpack.c.bf16 %v548, %v546
        %v611 = vpack.c.bf16 %v549, %v547
        %v612 = vpack.c.bf16 %v552, %v550
        %v613 = vpack.c.bf16 %v553, %v551
        %v614 = vpack.c.bf16 %v556, %v554
        %v615 = vpack.c.bf16 %v557, %v555
        %v616 = vpack.c.bf16 %v560, %v558
        %v617 = vpack.c.bf16 %v561, %v559
        %v618 = vpack.c.bf16 %v564, %v562
        %v619 = vpack.c.bf16 %v565, %v563
        %v620 = vpack.c.bf16 %v568, %v566
        %v621 = vpack.c.bf16 %v569, %v567
        %v622 = vpack.c.bf16 %v572, %v570
        %v623 = vpack.c.bf16 %v573, %v571
        %v624 = vpack.c.bf16 %v576, %v574
        %v625 = vpack.c.bf16 %v577, %v575
        %v626 = vpack.c.bf16 %v580, %v578
        %v627 = vpack.c.bf16 %v581, %v579
        %v628 = vpack.c.bf16 %v584, %v582
        %v629 = vpack.c.bf16 %v585, %v583
        %v630 = vpack.c.bf16 %v588, %v586
        %v631 = vpack.c.bf16 %v589, %v587
        %v632 = vpack.c.bf16 %v592, %v590
        %v633 = vpack.c.bf16 %v593, %v591
        %v634 = vpack.c.bf16 %v596, %v594
        %v635 = vpack.c.bf16 %v597, %v595
        %v636 = vpack.c.bf16 %v600, %v598
        %v637 = vpack.c.bf16 %v601, %v599
        %v638 = vpack.c.bf16 %v604, %v602
        %v639 = vpack.c.bf16 %v605, %v603
        %v640 = vpack.c.bf16 %v608, %v606
        %v641 = vpack.c.bf16 %v609, %v607
        %v658 = vunpack.c.l.b16 %v397
        %v659 = vunpack.c.h.b16 %v397
        %v660 = vunpack.c.l.b16 %v398
        %v661 = vunpack.c.h.b16 %v398
        %v662 = vunpack.c.l.b16 %v399
        %v663 = vunpack.c.h.b16 %v399
        %v664 = vunpack.c.l.b16 %v400
        %v665 = vunpack.c.h.b16 %v400
        %v666 = vunpack.c.l.b16 %v401
        %v667 = vunpack.c.h.b16 %v401
        %v668 = vunpack.c.l.b16 %v402
        %v669 = vunpack.c.h.b16 %v402
        %v670 = vunpack.c.l.b16 %v403
        %v671 = vunpack.c.h.b16 %v403
        %v672 = vunpack.c.l.b16 %v404
        %v673 = vunpack.c.h.b16 %v404
        %v674 = vunpack.c.l.b16 %v405
        %v675 = vunpack.c.h.b16 %v405
        %v676 = vunpack.c.l.b16 %v406
        %v677 = vunpack.c.h.b16 %v406
        %v678 = vunpack.c.l.b16 %v407
        %v679 = vunpack.c.h.b16 %v407
        %v680 = vunpack.c.l.b16 %v408
        %v681 = vunpack.c.h.b16 %v408
        %v682 = vunpack.c.l.b16 %v409
        %v683 = vunpack.c.h.b16 %v409
        %v684 = vunpack.c.l.b16 %v410
        %v685 = vunpack.c.h.b16 %v410
        %v686 = vunpack.c.l.b16 %v411
        %v687 = vunpack.c.h.b16 %v411
        %v688 = vunpack.c.l.b16 %v412
        %v689 = vunpack.c.h.b16 %v412
        %v690 = vpack.c.b16 %v660, %v658
        %v691 = vpack.c.b16 %v661, %v659
        %v692 = vpack.c.b16 %v664, %v662
        %v693 = vpack.c.b16 %v665, %v663
        %v694 = vpack.c.b16 %v668, %v666
        %v695 = vpack.c.b16 %v669, %v667
        %v696 = vpack.c.b16 %v672, %v670
        %v697 = vpack.c.b16 %v673, %v671
        %v698 = vpack.c.b16 %v676, %v674
        %v699 = vpack.c.b16 %v677, %v675
        %v700 = vpack.c.b16 %v680, %v678
        %v701 = vpack.c.b16 %v681, %v679
        %v702 = vpack.c.b16 %v684, %v682
        %v703 = vpack.c.b16 %v685, %v683
        %v704 = vpack.c.b16 %v688, %v686
        %v705 = vpack.c.b16 %v689, %v687
        %722 = vmatprep.subr.bf16.mxu0 %v625
        %723 = vmatpush1.bf16.msra.mxu0 %v624
        %724 = vmatprep.subr.bf16.mxu0 %v623
        %725 = vmatpush1.bf16.msra.mxu0 %v622
        %726 = vmatprep.subr.bf16.mxu0 %v621
        %727 = vmatpush1.bf16.msra.mxu0 %v620
        %728 = vmatprep.subr.bf16.mxu0 %v619
        %729 = vmatpush1.bf16.msra.mxu0 %v618
        %730 = vmatprep.subr.bf16.mxu0 %v617
        %731 = vmatpush1.bf16.msra.mxu0 %v616
        %732 = vmatprep.subr.bf16.mxu0 %v615
        %733 = vmatpush1.bf16.msra.mxu0 %v614
        %734 = vmatprep.subr.bf16.mxu0 %v613
        %735 = vmatpush1.bf16.msra.mxu0 %v612
        %736 = vmatprep.subr.bf16.mxu0 %v611
        %737 = vmatpush1.bf16.msra.mxu0 %v610
        %738 = vmatprep.subr.bf16.mxu0 %v641
        %739 = vmatpush2.bf16.msra.mxu0 %v640
        %740 = vmatprep.subr.bf16.mxu0 %v639
        %741 = vmatpush2.bf16.msra.mxu0 %v638
        %742 = vmatprep.subr.bf16.mxu0 %v637
        %743 = vmatpush2.bf16.msra.mxu0 %v636
        %744 = vmatprep.subr.bf16.mxu0 %v635
        %745 = vmatpush2.bf16.msra.mxu0 %v634
        %746 = vmatprep.subr.bf16.mxu0 %v633
        %747 = vmatpush2.bf16.msra.mxu0 %v632
        %748 = vmatprep.subr.bf16.mxu0 %v631
        %749 = vmatpush2.bf16.msra.mxu0 %v630
        %750 = vmatprep.subr.bf16.mxu0 %v629
        %751 = vmatpush2.bf16.msra.mxu0 %v628
        %752 = vmatprep.subr.bf16.mxu0 %v627
        %753 = vmatpush2.bf16.msra.mxu0 %v626
        %754 = vmatprep.mubr.bf16.mxu0 %v691
        %755 = vmatmul.mubr.bf16.gmra.mxu0 %v690
        %v756 = vpop.f32.mrf.mxu0
        %v757 = vadd.f32 0.0, %v756
        %v758 = vpop.f32.mrf.mxu0
        %v759 = vadd.f32 0.0, %v758
        %v760 = vpop.f32.mrf.mxu0
        %v761 = vadd.f32 0.0, %v760
        %v762 = vpop.f32.mrf.mxu0
        %v763 = vadd.f32 0.0, %v762
        %764 = vmatprep.mubr.bf16.mxu0 %v693
        %765 = vmatmul.mubr.bf16.gmra.mxu0 %v692
        %v766 = vpop.f32.mrf.mxu0
        %v767 = vadd.f32 0.0, %v766
        %v768 = vpop.f32.mrf.mxu0
        %v769 = vadd.f32 0.0, %v768
        %v770 = vpop.f32.mrf.mxu0
        %v771 = vadd.f32 0.0, %v770
        %v772 = vpop.f32.mrf.mxu0
        %v773 = vadd.f32 0.0, %v772
        %774 = vmatprep.mubr.bf16.mxu0 %v695
        %775 = vmatmul.mubr.bf16.gmra.mxu0 %v694
        %v776 = vpop.f32.mrf.mxu0
        %v777 = vadd.f32 0.0, %v776
        %v778 = vpop.f32.mrf.mxu0
        %v779 = vadd.f32 0.0, %v778
        %v780 = vpop.f32.mrf.mxu0
        %v781 = vadd.f32 0.0, %v780
        %v782 = vpop.f32.mrf.mxu0
        %v783 = vadd.f32 0.0, %v782
        %784 = vmatprep.mubr.bf16.mxu0 %v697
        %785 = vmatmul.mubr.bf16.gmra.mxu0 %v696
        %v786 = vpop.f32.mrf.mxu0
        %v787 = vadd.f32 0.0, %v786
        %v788 = vpop.f32.mrf.mxu0
        %v789 = vadd.f32 0.0, %v788
        %v790 = vpop.f32.mrf.mxu0
        %v791 = vadd.f32 0.0, %v790
        %v792 = vpop.f32.mrf.mxu0
        %v793 = vadd.f32 0.0, %v792
        %794 = vmatprep.mubr.bf16.mxu0 %v699
        %795 = vmatmul.mubr.bf16.gmra.mxu0 %v698
        %v796 = vpop.f32.mrf.mxu0
        %v797 = vadd.f32 0.0, %v796
        %v798 = vpop.f32.mrf.mxu0
        %v799 = vadd.f32 0.0, %v798
        %v800 = vpop.f32.mrf.mxu0
        %v801 = vadd.f32 0.0, %v800
        %v802 = vpop.f32.mrf.mxu0
        %v803 = vadd.f32 0.0, %v802
        %804 = vmatprep.mubr.bf16.mxu0 %v701
        %805 = vmatmul.mubr.bf16.gmra.mxu0 %v700
        %v806 = vpop.f32.mrf.mxu0
        %v807 = vadd.f32 0.0, %v806
        %v808 = vpop.f32.mrf.mxu0
        %v809 = vadd.f32 0.0, %v808
        %v810 = vpop.f32.mrf.mxu0
        %v811 = vadd.f32 0.0, %v810
        %v812 = vpop.f32.mrf.mxu0
        %v813 = vadd.f32 0.0, %v812
        %814 = vmatprep.mubr.bf16.mxu0 %v703
        %815 = vmatmul.mubr.bf16.gmra.mxu0 %v702
        %v816 = vpop.f32.mrf.mxu0
        %v817 = vadd.f32 0.0, %v816
        %v818 = vpop.f32.mrf.mxu0
        %v819 = vadd.f32 0.0, %v818
        %v820 = vpop.f32.mrf.mxu0
        %v821 = vadd.f32 0.0, %v820
        %v822 = vpop.f32.mrf.mxu0
        %v823 = vadd.f32 0.0, %v822
        %824 = vmatprep.mubr.bf16.mxu0 %v705
        %825 = vmatmul.mubr.bf16.gmra.mxu0 %v704
        %v826 = vpop.f32.mrf.mxu0
        %v827 = vadd.f32 0.0, %v826
        %v828 = vpop.f32.mrf.mxu0
        %v829 = vadd.f32 0.0, %v828
        %v830 = vpop.f32.mrf.mxu0
        %v831 = vadd.f32 0.0, %v830
        %v832 = vpop.f32.mrf.mxu0
        %v833 = vadd.f32 0.0, %v832
        %834 = vdwg.mxu0
        %v835 = vld [vmem:[%s3] sm:$0x3]
        %v837 = vlaneseq
        %v838 = vshrl.u32 %v837, 7
        %v839 = vsub.s32 0, %v838
        %v840 = vrot.slane %v835, %v839
        %v841 = vlaneseq
        %v842 = vshrl.u32 %v841, 7
        %v843 = vsub.s32 1, %v842
        %v844 = vrot.slane %v835, %v843
        %v847 = vmul.f32 %v429, %v840
        %v848 = vmul.f32 %v430, %v844
        %v849 = vmul.f32 %v431, %v840
        %v850 = vmul.f32 %v432, %v844
        %v851 = vmul.f32 %v433, %v840
        %v852 = vmul.f32 %v434, %v844
        %v853 = vmul.f32 %v435, %v840
        %v854 = vmul.f32 %v436, %v844
        %v855 = vmul.f32 %v437, %v840
        %v856 = vmul.f32 %v438, %v844
        %v857 = vmul.f32 %v439, %v840
        %v858 = vmul.f32 %v440, %v844
        %v859 = vmul.f32 %v441, %v840
        %v860 = vmul.f32 %v442, %v844
        %v861 = vmul.f32 %v443, %v840
        %v862 = vmul.f32 %v444, %v844
        %v863 = vmul.f32 %v445, %v840
        %v864 = vmul.f32 %v446, %v844
        %v865 = vmul.f32 %v447, %v840
        %v866 = vmul.f32 %v448, %v844
        %v867 = vmul.f32 %v449, %v840
        %v868 = vmul.f32 %v450, %v844
        %v869 = vmul.f32 %v451, %v840
        %v870 = vmul.f32 %v452, %v844
        %v871 = vmul.f32 %v453, %v840
        %v872 = vmul.f32 %v454, %v844
        %v873 = vmul.f32 %v455, %v840
        %v874 = vmul.f32 %v456, %v844
        %v875 = vmul.f32 %v457, %v840
        %v876 = vmul.f32 %v458, %v844
        %v877 = vmul.f32 %v459, %v840
        %v878 = vmul.f32 %v460, %v844
        %v879 = vadd.f32 %v847, %v848
        %880 = vadd.xlane.f32.xlu0 %v879
        %v881 = vpop.xlane.xlu0 %880
        %v882 = vadd.f32 %v849, %v850
        %883 = vadd.xlane.f32.xlu0 %v882
        %v884 = vpop.xlane.xlu0 %883
        %v885 = vadd.f32 %v851, %v852
        %886 = vadd.xlane.f32.xlu0 %v885
        %v887 = vpop.xlane.xlu0 %886
        %v888 = vadd.f32 %v853, %v854
        %889 = vadd.xlane.f32.xlu0 %v888
        %v890 = vpop.xlane.xlu0 %889
        %v891 = vadd.f32 %v855, %v856
        %892 = vadd.xlane.f32.xlu0 %v891
        %v893 = vpop.xlane.xlu0 %892
        %v894 = vadd.f32 %v857, %v858
        %895 = vadd.xlane.f32.xlu0 %v894
        %v896 = vpop.xlane.xlu0 %895
        %v897 = vadd.f32 %v859, %v860
        %898 = vadd.xlane.f32.xlu0 %v897
        %v899 = vpop.xlane.xlu0 %898
        %v900 = vadd.f32 %v861, %v862
        %901 = vadd.xlane.f32.xlu0 %v900
        %v902 = vpop.xlane.xlu0 %901
        %v903 = vadd.f32 %v863, %v864
        %904 = vadd.xlane.f32.xlu0 %v903
        %v905 = vpop.xlane.xlu0 %904
        %v906 = vadd.f32 %v865, %v866
        %907 = vadd.xlane.f32.xlu0 %v906
        %v908 = vpop.xlane.xlu0 %907
        %v909 = vadd.f32 %v867, %v868
        %910 = vadd.xlane.f32.xlu0 %v909
        %v911 = vpop.xlane.xlu0 %910
        %v912 = vadd.f32 %v869, %v870
        %913 = vadd.xlane.f32.xlu0 %v912
        %v914 = vpop.xlane.xlu0 %913
        %v915 = vadd.f32 %v871, %v872
        %916 = vadd.xlane.f32.xlu0 %v915
        %v917 = vpop.xlane.xlu0 %916
        %v918 = vadd.f32 %v873, %v874
        %919 = vadd.xlane.f32.xlu0 %v918
        %v920 = vpop.xlane.xlu0 %919
        %v921 = vadd.f32 %v875, %v876
        %922 = vadd.xlane.f32.xlu0 %v921
        %v923 = vpop.xlane.xlu0 %922
        %v924 = vadd.f32 %v877, %v878
        %925 = vadd.xlane.f32.xlu0 %v924
        %v926 = vpop.xlane.xlu0 %925
        %v927 = vsub.f32 %v881, %v515
        %v928 = vsub.f32 %v884, %v517
        %v929 = vsub.f32 %v887, %v519
        %v930 = vsub.f32 %v890, %v521
        %v931 = vsub.f32 %v893, %v523
        %v932 = vsub.f32 %v896, %v525
        %v933 = vsub.f32 %v899, %v527
        %v934 = vsub.f32 %v902, %v529
        %v935 = vsub.f32 %v905, %v531
        %v936 = vsub.f32 %v908, %v533
        %v937 = vsub.f32 %v911, %v535
        %v938 = vsub.f32 %v914, %v537
        %v939 = vsub.f32 %v917, %v539
        %v940 = vsub.f32 %v920, %v541
        %v941 = vsub.f32 %v923, %v543
        %v942 = vsub.f32 %v926, %v545
        %959 = vrot.lane.b32.xlu0 %v515, 127
        %v960 = vpop.permute.xlu0 %959
        %961 = vrot.lane.b32.xlu0 %v517, 127
        %v962 = vpop.permute.xlu0 %961
        %963 = vrot.lane.b32.xlu0 %v519, 127
        %v964 = vpop.permute.xlu0 %963
        %965 = vrot.lane.b32.xlu0 %v521, 127
        %v966 = vpop.permute.xlu0 %965
        %967 = vrot.lane.b32.xlu0 %v523, 127
        %v968 = vpop.permute.xlu0 %967
        %969 = vrot.lane.b32.xlu0 %v525, 127
        %v970 = vpop.permute.xlu0 %969
        %971 = vrot.lane.b32.xlu0 %v527, 127
        %v972 = vpop.permute.xlu0 %971
        %973 = vrot.lane.b32.xlu0 %v529, 127
        %v974 = vpop.permute.xlu0 %973
        %975 = vrot.lane.b32.xlu0 %v531, 127
        %v976 = vpop.permute.xlu0 %975
        %977 = vrot.lane.b32.xlu0 %v533, 127
        %v978 = vpop.permute.xlu0 %977
        %979 = vrot.lane.b32.xlu0 %v535, 127
        %v980 = vpop.permute.xlu0 %979
        %981 = vrot.lane.b32.xlu0 %v537, 127
        %v982 = vpop.permute.xlu0 %981
        %983 = vrot.lane.b32.xlu0 %v539, 127
        %v984 = vpop.permute.xlu0 %983
        %985 = vrot.lane.b32.xlu0 %v541, 127
        %v986 = vpop.permute.xlu0 %985
        %987 = vrot.lane.b32.xlu0 %v543, 127
        %v988 = vpop.permute.xlu0 %987
        %989 = vrot.lane.b32.xlu0 %v545, 127
        %v990 = vpop.permute.xlu0 %989
        %v1007 = vsub.f32 %v927, %v960
        %v1008 = vsub.f32 %v928, %v962
        %v1009 = vsub.f32 %v929, %v964
        %v1010 = vsub.f32 %v930, %v966
        %v1011 = vsub.f32 %v931, %v968
        %v1012 = vsub.f32 %v932, %v970
        %v1013 = vsub.f32 %v933, %v972
        %v1014 = vsub.f32 %v934, %v974
        %v1015 = vsub.f32 %v935, %v976
        %v1016 = vsub.f32 %v936, %v978
        %v1017 = vsub.f32 %v937, %v980
        %v1018 = vsub.f32 %v938, %v982
        %v1019 = vsub.f32 %v939, %v984
        %v1020 = vsub.f32 %v940, %v986
        %v1021 = vsub.f32 %v941, %v988
        %v1022 = vsub.f32 %v942, %v990
        %v1023 = vlaneseq
        %v1024 = vand.u32 %v1023, 127
        %v1025 = vadd.s32 %v1024, 128
        %vm1026 = vcmp.lt.s32.totalorder %v1024, 128
        %vm1027 = vcmp.lt.s32.totalorder %v1025, 128
        %v1028 = vsel %vm1026, %v514, 0.0
        %v1029 = vsel %vm1027, %v515, 0.0
        %v1030 = vsel %vm1026, %v516, 0.0
        %v1031 = vsel %vm1027, %v517, 0.0
        %v1032 = vsel %vm1026, %v518, 0.0
        %v1033 = vsel %vm1027, %v519, 0.0
        %v1034 = vsel %vm1026, %v520, 0.0
        %v1035 = vsel %vm1027, %v521, 0.0
        %v1036 = vsel %vm1026, %v522, 0.0
        %v1037 = vsel %vm1027, %v523, 0.0
        %v1038 = vsel %vm1026, %v524, 0.0
        %v1039 = vsel %vm1027, %v525, 0.0
        %v1040 = vsel %vm1026, %v526, 0.0
        %v1041 = vsel %vm1027, %v527, 0.0
        %v1042 = vsel %vm1026, %v528, 0.0
        %v1043 = vsel %vm1027, %v529, 0.0
        %v1044 = vsel %vm1026, %v530, 0.0
        %v1045 = vsel %vm1027, %v531, 0.0
        %v1046 = vsel %vm1026, %v532, 0.0
        %v1047 = vsel %vm1027, %v533, 0.0
        %v1048 = vsel %vm1026, %v534, 0.0
        %v1049 = vsel %vm1027, %v535, 0.0
        %v1050 = vsel %vm1026, %v536, 0.0
        %v1051 = vsel %vm1027, %v537, 0.0
        %v1052 = vsel %vm1026, %v538, 0.0
        %v1053 = vsel %vm1027, %v539, 0.0
        %v1054 = vsel %vm1026, %v540, 0.0
        %v1055 = vsel %vm1027, %v541, 0.0
        %v1056 = vsel %vm1026, %v542, 0.0
        %v1057 = vsel %vm1027, %v543, 0.0
        %v1058 = vsel %vm1026, %v544, 0.0
        %v1059 = vsel %vm1027, %v545, 0.0
        %v1060 = vsub.f32 %v757, %v514
        %v1061 = vsub.f32 %v759, %v515
        %v1062 = vsub.f32 %v761, %v516
        %v1063 = vsub.f32 %v763, %v517
        %v1064 = vsub.f32 %v767, %v518
        %v1065 = vsub.f32 %v769, %v519
        %v1066 = vsub.f32 %v771, %v520
        %v1067 = vsub.f32 %v773, %v521
        %v1068 = vsub.f32 %v777, %v522
        %v1069 = vsub.f32 %v779, %v523
        %v1070 = vsub.f32 %v781, %v524
        %v1071 = vsub.f32 %v783, %v525
        %v1072 = vsub.f32 %v787, %v526
        %v1073 = vsub.f32 %v789, %v527
        %v1074 = vsub.f32 %v791, %v528
        %v1075 = vsub.f32 %v793, %v529
        %v1076 = vsub.f32 %v797, %v530
        %v1077 = vsub.f32 %v799, %v531
        %v1078 = vsub.f32 %v801, %v532
        %v1079 = vsub.f32 %v803, %v533
        %v1080 = vsub.f32 %v807, %v534
        %v1081 = vsub.f32 %v809, %v535
        %v1082 = vsub.f32 %v811, %v536
        %v1083 = vsub.f32 %v813, %v537
        %v1084 = vsub.f32 %v817, %v538
        %v1085 = vsub.f32 %v819, %v539
        %v1086 = vsub.f32 %v821, %v540
        %v1087 = vsub.f32 %v823, %v541
        %v1088 = vsub.f32 %v827, %v542
        %v1089 = vsub.f32 %v829, %v543
        %v1090 = vsub.f32 %v831, %v544
        %v1091 = vsub.f32 %v833, %v545
        %1092 = vset.pattern.permute.xlu0 1
        %1093 = vperm.xlu0 %1092, %v515
        %v1094 = vpop.permute.xlu0 %1093
        %1096 = vset.pattern.permute.xlu0 1
        %1097 = vperm.xlu0 %1096, %v517
        %v1098 = vpop.permute.xlu0 %1097
        %1100 = vset.pattern.permute.xlu0 1
        %1101 = vperm.xlu0 %1100, %v519
        %v1102 = vpop.permute.xlu0 %1101
        %1104 = vset.pattern.permute.xlu0 1
        %1105 = vperm.xlu0 %1104, %v521
        %v1106 = vpop.permute.xlu0 %1105
        %1108 = vset.pattern.permute.xlu0 1
        %1109 = vperm.xlu0 %1108, %v523
        %v1110 = vpop.permute.xlu0 %1109
        %1112 = vset.pattern.permute.xlu0 1
        %1113 = vperm.xlu0 %1112, %v525
        %v1114 = vpop.permute.xlu0 %1113
        %1116 = vset.pattern.permute.xlu0 1
        %1117 = vperm.xlu0 %1116, %v527
        %v1118 = vpop.permute.xlu0 %1117
        %1120 = vset.pattern.permute.xlu0 1
        %1121 = vperm.xlu0 %1120, %v529
        %v1122 = vpop.permute.xlu0 %1121
        %1124 = vset.pattern.permute.xlu0 1
        %1125 = vperm.xlu0 %1124, %v531
        %v1126 = vpop.permute.xlu0 %1125
        %1128 = vset.pattern.permute.xlu0 1
        %1129 = vperm.xlu0 %1128, %v533
        %v1130 = vpop.permute.xlu0 %1129
        %1132 = vset.pattern.permute.xlu0 1
        %1133 = vperm.xlu0 %1132, %v535
        %v1134 = vpop.permute.xlu0 %1133
        %1136 = vset.pattern.permute.xlu0 1
        %1137 = vperm.xlu0 %1136, %v537
        %v1138 = vpop.permute.xlu0 %1137
        %1140 = vset.pattern.permute.xlu0 1
        %1141 = vperm.xlu0 %1140, %v539
        %v1142 = vpop.permute.xlu0 %1141
        %1144 = vset.pattern.permute.xlu0 1
        %1145 = vperm.xlu0 %1144, %v541
        %v1146 = vpop.permute.xlu0 %1145
        %1148 = vset.pattern.permute.xlu0 1
        %1149 = vperm.xlu0 %1148, %v543
        %v1150 = vpop.permute.xlu0 %1149
        %1152 = vset.pattern.permute.xlu0 1
        %1153 = vperm.xlu0 %1152, %v545
        %v1154 = vpop.permute.xlu0 %1153
        %v1156 = vmul.f32 %v1094, %v1028
        %v1157 = vmul.f32 %v1094, %v1029
        %v1158 = vmul.f32 %v1098, %v1030
        %v1159 = vmul.f32 %v1098, %v1031
        %v1160 = vmul.f32 %v1102, %v1032
        %v1161 = vmul.f32 %v1102, %v1033
        %v1162 = vmul.f32 %v1106, %v1034
        %v1163 = vmul.f32 %v1106, %v1035
        %v1164 = vmul.f32 %v1110, %v1036
        %v1165 = vmul.f32 %v1110, %v1037
        %v1166 = vmul.f32 %v1114, %v1038
        %v1167 = vmul.f32 %v1114, %v1039
        %v1168 = vmul.f32 %v1118, %v1040
        %v1169 = vmul.f32 %v1118, %v1041
        %v1170 = vmul.f32 %v1122, %v1042
        %v1171 = vmul.f32 %v1122, %v1043
        %v1172 = vmul.f32 %v1126, %v1044
        %v1173 = vmul.f32 %v1126, %v1045
        %v1174 = vmul.f32 %v1130, %v1046
        %v1175 = vmul.f32 %v1130, %v1047
        %v1176 = vmul.f32 %v1134, %v1048
        %v1177 = vmul.f32 %v1134, %v1049
        %v1178 = vmul.f32 %v1138, %v1050
        %v1179 = vmul.f32 %v1138, %v1051
        %v1180 = vmul.f32 %v1142, %v1052
        %v1181 = vmul.f32 %v1142, %v1053
        %v1182 = vmul.f32 %v1146, %v1054
        %v1183 = vmul.f32 %v1146, %v1055
        %v1184 = vmul.f32 %v1150, %v1056
        %v1185 = vmul.f32 %v1150, %v1057
        %v1186 = vmul.f32 %v1154, %v1058
        %v1187 = vmul.f32 %v1154, %v1059
        %v1188 = vsub.f32 %v1060, %v1156
        %v1189 = vsub.f32 %v1061, %v1157
        %v1190 = vsub.f32 %v1062, %v1158
        %v1191 = vsub.f32 %v1063, %v1159
        %v1192 = vsub.f32 %v1064, %v1160
        %v1193 = vsub.f32 %v1065, %v1161
        %v1194 = vsub.f32 %v1066, %v1162
        %v1195 = vsub.f32 %v1067, %v1163
        %v1196 = vsub.f32 %v1068, %v1164
        %v1197 = vsub.f32 %v1069, %v1165
        %v1198 = vsub.f32 %v1070, %v1166
        %v1199 = vsub.f32 %v1071, %v1167
        %v1200 = vsub.f32 %v1072, %v1168
        %v1201 = vsub.f32 %v1073, %v1169
        %v1202 = vsub.f32 %v1074, %v1170
        %v1203 = vsub.f32 %v1075, %v1171
        %v1204 = vsub.f32 %v1076, %v1172
        %v1205 = vsub.f32 %v1077, %v1173
        %v1206 = vsub.f32 %v1078, %v1174
        %v1207 = vsub.f32 %v1079, %v1175
        %v1208 = vsub.f32 %v1080, %v1176
        %v1209 = vsub.f32 %v1081, %v1177
        %v1210 = vsub.f32 %v1082, %v1178
        %v1211 = vsub.f32 %v1083, %v1179
        %v1212 = vsub.f32 %v1084, %v1180
        %v1213 = vsub.f32 %v1085, %v1181
        %v1214 = vsub.f32 %v1086, %v1182
        %v1215 = vsub.f32 %v1087, %v1183
        %v1216 = vsub.f32 %v1088, %v1184
        %v1217 = vsub.f32 %v1089, %v1185
        %v1218 = vsub.f32 %v1090, %v1186
        %v1219 = vsub.f32 %v1091, %v1187
        %vm1220 = vcmp.eq.s32.totalorder %v1024, 128
        %vm1221 = vcmp.eq.s32.totalorder %v1025, 128
        %1223 = vset.pattern.permute.xlu0 0
        %1224 = vperm.xlu0 %1223, %v1007
        %v1225 = vpop.permute.xlu0 %1224
        %1228 = vset.pattern.permute.xlu0 0
        %1229 = vperm.xlu0 %1228, %v1008
        %v1230 = vpop.permute.xlu0 %1229
        %1233 = vset.pattern.permute.xlu0 0
        %1234 = vperm.xlu0 %1233, %v1009
        %v1235 = vpop.permute.xlu0 %1234
        %1238 = vset.pattern.permute.xlu0 0
        %1239 = vperm.xlu0 %1238, %v1010
        %v1240 = vpop.permute.xlu0 %1239
        %1243 = vset.pattern.permute.xlu0 0
        %1244 = vperm.xlu0 %1243, %v1011
        %v1245 = vpop.permute.xlu0 %1244
        %1248 = vset.pattern.permute.xlu0 0
        %1249 = vperm.xlu0 %1248, %v1012
        %v1250 = vpop.permute.xlu0 %1249
        %1253 = vset.pattern.permute.xlu0 0
        %1254 = vperm.xlu0 %1253, %v1013
        %v1255 = vpop.permute.xlu0 %1254
        %1258 = vset.pattern.permute.xlu0 0
        %1259 = vperm.xlu0 %1258, %v1014
        %v1260 = vpop.permute.xlu0 %1259
        %1263 = vset.pattern.permute.xlu0 0
        %1264 = vperm.xlu0 %1263, %v1015
        %v1265 = vpop.permute.xlu0 %1264
        %1268 = vset.pattern.permute.xlu0 0
        %1269 = vperm.xlu0 %1268, %v1016
        %v1270 = vpop.permute.xlu0 %1269
        %1273 = vset.pattern.permute.xlu0 0
        %1274 = vperm.xlu0 %1273, %v1017
        %v1275 = vpop.permute.xlu0 %1274
        %1278 = vset.pattern.permute.xlu0 0
        %1279 = vperm.xlu0 %1278, %v1018
        %v1280 = vpop.permute.xlu0 %1279
        %1283 = vset.pattern.permute.xlu0 0
        %1284 = vperm.xlu0 %1283, %v1019
        %v1285 = vpop.permute.xlu0 %1284
        %1288 = vset.pattern.permute.xlu0 0
        %1289 = vperm.xlu0 %1288, %v1020
        %v1290 = vpop.permute.xlu0 %1289
        %1293 = vset.pattern.permute.xlu0 0
        %1294 = vperm.xlu0 %1293, %v1021
        %v1295 = vpop.permute.xlu0 %1294
        %1298 = vset.pattern.permute.xlu0 0
        %1299 = vperm.xlu0 %1298, %v1022
        %v1300 = vpop.permute.xlu0 %1299
        %v1302 = vsel %vm1220, %v1225, %v1188
        %v1303 = vsel %vm1221, %v1225, %v1189
        %v1304 = vsel %vm1220, %v1230, %v1190
        %v1305 = vsel %vm1221, %v1230, %v1191
        %v1306 = vsel %vm1220, %v1235, %v1192
        %v1307 = vsel %vm1221, %v1235, %v1193
        %v1308 = vsel %vm1220, %v1240, %v1194
        %v1309 = vsel %vm1221, %v1240, %v1195
        %v1310 = vsel %vm1220, %v1245, %v1196
        %v1311 = vsel %vm1221, %v1245, %v1197
        %v1312 = vsel %vm1220, %v1250, %v1198
        %v1313 = vsel %vm1221, %v1250, %v1199
        %v1314 = vsel %vm1220, %v1255, %v1200
        %v1315 = vsel %vm1221, %v1255, %v1201
        %v1316 = vsel %vm1220, %v1260, %v1202
        %v1317 = vsel %vm1221, %v1260, %v1203
        %v1318 = vsel %vm1220, %v1265, %v1204
        %v1319 = vsel %vm1221, %v1265, %v1205
        %v1320 = vsel %vm1220, %v1270, %v1206
        %v1321 = vsel %vm1221, %v1270, %v1207
        %v1322 = vsel %vm1220, %v1275, %v1208
        %v1323 = vsel %vm1221, %v1275, %v1209
        %v1324 = vsel %vm1220, %v1280, %v1210
        %v1325 = vsel %vm1221, %v1280, %v1211
        %v1326 = vsel %vm1220, %v1285, %v1212
        %v1327 = vsel %vm1221, %v1285, %v1213
        %v1328 = vsel %vm1220, %v1290, %v1214
        %v1329 = vsel %vm1221, %v1290, %v1215
        %v1330 = vsel %vm1220, %v1295, %v1216
        %v1331 = vsel %vm1221, %v1295, %v1217
        %v1332 = vsel %vm1220, %v1300, %v1218
        %v1333 = vsel %vm1221, %v1300, %v1219
        %vm1334 = vcmp.eq.s32.totalorder %v1024, 129
        %vm1335 = vcmp.eq.s32.totalorder %v1025, 129
        %v1336 = vsel %vm1334, %v463, %v1302
        %v1337 = vsel %vm1335, %v463, %v1303
        %v1338 = vsel %vm1334, %v466, %v1304
        %v1339 = vsel %vm1335, %v466, %v1305
        %v1340 = vsel %vm1334, %v469, %v1306
        %v1341 = vsel %vm1335, %v469, %v1307
        %v1342 = vsel %vm1334, %v472, %v1308
        %v1343 = vsel %vm1335, %v472, %v1309
        %v1344 = vsel %vm1334, %v475, %v1310
        %v1345 = vsel %vm1335, %v475, %v1311
        %v1346 = vsel %vm1334, %v478, %v1312
        %v1347 = vsel %vm1335, %v478, %v1313
        %v1348 = vsel %vm1334, %v481, %v1314
        %v1349 = vsel %vm1335, %v481, %v1315
        %v1350 = vsel %vm1334, %v484, %v1316
        %v1351 = vsel %vm1335, %v484, %v1317
        %v1352 = vsel %vm1334, %v487, %v1318
        %v1353 = vsel %vm1335, %v487, %v1319
        %v1354 = vsel %vm1334, %v490, %v1320
        %v1355 = vsel %vm1335, %v490, %v1321
        %v1356 = vsel %vm1334, %v493, %v1322
        %v1357 = vsel %vm1335, %v493, %v1323
        %v1358 = vsel %vm1334, %v496, %v1324
        %v1359 = vsel %vm1335, %v496, %v1325
        %v1360 = vsel %vm1334, %v499, %v1326
        %v1361 = vsel %vm1335, %v499, %v1327
        %v1362 = vsel %vm1334, %v502, %v1328
        %v1363 = vsel %vm1335, %v502, %v1329
        %v1364 = vsel %vm1334, %v505, %v1330
        %v1365 = vsel %vm1335, %v505, %v1331
        %v1366 = vsel %vm1334, %v508, %v1332
        %v1367 = vsel %vm1335, %v508, %v1333
        %1368 = vst [vmem:[%s319] sm:$0xff] %v1336
        %1369 = vst [vmem:[%s319 + $0x8] sm:$0xff] %v1337
        %1370 = vst [vmem:[%s319 + $0x10] sm:$0xff] %v1338
        %1371 = vst [vmem:[%s319 + $0x18] sm:$0xff] %v1339
        %1372 = vst [vmem:[%s319 + $0x20] sm:$0xff] %v1340
        %1373 = vst [vmem:[%s319 + $0x28] sm:$0xff] %v1341
        %1374 = vst [vmem:[%s319 + $0x30] sm:$0xff] %v1342
        %1375 = vst [vmem:[%s319 + $0x38] sm:$0xff] %v1343
        %1376 = vst [vmem:[%s319 + $0x40] sm:$0xff] %v1344
        %1377 = vst [vmem:[%s319 + $0x48] sm:$0xff] %v1345
        %1378 = vst [vmem:[%s319 + $0x50] sm:$0xff] %v1346
        %1379 = vst [vmem:[%s319 + $0x58] sm:$0xff] %v1347
        %1380 = vst [vmem:[%s319 + $0x60] sm:$0xff] %v1348
        %1381 = vst [vmem:[%s319 + $0x68] sm:$0xff] %v1349
        %1382 = vst [vmem:[%s319 + $0x70] sm:$0xff] %v1350
        %1383 = vst [vmem:[%s319 + $0x78] sm:$0xff] %v1351
        %1384 = vst [vmem:[%s319 + $0x80] sm:$0xff] %v1352
        %1385 = vst [vmem:[%s319 + $0x88] sm:$0xff] %v1353
        %1386 = vst [vmem:[%s319 + $0x90] sm:$0xff] %v1354
        %1387 = vst [vmem:[%s319 + $0x98] sm:$0xff] %v1355
        %1388 = vst [vmem:[%s319 + $0xa0] sm:$0xff] %v1356
        %1389 = vst [vmem:[%s319 + $0xa8] sm:$0xff] %v1357
        %1390 = vst [vmem:[%s319 + $0xb0] sm:$0xff] %v1358
        %1391 = vst [vmem:[%s319 + $0xb8] sm:$0xff] %v1359
        %1392 = vst [vmem:[%s319 + $0xc0] sm:$0xff] %v1360
        %1393 = vst [vmem:[%s319 + $0xc8] sm:$0xff] %v1361
        %1394 = vst [vmem:[%s319 + $0xd0] sm:$0xff] %v1362
        %1395 = vst [vmem:[%s319 + $0xd8] sm:$0xff] %v1363
        %1396 = vst [vmem:[%s319 + $0xe0] sm:$0xff] %v1364
        %1397 = vst [vmem:[%s319 + $0xe8] sm:$0xff] %v1365
        %1398 = vst [vmem:[%s319 + $0xf0] sm:$0xff] %v1366
        %1399 = vst [vmem:[%s319 + $0xf8] sm:$0xff] %v1367
        %v1400 = vld [vmem:[%s347] sm:$0xff]
        %v1401 = vld [vmem:[%s347 + $0x8] sm:$0xff]
        %v1402 = vld [vmem:[%s347 + $0x10] sm:$0xff]
        %v1403 = vld [vmem:[%s347 + $0x18] sm:$0xff]
        %v1404 = vld [vmem:[%s347 + $0x20] sm:$0xff]
        %v1405 = vld [vmem:[%s347 + $0x28] sm:$0xff]
        %v1406 = vld [vmem:[%s347 + $0x30] sm:$0xff]
        %v1407 = vld [vmem:[%s347 + $0x38] sm:$0xff]
        %v1408 = vld [vmem:[%s347 + $0x40] sm:$0xff]
        %v1409 = vld [vmem:[%s347 + $0x48] sm:$0xff]
        %v1410 = vld [vmem:[%s347 + $0x50] sm:$0xff]
        %v1411 = vld [vmem:[%s347 + $0x58] sm:$0xff]
        %v1412 = vld [vmem:[%s347 + $0x60] sm:$0xff]
        %v1413 = vld [vmem:[%s347 + $0x68] sm:$0xff]
        %v1414 = vld [vmem:[%s347 + $0x70] sm:$0xff]
        %v1415 = vld [vmem:[%s347 + $0x78] sm:$0xff]
        %v1416 = vld [vmem:[%s347 + $0x80] sm:$0xff]
        %v1417 = vld [vmem:[%s347 + $0x88] sm:$0xff]
        %v1418 = vld [vmem:[%s347 + $0x90] sm:$0xff]
        %v1419 = vld [vmem:[%s347 + $0x98] sm:$0xff]
        %v1420 = vld [vmem:[%s347 + $0xa0] sm:$0xff]
        %v1421 = vld [vmem:[%s347 + $0xa8] sm:$0xff]
        %v1422 = vld [vmem:[%s347 + $0xb0] sm:$0xff]
        %v1423 = vld [vmem:[%s347 + $0xb8] sm:$0xff]
        %v1424 = vld [vmem:[%s347 + $0xc0] sm:$0xff]
        %v1425 = vld [vmem:[%s347 + $0xc8] sm:$0xff]
        %v1426 = vld [vmem:[%s347 + $0xd0] sm:$0xff]
        %v1427 = vld [vmem:[%s347 + $0xd8] sm:$0xff]
        %v1428 = vld [vmem:[%s347 + $0xe0] sm:$0xff]
        %v1429 = vld [vmem:[%s347 + $0xe8] sm:$0xff]
        %v1430 = vld [vmem:[%s347 + $0xf0] sm:$0xff]
        %v1431 = vld [vmem:[%s347 + $0xf8] sm:$0xff]
        %v1432 = vadd.f32 %v1400, %v1336
        %v1433 = vadd.f32 %v1401, %v1337
        %v1434 = vadd.f32 %v1402, %v1338
        %v1435 = vadd.f32 %v1403, %v1339
        %v1436 = vadd.f32 %v1404, %v1340
        %v1437 = vadd.f32 %v1405, %v1341
        %v1438 = vadd.f32 %v1406, %v1342
        %v1439 = vadd.f32 %v1407, %v1343
        %v1440 = vadd.f32 %v1408, %v1344
        %v1441 = vadd.f32 %v1409, %v1345
        %v1442 = vadd.f32 %v1410, %v1346
        %v1443 = vadd.f32 %v1411, %v1347
        %v1444 = vadd.f32 %v1412, %v1348
        %v1445 = vadd.f32 %v1413, %v1349
        %v1446 = vadd.f32 %v1414, %v1350
        %v1447 = vadd.f32 %v1415, %v1351
        %v1448 = vadd.f32 %v1416, %v1352
        %v1449 = vadd.f32 %v1417, %v1353
        %v1450 = vadd.f32 %v1418, %v1354
        %v1451 = vadd.f32 %v1419, %v1355
        %v1452 = vadd.f32 %v1420, %v1356
        %v1453 = vadd.f32 %v1421, %v1357
        %v1454 = vadd.f32 %v1422, %v1358
        %v1455 = vadd.f32 %v1423, %v1359
        %v1456 = vadd.f32 %v1424, %v1360
        %v1457 = vadd.f32 %v1425, %v1361
        %v1458 = vadd.f32 %v1426, %v1362
        %v1459 = vadd.f32 %v1427, %v1363
        %v1460 = vadd.f32 %v1428, %v1364
        %v1461 = vadd.f32 %v1429, %v1365
        %v1462 = vadd.f32 %v1430, %v1366
        %v1463 = vadd.f32 %v1431, %v1367
        %1464 = vst [vmem:[%s362] sm:$0xff] %v1432
        %1465 = vst [vmem:[%s362 + $0x8] sm:$0xff] %v1433
        %1466 = vst [vmem:[%s362 + $0x10] sm:$0xff] %v1434
        %1467 = vst [vmem:[%s362 + $0x18] sm:$0xff] %v1435
        %1468 = vst [vmem:[%s362 + $0x20] sm:$0xff] %v1436
        %1469 = vst [vmem:[%s362 + $0x28] sm:$0xff] %v1437
        %1470 = vst [vmem:[%s362 + $0x30] sm:$0xff] %v1438
        %1471 = vst [vmem:[%s362 + $0x38] sm:$0xff] %v1439
        %1472 = vst [vmem:[%s362 + $0x40] sm:$0xff] %v1440
        %1473 = vst [vmem:[%s362 + $0x48] sm:$0xff] %v1441
        %1474 = vst [vmem:[%s362 + $0x50] sm:$0xff] %v1442
        %1475 = vst [vmem:[%s362 + $0x58] sm:$0xff] %v1443
        %1476 = vst [vmem:[%s362 + $0x60] sm:$0xff] %v1444
        %1477 = vst [vmem:[%s362 + $0x68] sm:$0xff] %v1445
        %1478 = vst [vmem:[%s362 + $0x70] sm:$0xff] %v1446
        %1479 = vst [vmem:[%s362 + $0x78] sm:$0xff] %v1447
        %1480 = vst [vmem:[%s362 + $0x80] sm:$0xff] %v1448
        %1481 = vst [vmem:[%s362 + $0x88] sm:$0xff] %v1449
        %1482 = vst [vmem:[%s362 + $0x90] sm:$0xff] %v1450
        %1483 = vst [vmem:[%s362 + $0x98] sm:$0xff] %v1451
        %1484 = vst [vmem:[%s362 + $0xa0] sm:$0xff] %v1452
        %1485 = vst [vmem:[%s362 + $0xa8] sm:$0xff] %v1453
        %1486 = vst [vmem:[%s362 + $0xb0] sm:$0xff] %v1454
        %1487 = vst [vmem:[%s362 + $0xb8] sm:$0xff] %v1455
        %1488 = vst [vmem:[%s362 + $0xc0] sm:$0xff] %v1456
        %1489 = vst [vmem:[%s362 + $0xc8] sm:$0xff] %v1457
        %1490 = vst [vmem:[%s362 + $0xd0] sm:$0xff] %v1458
        %1491 = vst [vmem:[%s362 + $0xd8] sm:$0xff] %v1459
        %1492 = vst [vmem:[%s362 + $0xe0] sm:$0xff] %v1460
        %1493 = vst [vmem:[%s362 + $0xe8] sm:$0xff] %v1461
        %1494 = vst [vmem:[%s362 + $0xf0] sm:$0xff] %v1462
        %1495 = vst [vmem:[%s362 + $0xf8] sm:$0xff] %v1463
        %s1496 = smul.u32 16, %s22
        %p1497 = scmp.lt.s32.totalorder %s1496, 31
        %s1498 = scalar_select %p1497, %s1496, 31
        %s1499 = smul.addr %s1498, 2
        %s1500 = smul.addr %s1499, 4
        %s1501 = scalar_lea.vmem %s5, %s1500
        %s1502 = sand.u32 %s176, 1
        %s1503 = scalar_lea.sflag [#allocation3], %s1502
        %s1504 = sand.u32 %s176, 1
        %s1505 = smul.addr %s1504, 256
        %s1506 = scalar_lea.vmem [#allocation2], %s1505
        %s1507 = smul.u32 16, %s22
        %p1508 = scmp.lt.s32.totalorder %s1507, 31
        %s1509 = scalar_select %p1508, %s1507, 31
        %s1510 = smul.addr %s1509, 2
        %s1511 = smul.addr %s1510, 8
        %s1512 = scalar_lea.vmem %s7, %s1511
        // Predicated region
        $region41: #{local_graph_forward.6} parent=39 // pred_check
          %p1513 = pneg %p160
        $region42: #{local_graph_forward.6} parent=39 // pred_check_branch
          %1515 = sbr.rel (%p1513) target = $region44
        $region43: #{local_graph_forward.6} parent=39 // pred_region
          %s1516 = smul.u32 16, %s22
        $region44: #{local_graph_forward.6} parent=39 // pred_fallthru
          _
        // Predicated region
        $region45: #{local_graph_forward.6} parent=39 // pred_check
          %p1517 = pneg %p186
        $region46: #{local_graph_forward.6} parent=39 // pred_check_branch
          %1519 = sbr.rel (%p1517) target = $region48
        $region47: #{local_graph_forward.6} parent=39 // pred_region
          %s1520 = smul.u32 16, %s22
          %s1522 = ssub.s32 4096, 4096
          %1523 = vsyncadd %s1503, %s1522
          %s1524 = smul.addr %s1520, 2
          %s1525 = smul.addr %s1524, 128
          %s1526 = scalar_lea.hbm %s6, %s1525
          %s1527 = sshll.u32 %s1506, 4
          %s1528 = int_to_ptr.vmem [resolvable:$true] %s1527
          %1533 = dma.vmem_to_hbm [thread:$0]  %s1528, 4096, %s1526, %s1503, 256, 256, 16
        $region48: #{local_graph_forward.6} parent=39 // pred_fallthru
          _
        // Predicated region
        $region49: #{local_graph_forward.6} parent=39 // pred_check
          %p1534 = pneg %p212
        $region50: #{local_graph_forward.6} parent=39 // pred_check_branch
          %1536 = sbr.rel (%p1534) target = $region52
        $region51: #{local_graph_forward.6} parent=39 // pred_region
          %s1537 = smul.u32 16, %s22
        $region52: #{local_graph_forward.6} parent=39 // pred_fallthru
          _
      $region40: #{local_graph_forward.6} parent=5 // pred_fallthru
        _
      %p1538 = scmp.le.s32.totalorder 2, %s17
      // Predicated region
      $region53: #{local_graph_forward.6} parent=5 // pred_check
        %p1539 = pneg %p1538
      $region54: #{local_graph_forward.6} parent=5 // pred_check_branch
        %1541 = sbr.rel (%p1539) target = $region56
      $region55: #{local_graph_forward.6} parent=5 // pred_region
        %s1542 = ssub.s32 %s17, 2
        // Predicated region
        $region57: #{local_graph_forward.6} parent=55 // pred_check
          %p1543 = pneg %p166
        $region58: #{local_graph_forward.6} parent=55 // pred_check_branch
          %1545 = sbr.rel (%p1543) target = $region60
        $region59: #{local_graph_forward.6} parent=55 // pred_region
          %s1546 = smul.u32 16, %s23
          %p1547 = scmp.lt.s32.totalorder %s1546, 31
          %s1548 = scalar_select %p1547, %s1546, 31
          %s1549 = smul.addr %s1548, 2
          %s1550 = smul.addr %s1549, 4
          %s1551 = scalar_lea.vmem %s5, %s1550
        $region60: #{local_graph_forward.6} parent=55 // pred_fallthru
          _
        // Predicated region
        $region61: #{local_graph_forward.6} parent=55 // pred_check
          %p1552 = pneg %p192
        $region62: #{local_graph_forward.6} parent=55 // pred_check_branch
          %1554 = sbr.rel (%p1552) target = $region64
        $region63: #{local_graph_forward.6} parent=55 // pred_region
          %s1555 = sand.u32 %s177, 1
          %s1556 = scalar_lea.sflag [#allocation3], %s1555
          %s1557 = sand.u32 %s177, 1
          %s1558 = smul.addr %s1557, 256
          %s1559 = scalar_lea.vmem [#allocation2], %s1558
          %1560 = dma.done %s1556, 4096
        $region64: #{local_graph_forward.6} parent=55 // pred_fallthru
          _
        // Predicated region
        $region65: #{local_graph_forward.6} parent=55 // pred_check
          %p1561 = pneg %p218
        $region66: #{local_graph_forward.6} parent=55 // pred_check_branch
          %1563 = sbr.rel (%p1561) target = $region68
        $region67: #{local_graph_forward.6} parent=55 // pred_region
          %s1564 = smul.u32 16, %s23
          %p1565 = scmp.lt.s32.totalorder %s1564, 31
          %s1566 = scalar_select %p1565, %s1564, 31
          %s1567 = smul.addr %s1566, 2
          %s1568 = smul.addr %s1567, 8
          %s1569 = scalar_lea.vmem %s7, %s1568
        $region68: #{local_graph_forward.6} parent=55 // pred_fallthru
          _
      $region56: #{local_graph_forward.6} parent=5 // pred_fallthru
        _
    $region6: #{local_graph_forward.6} parent=1 // loop_footer
      %s21 = sadd.s32 1, %s17
    $region7: #{local_graph_forward.6} parent=1 // loop_footer_branch
      %16 = sbr.rel target = $region3
    $region8: #{local_graph_forward.6} parent=1 // loop_exit
      _
    %1570 = vsyncpa [#allocation3], 1
    %s1571 = scalar_lea.sflag [#allocation3], 1
    %1572 = vsyncpa %s1571, 1

</llo_original>
